<compile_context>
chip_gen: v7x
topology: tpu7x:2x2x1
jax: 0.10.0
libtpu: 0.0.40
codegen_flags: <defaults>
</compile_context>

<pallas_src>
import functools

import jax
import jax.numpy as jnp
from jax.experimental import pallas as pl
from jax.experimental.pallas import tpu as pltpu


def transformer_block_kernel(
    x_ref,
    ln1_g_ref, ln1_b_ref, wqkv_ref, wo_ref, bo_ref,
    ln2_g_ref, ln2_b_ref, w1_ref, b1_ref, w2_ref, b2_ref,
    o_ref,
    *, heads, scale, num_blocks,
):
    """All num_blocks (LN -> MHA -> +res, LN -> MLP -> +res) repetitions, fused,
    for one batch tile.

    The PyTorch module appends the SAME two sub-modules num_blocks times, so the
    weights are identical for every block: they are loaded into VMEM once and stay
    resident across the whole (unrolled) in-kernel block loop.

    The batch tile is flattened to an (M, C) = (TB*N, C) slab so LayerNorm and the
    QKV / output / MLP projections all run as single M-row matmuls (batch folded
    into the MXU M dimension).  Only the per-(batch, head) score / context matmuls
    work on slices of that slab; the QKV columns are already head-major, so no
    head transposes / einshape relayouts are needed anywhere.
    """
    TB, N, C = x_ref.shape
    M = TB * N
    Dh = C // heads
    eps = 1e-5
    bf16 = jnp.bfloat16
    f32 = jnp.float32

    # ---- weights resident for the whole kernel (already bf16) ----
    wqkv = wqkv_ref[...]          # (C, 3C)
    wo = wo_ref[...]              # (C, C)
    w1 = w1_ref[...]              # (C, C)
    w2 = w2_ref[...]              # (C, C)

    # ---- per-channel params broadcast to the tile shape ONCE (hoisted out of the
    #      unrolled block loop; JAX does not CSE broadcast_in_dim) ----
    ln1_g = jnp.broadcast_to(ln1_g_ref[...], (M, C))
    ln1_b = jnp.broadcast_to(ln1_b_ref[...], (M, C))
    ln2_g = jnp.broadcast_to(ln2_g_ref[...], (M, C))
    ln2_b = jnp.broadcast_to(ln2_b_ref[...], (M, C))
    bo = jnp.broadcast_to(bo_ref[...], (M, C))
    b1 = jnp.broadcast_to(b1_ref[...], (M, C))
    b2 = jnp.broadcast_to(b2_ref[...], (M, C))

    def layer_norm(x, g, b):
        mu = jnp.mean(x, axis=-1, keepdims=True)
        var = jnp.mean((x - mu) ** 2, axis=-1, keepdims=True)
        return (x - mu) * jax.lax.rsqrt(var + eps) * g + b

    def block_body(_, x):
        # ---- LayerNorm 1 + multi-head self-attention ----
        xn = layer_norm(x, ln1_g, ln1_b)
        qkv = jnp.dot(xn.astype(bf16), wqkv,
                      preferred_element_type=f32)                     # (M, 3C) f32
        # fold the softmax scale into q: M*C multiplies instead of TB*heads*N*N
        q = (qkv[:, 0 * C:1 * C] * scale).astype(bf16)                # (M, C)
        k = qkv[:, 1 * C:2 * C].astype(bf16)
        v = qkv[:, 2 * C:3 * C].astype(bf16)

        # QKV columns are already head-major ([h, d], d fastest), so per-(batch,
        # head) attention works on static row/column slices of the slab -- no
        # einshape / transpose relayouts.  TB and heads are small & static, so
        # plain (fully unrolled) Python loops are fine here.
        ctx_rows = []
        for b in range(TB):
            r0 = b * N
            head_ctx = []
            for h in range(heads):
                c0 = h * Dh
                qh = q[r0:r0 + N, c0:c0 + Dh]                         # (N, Dh)
                kh = k[r0:r0 + N, c0:c0 + Dh]
                vh = v[r0:r0 + N, c0:c0 + Dh]
                # q @ k^T without materialising a transpose (NT dot_general)
                s = jax.lax.dot_general(
                    qh, kh, (((1,), (1,)), ((), ())),
                    preferred_element_type=f32)                       # (N, N) f32
                s = s - jnp.max(s, axis=-1, keepdims=True)
                e = jnp.exp(s)
                inv = pl.reciprocal(jnp.sum(e, axis=-1, keepdims=True),
                                    approx=True)                      # EUP slot
                p = (e * inv).astype(bf16)
                head_ctx.append(jnp.dot(p, vh,
                                        preferred_element_type=f32))  # (N, Dh)
            ctx_rows.append(jnp.concatenate(head_ctx, axis=-1))       # (N, C)
        ctx = ctx_rows[0] if TB == 1 else jnp.concatenate(ctx_rows, axis=0)

        attn_out = jnp.dot(ctx.astype(bf16), wo,
                           preferred_element_type=f32) + bo
        x = x + attn_out                                              # residual 1

        # ---- LayerNorm 2 + MLP (exact erf-GELU, matches nn.GELU default) ----
        xn2 = layer_norm(x, ln2_g, ln2_b)
        h1 = jnp.dot(xn2.astype(bf16), w1, preferred_element_type=f32) + b1
        h1 = 0.5 * h1 * (1.0 + jax.lax.erf(h1 * 0.7071067811865476))
        h2 = jnp.dot(h1.astype(bf16), w2, preferred_element_type=f32) + b2
        return x + h2                                                 # residual 2

    x = x_ref[...].astype(f32).reshape(M, C)   # merge (TB, N) -> M rows (free)
    # num_blocks is small & static: unroll so the LLO scheduler can overlap block
    # i's epilogue (residual / store) with block i+1's prologue (LN / first matmul).
    x = jax.lax.fori_loop(0, num_blocks, block_body, x, unroll=True)
    o_ref[...] = x.reshape(TB, N, C)


def transformer_block_forward(x, params, *, num_blocks, heads, batch_tile=None):
    """Single fused pallas_call covering every repeated block.

    batch_tile: batch rows processed per grid step.  Default (None) folds the whole
    batch into ONE grid step -- best on the single-TensorCore chips (v5e/v6e), where
    the grid is a serial loop and each extra step costs ~0.35 us of pipeline
    overhead while 8-row matmuls leave the MXU mostly idle.  On v7x (2 TensorCores)
    pass batch_tile=B//2 (or smaller) so both cores get a "parallel" grid step.
    """
    B, N, C = x.shape
    assert C % heads == 0, "embedding_dim must be divisible by nhead"
    TB = B if batch_tile is None else batch_tile
    assert B % TB == 0, "batch must be divisible by batch_tile"
    scale = (C // heads) ** (-0.5)
    bf16 = jnp.bfloat16
    f32 = jnp.float32

    # matmul weights in bf16 (halves HBM/VMEM weight traffic, MXU-native);
    # LN params and biases stay f32 (added to f32 accumulations).
    ordered = [
        params["ln1_g"].astype(f32), params["ln1_b"].astype(f32),
        params["wqkv"].astype(bf16), params["wo"].astype(bf16),
        params["bo"].astype(f32),
        params["ln2_g"].astype(f32), params["ln2_b"].astype(f32),
        params["w1"].astype(bf16), params["b1"].astype(f32),
        params["w2"].astype(bf16), params["b2"].astype(f32),
    ]

    def resident_spec(arr):
        nd = arr.ndim
        # constant block index across the grid -> stays VMEM-resident, no re-DMA.
        # (At production C on v7x, with its 64 MiB/TC VMEM, these should also be
        #  single-buffered / K-tiled; at these sizes the default is fine.)
        return pl.BlockSpec(arr.shape, lambda i, _nd=nd: (0,) * _nd)

    # VMEM budget: resident weights (x2 for the pipeline's default double
    # buffering) + activation blocks + slack; clamp to the 64 MiB/TC v7x budget.
    weight_bytes = sum(int(a.size) * a.dtype.itemsize for a in ordered)
    act_bytes = TB * N * C * 4
    vmem_limit = int(min(64 * 1024 * 1024,
                         max(32 * 1024 * 1024,
                             4 * weight_bytes + 32 * act_bytes + (2 << 20))))

    kernel = functools.partial(
        transformer_block_kernel, heads=heads, scale=scale, num_blocks=num_blocks)

    # NOTE: for production N / C the (N, N) per-head score tiles and the resident
    # weight plan must be re-budgeted against VMEM (64 MiB/TC on v7x): the query
    # dim should then be tiled with a flash-style online softmax and the weight
    # matmuls K-tiled / streamed.  At these shapes the working set is tiny, so one
    # batch tile per grid step suffices.
    return pl.pallas_call(
        kernel,
        out_shape=jax.ShapeDtypeStruct((B, N, C), f32),
        grid=(B // TB,),
        in_specs=[pl.BlockSpec((TB, N, C), lambda i: (i, 0, 0))]
                 + [resident_spec(a) for a in ordered],
        out_specs=pl.BlockSpec((TB, N, C), lambda i: (i, 0, 0)),
        compiler_params=pltpu.CompilerParams(
            dimension_semantics=("parallel",),
            vmem_limit_bytes=vmem_limit,
        ),
    )(x.astype(f32), *ordered)


def init_params(key, dim):
    ks = jax.random.split(key, 5)
    scale = 0.02
    return {
        "ln1_g": jnp.ones((1, dim), jnp.float32),
        "ln1_b": jnp.zeros((1, dim), jnp.float32),
        # Linear(dim, 3*dim, bias=False): torch weight (3C, C) -> transposed (C, 3C)
        "wqkv": (scale * jax.random.normal(ks[0], (dim, 3 * dim))).astype(jnp.float32),
        # to_out Linear(dim, dim)
        "wo": (scale * jax.random.normal(ks[1], (dim, dim))).astype(jnp.float32),
        "bo": jnp.zeros((1, dim), jnp.float32),
        "ln2_g": jnp.ones((1, dim), jnp.float32),
        "ln2_b": jnp.zeros((1, dim), jnp.float32),
        # FeedForward Linear(dim, dim) x2
        "w1": (scale * jax.random.normal(ks[2], (dim, dim))).astype(jnp.float32),
        "b1": jnp.zeros((1, dim), jnp.float32),
        "w2": (scale * jax.random.normal(ks[3], (dim, dim))).astype(jnp.float32),
        "b2": jnp.zeros((1, dim), jnp.float32),
    }


if __name__ == "__main__":
    # embedding_dim = 128 keeps the demo small while making every tile lane-dense.
    B, N, C = 2, 8, 128       # batch, sequence, embedding_dim
    NUM_BLOCKS, NHEAD = 2, 4

    key = jax.random.PRNGKey(0)
    kx, kp = jax.random.split(key)
    x = jax.random.normal(kx, (B, N, C), dtype=jnp.float32)
    params = init_params(kp, C)

    out = transformer_block_forward(x, params, num_blocks=NUM_BLOCKS, heads=NHEAD)
    jax.block_until_ready(out)
    assert out.shape == (B, N, C)
    print("KERNEL_OK")
</pallas_src>

<mosaic_0001>
module attributes {stable_mosaic.version = 11 : i64} {
  func.func @transformer_block_kernel(%arg0: i32, %arg1: memref<2x8x128xf32, #tpu.memory_space<vmem>>, %arg2: memref<1x128xf32, #tpu.memory_space<vmem>>, %arg3: memref<1x128xf32, #tpu.memory_space<vmem>>, %arg4: memref<128x384xbf16, #tpu.memory_space<vmem>>, %arg5: memref<128x128xbf16, #tpu.memory_space<vmem>>, %arg6: memref<1x128xf32, #tpu.memory_space<vmem>>, %arg7: memref<1x128xf32, #tpu.memory_space<vmem>>, %arg8: memref<1x128xf32, #tpu.memory_space<vmem>>, %arg9: memref<128x128xbf16, #tpu.memory_space<vmem>>, %arg10: memref<1x128xf32, #tpu.memory_space<vmem>>, %arg11: memref<128x128xbf16, #tpu.memory_space<vmem>>, %arg12: memref<1x128xf32, #tpu.memory_space<vmem>>, %arg13: memref<2x8x128xf32, #tpu.memory_space<vmem>>) attributes {dimension_semantics = [#tpu.dimension_semantics<parallel>], iteration_bounds = array<i64: 1>, scalar_prefetch = 0 : i64, scratch_operands = 0 : i64, tpu.core_type = #tpu.core_type<tc>, window_params = [{transform_indices = @transform_0, window_bounds = array<i64: 2, 8, 128>}, {pipeline_mode = #tpu.pipeline_mode<synchronous>, transform_indices = @transform_1, window_bounds = array<i64: 1, 128>}, {pipeline_mode = #tpu.pipeline_mode<synchronous>, transform_indices = @transform_2, window_bounds = array<i64: 1, 128>}, {pipeline_mode = #tpu.pipeline_mode<synchronous>, transform_indices = @transform_3, window_bounds = array<i64: 128, 384>}, {pipeline_mode = #tpu.pipeline_mode<synchronous>, transform_indices = @transform_4, window_bounds = array<i64: 128, 128>}, {pipeline_mode = #tpu.pipeline_mode<synchronous>, transform_indices = @transform_5, window_bounds = array<i64: 1, 128>}, {pipeline_mode = #tpu.pipeline_mode<synchronous>, transform_indices = @transform_6, window_bounds = array<i64: 1, 128>}, {pipeline_mode = #tpu.pipeline_mode<synchronous>, transform_indices = @transform_7, window_bounds = array<i64: 1, 128>}, {pipeline_mode = #tpu.pipeline_mode<synchronous>, transform_indices = @transform_8, window_bounds = array<i64: 128, 128>}, {pipeline_mode = #tpu.pipeline_mode<synchronous>, transform_indices = @transform_9, window_bounds = array<i64: 1, 128>}, {pipeline_mode = #tpu.pipeline_mode<synchronous>, transform_indices = @transform_10, window_bounds = array<i64: 128, 128>}, {pipeline_mode = #tpu.pipeline_mode<synchronous>, transform_indices = @transform_11, window_bounds = array<i64: 1, 128>}, {transform_indices = @transform_12, window_bounds = array<i64: 2, 8, 128>}]} {
    %c0 = arith.constant 0 : index
    %c0_0 = arith.constant 0 : index
    %0 = vector.load %arg4[%c0, %c0_0] : memref<128x384xbf16, #tpu.memory_space<vmem>>, vector<128x384xbf16>
    %c0_1 = arith.constant 0 : index
    %c0_2 = arith.constant 0 : index
    %1 = vector.load %arg5[%c0_1, %c0_2] : memref<128x128xbf16, #tpu.memory_space<vmem>>, vector<128x128xbf16>
    %c0_3 = arith.constant 0 : index
    %c0_4 = arith.constant 0 : index
    %2 = vector.load %arg9[%c0_3, %c0_4] : memref<128x128xbf16, #tpu.memory_space<vmem>>, vector<128x128xbf16>
    %c0_5 = arith.constant 0 : index
    %c0_6 = arith.constant 0 : index
    %3 = vector.load %arg11[%c0_5, %c0_6] : memref<128x128xbf16, #tpu.memory_space<vmem>>, vector<128x128xbf16>
    %c0_7 = arith.constant 0 : index
    %c0_8 = arith.constant 0 : index
    %4 = vector.load %arg2[%c0_7, %c0_8] : memref<1x128xf32, #tpu.memory_space<vmem>>, vector<1x128xf32>
    %5 = vector.shape_cast %4 : vector<1x128xf32> to vector<1x128xf32>
    %6 = vector.broadcast %5 : vector<1x128xf32> to vector<16x128xf32>
    %c0_9 = arith.constant 0 : index
    %c0_10 = arith.constant 0 : index
    %7 = vector.load %arg3[%c0_9, %c0_10] : memref<1x128xf32, #tpu.memory_space<vmem>>, vector<1x128xf32>
    %8 = vector.shape_cast %7 : vector<1x128xf32> to vector<1x128xf32>
    %9 = vector.broadcast %8 : vector<1x128xf32> to vector<16x128xf32>
    %c0_11 = arith.constant 0 : index
    %c0_12 = arith.constant 0 : index
    %10 = vector.load %arg7[%c0_11, %c0_12] : memref<1x128xf32, #tpu.memory_space<vmem>>, vector<1x128xf32>
    %11 = vector.shape_cast %10 : vector<1x128xf32> to vector<1x128xf32>
    %12 = vector.broadcast %11 : vector<1x128xf32> to vector<16x128xf32>
    %c0_13 = arith.constant 0 : index
    %c0_14 = arith.constant 0 : index
    %13 = vector.load %arg8[%c0_13, %c0_14] : memref<1x128xf32, #tpu.memory_space<vmem>>, vector<1x128xf32>
    %14 = vector.shape_cast %13 : vector<1x128xf32> to vector<1x128xf32>
    %15 = vector.broadcast %14 : vector<1x128xf32> to vector<16x128xf32>
    %c0_15 = arith.constant 0 : index
    %c0_16 = arith.constant 0 : index
    %16 = vector.load %arg6[%c0_15, %c0_16] : memref<1x128xf32, #tpu.memory_space<vmem>>, vector<1x128xf32>
    %17 = vector.shape_cast %16 : vector<1x128xf32> to vector<1x128xf32>
    %18 = vector.broadcast %17 : vector<1x128xf32> to vector<16x128xf32>
    %c0_17 = arith.constant 0 : index
    %c0_18 = arith.constant 0 : index
    %19 = vector.load %arg10[%c0_17, %c0_18] : memref<1x128xf32, #tpu.memory_space<vmem>>, vector<1x128xf32>
    %20 = vector.shape_cast %19 : vector<1x128xf32> to vector<1x128xf32>
    %21 = vector.broadcast %20 : vector<1x128xf32> to vector<16x128xf32>
    %c0_19 = arith.constant 0 : index
    %c0_20 = arith.constant 0 : index
    %22 = vector.load %arg12[%c0_19, %c0_20] : memref<1x128xf32, #tpu.memory_space<vmem>>, vector<1x128xf32>
    %23 = vector.shape_cast %22 : vector<1x128xf32> to vector<1x128xf32>
    %24 = vector.broadcast %23 : vector<1x128xf32> to vector<16x128xf32>
    %c0_21 = arith.constant 0 : index
    %c0_22 = arith.constant 0 : index
    %c0_23 = arith.constant 0 : index
    %25 = vector.load %arg1[%c0_21, %c0_22, %c0_23] : memref<2x8x128xf32, #tpu.memory_space<vmem>>, vector<2x8x128xf32>
    %26 = vector.shape_cast %25 : vector<2x8x128xf32> to vector<16x128xf32>
    %c0_i32 = arith.constant 0 : i32
    %cst = arith.constant dense<0.000000e+00> : vector<16xf32>
    %27 = vector.multi_reduction <add>, %26, %cst [1] : vector<16x128xf32> to vector<16xf32>
    %28 = vector.shape_cast %27 : vector<16xf32> to vector<16x1xf32>
    %cst_24 = arith.constant 1.280000e+02 : f32
    %29 = vector.broadcast %cst_24 : f32 to vector<16x1xf32>
    %30 = arith.divf %28, %29 : vector<16x1xf32>
    %31 = vector.broadcast %30 : vector<16x1xf32> to vector<16x128xf32>
    %32 = arith.subf %26, %31 : vector<16x128xf32>
    %33 = arith.mulf %32, %32 : vector<16x128xf32>
    %cst_25 = arith.constant dense<0.000000e+00> : vector<16xf32>
    %34 = vector.multi_reduction <add>, %33, %cst_25 [1] : vector<16x128xf32> to vector<16xf32>
    %35 = vector.shape_cast %34 : vector<16xf32> to vector<16x1xf32>
    %cst_26 = arith.constant 1.280000e+02 : f32
    %36 = vector.broadcast %cst_26 : f32 to vector<16x1xf32>
    %37 = arith.divf %35, %36 : vector<16x1xf32>
    %38 = vector.broadcast %30 : vector<16x1xf32> to vector<16x128xf32>
    %39 = arith.subf %26, %38 : vector<16x128xf32>
    %cst_27 = arith.constant 9.99999974E-6 : f32
    %40 = vector.broadcast %cst_27 : f32 to vector<16x1xf32>
    %41 = arith.addf %37, %40 : vector<16x1xf32>
    %42 = math.rsqrt %41 : vector<16x1xf32>
    %43 = vector.broadcast %42 : vector<16x1xf32> to vector<16x128xf32>
    %44 = arith.mulf %39, %43 : vector<16x128xf32>
    %45 = arith.mulf %44, %6 : vector<16x128xf32>
    %46 = arith.addf %45, %9 : vector<16x128xf32>
    %47 = arith.truncf %46 : vector<16x128xf32> to vector<16x128xbf16>
    %cst_28 = arith.constant dense<0.000000e+00> : vector<16x384xf32>
    %48 = tpu.matmul %47, %0, %cst_28 {dimension_numbers = #tpu.dot_dimension_numbers<[1], [0], [0], [1], [0, 0, 1, 1], [], []>} : vector<16x128xbf16>, vector<128x384xbf16>, vector<16x384xf32> -> vector<16x384xf32>
    %49 = vector.extract_strided_slice %48 {offsets = [0, 0], sizes = [16, 128], strides = [1, 1]} : vector<16x384xf32> to vector<16x128xf32>
    %cst_29 = arith.constant 0.176776692 : f32
    %50 = vector.broadcast %cst_29 : f32 to vector<16x128xf32>
    %51 = arith.mulf %49, %50 : vector<16x128xf32>
    %52 = arith.truncf %51 : vector<16x128xf32> to vector<16x128xbf16>
    %53 = vector.extract_strided_slice %48 {offsets = [0, 128], sizes = [16, 128], strides = [1, 1]} : vector<16x384xf32> to vector<16x128xf32>
    %54 = arith.truncf %53 : vector<16x128xf32> to vector<16x128xbf16>
    %55 = vector.extract_strided_slice %48 {offsets = [0, 256], sizes = [16, 128], strides = [1, 1]} : vector<16x384xf32> to vector<16x128xf32>
    %56 = arith.truncf %55 : vector<16x128xf32> to vector<16x128xbf16>
    %57 = vector.extract_strided_slice %52 {offsets = [0, 0], sizes = [8, 32], strides = [1, 1]} : vector<16x128xbf16> to vector<8x32xbf16>
    %58 = vector.extract_strided_slice %54 {offsets = [0, 0], sizes = [8, 32], strides = [1, 1]} : vector<16x128xbf16> to vector<8x32xbf16>
    %59 = vector.extract_strided_slice %56 {offsets = [0, 0], sizes = [8, 32], strides = [1, 1]} : vector<16x128xbf16> to vector<8x32xbf16>
    %cst_30 = arith.constant dense<0.000000e+00> : vector<8x8xf32>
    %60 = tpu.matmul %57, %58, %cst_30 {dimension_numbers = #tpu.dot_dimension_numbers<[1], [1], [0], [0], [0, 0, 1, 0], [], []>} : vector<8x32xbf16>, vector<8x32xbf16>, vector<8x8xf32> -> vector<8x8xf32>
    %cst_31 = arith.constant dense<0xFF800000> : vector<8xf32>
    %61 = vector.multi_reduction <maximumf>, %60, %cst_31 [1] : vector<8x8xf32> to vector<8xf32>
    %62 = vector.shape_cast %61 : vector<8xf32> to vector<8x1xf32>
    %63 = vector.broadcast %62 : vector<8x1xf32> to vector<8x8xf32>
    %64 = arith.subf %60, %63 : vector<8x8xf32>
    %65 = math.exp %64 : vector<8x8xf32>
    %cst_32 = arith.constant dense<0.000000e+00> : vector<8xf32>
    %66 = vector.multi_reduction <add>, %65, %cst_32 [1] : vector<8x8xf32> to vector<8xf32>
    %67 = vector.shape_cast %66 : vector<8xf32> to vector<8x1xf32>
    %68 = tpu.reciprocal %67 {approx = true} : vector<8x1xf32> -> vector<8x1xf32>
    %69 = vector.broadcast %68 : vector<8x1xf32> to vector<8x8xf32>
    %70 = arith.mulf %65, %69 : vector<8x8xf32>
    %71 = arith.truncf %70 : vector<8x8xf32> to vector<8x8xbf16>
    %cst_33 = arith.constant dense<0.000000e+00> : vector<8x32xf32>
    %72 = tpu.matmul %71, %59, %cst_33 {dimension_numbers = #tpu.dot_dimension_numbers<[1], [0], [0], [1], [0, 0, 1, 1], [], []>} : vector<8x8xbf16>, vector<8x32xbf16>, vector<8x32xf32> -> vector<8x32xf32>
    %73 = vector.extract_strided_slice %52 {offsets = [0, 32], sizes = [8, 32], strides = [1, 1]} : vector<16x128xbf16> to vector<8x32xbf16>
    %74 = vector.extract_strided_slice %54 {offsets = [0, 32], sizes = [8, 32], strides = [1, 1]} : vector<16x128xbf16> to vector<8x32xbf16>
    %75 = vector.extract_strided_slice %56 {offsets = [0, 32], sizes = [8, 32], strides = [1, 1]} : vector<16x128xbf16> to vector<8x32xbf16>
    %cst_34 = arith.constant dense<0.000000e+00> : vector<8x8xf32>
    %76 = tpu.matmul %73, %74, %cst_34 {dimension_numbers = #tpu.dot_dimension_numbers<[1], [1], [0], [0], [0, 0, 1, 0], [], []>} : vector<8x32xbf16>, vector<8x32xbf16>, vector<8x8xf32> -> vector<8x8xf32>
    %cst_35 = arith.constant dense<0xFF800000> : vector<8xf32>
    %77 = vector.multi_reduction <maximumf>, %76, %cst_35 [1] : vector<8x8xf32> to vector<8xf32>
    %78 = vector.shape_cast %77 : vector<8xf32> to vector<8x1xf32>
    %79 = vector.broadcast %78 : vector<8x1xf32> to vector<8x8xf32>
    %80 = arith.subf %76, %79 : vector<8x8xf32>
    %81 = math.exp %80 : vector<8x8xf32>
    %cst_36 = arith.constant dense<0.000000e+00> : vector<8xf32>
    %82 = vector.multi_reduction <add>, %81, %cst_36 [1] : vector<8x8xf32> to vector<8xf32>
    %83 = vector.shape_cast %82 : vector<8xf32> to vector<8x1xf32>
    %84 = tpu.reciprocal %83 {approx = true} : vector<8x1xf32> -> vector<8x1xf32>
    %85 = vector.broadcast %84 : vector<8x1xf32> to vector<8x8xf32>
    %86 = arith.mulf %81, %85 : vector<8x8xf32>
    %87 = arith.truncf %86 : vector<8x8xf32> to vector<8x8xbf16>
    %cst_37 = arith.constant dense<0.000000e+00> : vector<8x32xf32>
    %88 = tpu.matmul %87, %75, %cst_37 {dimension_numbers = #tpu.dot_dimension_numbers<[1], [0], [0], [1], [0, 0, 1, 1], [], []>} : vector<8x8xbf16>, vector<8x32xbf16>, vector<8x32xf32> -> vector<8x32xf32>
    %89 = vector.extract_strided_slice %52 {offsets = [0, 64], sizes = [8, 32], strides = [1, 1]} : vector<16x128xbf16> to vector<8x32xbf16>
    %90 = vector.extract_strided_slice %54 {offsets = [0, 64], sizes = [8, 32], strides = [1, 1]} : vector<16x128xbf16> to vector<8x32xbf16>
    %91 = vector.extract_strided_slice %56 {offsets = [0, 64], sizes = [8, 32], strides = [1, 1]} : vector<16x128xbf16> to vector<8x32xbf16>
    %cst_38 = arith.constant dense<0.000000e+00> : vector<8x8xf32>
    %92 = tpu.matmul %89, %90, %cst_38 {dimension_numbers = #tpu.dot_dimension_numbers<[1], [1], [0], [0], [0, 0, 1, 0], [], []>} : vector<8x32xbf16>, vector<8x32xbf16>, vector<8x8xf32> -> vector<8x8xf32>
    %cst_39 = arith.constant dense<0xFF800000> : vector<8xf32>
    %93 = vector.multi_reduction <maximumf>, %92, %cst_39 [1] : vector<8x8xf32> to vector<8xf32>
    %94 = vector.shape_cast %93 : vector<8xf32> to vector<8x1xf32>
    %95 = vector.broadcast %94 : vector<8x1xf32> to vector<8x8xf32>
    %96 = arith.subf %92, %95 : vector<8x8xf32>
    %97 = math.exp %96 : vector<8x8xf32>
    %cst_40 = arith.constant dense<0.000000e+00> : vector<8xf32>
    %98 = vector.multi_reduction <add>, %97, %cst_40 [1] : vector<8x8xf32> to vector<8xf32>
    %99 = vector.shape_cast %98 : vector<8xf32> to vector<8x1xf32>
    %100 = tpu.reciprocal %99 {approx = true} : vector<8x1xf32> -> vector<8x1xf32>
    %101 = vector.broadcast %100 : vector<8x1xf32> to vector<8x8xf32>
    %102 = arith.mulf %97, %101 : vector<8x8xf32>
    %103 = arith.truncf %102 : vector<8x8xf32> to vector<8x8xbf16>
    %cst_41 = arith.constant dense<0.000000e+00> : vector<8x32xf32>
    %104 = tpu.matmul %103, %91, %cst_41 {dimension_numbers = #tpu.dot_dimension_numbers<[1], [0], [0], [1], [0, 0, 1, 1], [], []>} : vector<8x8xbf16>, vector<8x32xbf16>, vector<8x32xf32> -> vector<8x32xf32>
    %105 = vector.extract_strided_slice %52 {offsets = [0, 96], sizes = [8, 32], strides = [1, 1]} : vector<16x128xbf16> to vector<8x32xbf16>
    %106 = vector.extract_strided_slice %54 {offsets = [0, 96], sizes = [8, 32], strides = [1, 1]} : vector<16x128xbf16> to vector<8x32xbf16>
    %107 = vector.extract_strided_slice %56 {offsets = [0, 96], sizes = [8, 32], strides = [1, 1]} : vector<16x128xbf16> to vector<8x32xbf16>
    %cst_42 = arith.constant dense<0.000000e+00> : vector<8x8xf32>
    %108 = tpu.matmul %105, %106, %cst_42 {dimension_numbers = #tpu.dot_dimension_numbers<[1], [1], [0], [0], [0, 0, 1, 0], [], []>} : vector<8x32xbf16>, vector<8x32xbf16>, vector<8x8xf32> -> vector<8x8xf32>
    %cst_43 = arith.constant dense<0xFF800000> : vector<8xf32>
    %109 = vector.multi_reduction <maximumf>, %108, %cst_43 [1] : vector<8x8xf32> to vector<8xf32>
    %110 = vector.shape_cast %109 : vector<8xf32> to vector<8x1xf32>
    %111 = vector.broadcast %110 : vector<8x1xf32> to vector<8x8xf32>
    %112 = arith.subf %108, %111 : vector<8x8xf32>
    %113 = math.exp %112 : vector<8x8xf32>
    %cst_44 = arith.constant dense<0.000000e+00> : vector<8xf32>
    %114 = vector.multi_reduction <add>, %113, %cst_44 [1] : vector<8x8xf32> to vector<8xf32>
    %115 = vector.shape_cast %114 : vector<8xf32> to vector<8x1xf32>
    %116 = tpu.reciprocal %115 {approx = true} : vector<8x1xf32> -> vector<8x1xf32>
    %117 = vector.broadcast %116 : vector<8x1xf32> to vector<8x8xf32>
    %118 = arith.mulf %113, %117 : vector<8x8xf32>
    %119 = arith.truncf %118 : vector<8x8xf32> to vector<8x8xbf16>
    %cst_45 = arith.constant dense<0.000000e+00> : vector<8x32xf32>
    %120 = tpu.matmul %119, %107, %cst_45 {dimension_numbers = #tpu.dot_dimension_numbers<[1], [0], [0], [1], [0, 0, 1, 1], [], []>} : vector<8x8xbf16>, vector<8x32xbf16>, vector<8x32xf32> -> vector<8x32xf32>
    %121 = tpu.concatenate %72, %88, %104, %120 in 1 : vector<8x32xf32>, vector<8x32xf32>, vector<8x32xf32>, vector<8x32xf32> -> vector<8x128xf32>
    %122 = vector.extract_strided_slice %52 {offsets = [8, 0], sizes = [8, 32], strides = [1, 1]} : vector<16x128xbf16> to vector<8x32xbf16>
    %123 = vector.extract_strided_slice %54 {offsets = [8, 0], sizes = [8, 32], strides = [1, 1]} : vector<16x128xbf16> to vector<8x32xbf16>
    %124 = vector.extract_strided_slice %56 {offsets = [8, 0], sizes = [8, 32], strides = [1, 1]} : vector<16x128xbf16> to vector<8x32xbf16>
    %cst_46 = arith.constant dense<0.000000e+00> : vector<8x8xf32>
    %125 = tpu.matmul %122, %123, %cst_46 {dimension_numbers = #tpu.dot_dimension_numbers<[1], [1], [0], [0], [0, 0, 1, 0], [], []>} : vector<8x32xbf16>, vector<8x32xbf16>, vector<8x8xf32> -> vector<8x8xf32>
    %cst_47 = arith.constant dense<0xFF800000> : vector<8xf32>
    %126 = vector.multi_reduction <maximumf>, %125, %cst_47 [1] : vector<8x8xf32> to vector<8xf32>
    %127 = vector.shape_cast %126 : vector<8xf32> to vector<8x1xf32>
    %128 = vector.broadcast %127 : vector<8x1xf32> to vector<8x8xf32>
    %129 = arith.subf %125, %128 : vector<8x8xf32>
    %130 = math.exp %129 : vector<8x8xf32>
    %cst_48 = arith.constant dense<0.000000e+00> : vector<8xf32>
    %131 = vector.multi_reduction <add>, %130, %cst_48 [1] : vector<8x8xf32> to vector<8xf32>
    %132 = vector.shape_cast %131 : vector<8xf32> to vector<8x1xf32>
    %133 = tpu.reciprocal %132 {approx = true} : vector<8x1xf32> -> vector<8x1xf32>
    %134 = vector.broadcast %133 : vector<8x1xf32> to vector<8x8xf32>
    %135 = arith.mulf %130, %134 : vector<8x8xf32>
    %136 = arith.truncf %135 : vector<8x8xf32> to vector<8x8xbf16>
    %cst_49 = arith.constant dense<0.000000e+00> : vector<8x32xf32>
    %137 = tpu.matmul %136, %124, %cst_49 {dimension_numbers = #tpu.dot_dimension_numbers<[1], [0], [0], [1], [0, 0, 1, 1], [], []>} : vector<8x8xbf16>, vector<8x32xbf16>, vector<8x32xf32> -> vector<8x32xf32>
    %138 = vector.extract_strided_slice %52 {offsets = [8, 32], sizes = [8, 32], strides = [1, 1]} : vector<16x128xbf16> to vector<8x32xbf16>
    %139 = vector.extract_strided_slice %54 {offsets = [8, 32], sizes = [8, 32], strides = [1, 1]} : vector<16x128xbf16> to vector<8x32xbf16>
    %140 = vector.extract_strided_slice %56 {offsets = [8, 32], sizes = [8, 32], strides = [1, 1]} : vector<16x128xbf16> to vector<8x32xbf16>
    %cst_50 = arith.constant dense<0.000000e+00> : vector<8x8xf32>
    %141 = tpu.matmul %138, %139, %cst_50 {dimension_numbers = #tpu.dot_dimension_numbers<[1], [1], [0], [0], [0, 0, 1, 0], [], []>} : vector<8x32xbf16>, vector<8x32xbf16>, vector<8x8xf32> -> vector<8x8xf32>
    %cst_51 = arith.constant dense<0xFF800000> : vector<8xf32>
    %142 = vector.multi_reduction <maximumf>, %141, %cst_51 [1] : vector<8x8xf32> to vector<8xf32>
    %143 = vector.shape_cast %142 : vector<8xf32> to vector<8x1xf32>
    %144 = vector.broadcast %143 : vector<8x1xf32> to vector<8x8xf32>
    %145 = arith.subf %141, %144 : vector<8x8xf32>
    %146 = math.exp %145 : vector<8x8xf32>
    %cst_52 = arith.constant dense<0.000000e+00> : vector<8xf32>
    %147 = vector.multi_reduction <add>, %146, %cst_52 [1] : vector<8x8xf32> to vector<8xf32>
    %148 = vector.shape_cast %147 : vector<8xf32> to vector<8x1xf32>
    %149 = tpu.reciprocal %148 {approx = true} : vector<8x1xf32> -> vector<8x1xf32>
    %150 = vector.broadcast %149 : vector<8x1xf32> to vector<8x8xf32>
    %151 = arith.mulf %146, %150 : vector<8x8xf32>
    %152 = arith.truncf %151 : vector<8x8xf32> to vector<8x8xbf16>
    %cst_53 = arith.constant dense<0.000000e+00> : vector<8x32xf32>
    %153 = tpu.matmul %152, %140, %cst_53 {dimension_numbers = #tpu.dot_dimension_numbers<[1], [0], [0], [1], [0, 0, 1, 1], [], []>} : vector<8x8xbf16>, vector<8x32xbf16>, vector<8x32xf32> -> vector<8x32xf32>
    %154 = vector.extract_strided_slice %52 {offsets = [8, 64], sizes = [8, 32], strides = [1, 1]} : vector<16x128xbf16> to vector<8x32xbf16>
    %155 = vector.extract_strided_slice %54 {offsets = [8, 64], sizes = [8, 32], strides = [1, 1]} : vector<16x128xbf16> to vector<8x32xbf16>
    %156 = vector.extract_strided_slice %56 {offsets = [8, 64], sizes = [8, 32], strides = [1, 1]} : vector<16x128xbf16> to vector<8x32xbf16>
    %cst_54 = arith.constant dense<0.000000e+00> : vector<8x8xf32>
    %157 = tpu.matmul %154, %155, %cst_54 {dimension_numbers = #tpu.dot_dimension_numbers<[1], [1], [0], [0], [0, 0, 1, 0], [], []>} : vector<8x32xbf16>, vector<8x32xbf16>, vector<8x8xf32> -> vector<8x8xf32>
    %cst_55 = arith.constant dense<0xFF800000> : vector<8xf32>
    %158 = vector.multi_reduction <maximumf>, %157, %cst_55 [1] : vector<8x8xf32> to vector<8xf32>
    %159 = vector.shape_cast %158 : vector<8xf32> to vector<8x1xf32>
    %160 = vector.broadcast %159 : vector<8x1xf32> to vector<8x8xf32>
    %161 = arith.subf %157, %160 : vector<8x8xf32>
    %162 = math.exp %161 : vector<8x8xf32>
    %cst_56 = arith.constant dense<0.000000e+00> : vector<8xf32>
    %163 = vector.multi_reduction <add>, %162, %cst_56 [1] : vector<8x8xf32> to vector<8xf32>
    %164 = vector.shape_cast %163 : vector<8xf32> to vector<8x1xf32>
    %165 = tpu.reciprocal %164 {approx = true} : vector<8x1xf32> -> vector<8x1xf32>
    %166 = vector.broadcast %165 : vector<8x1xf32> to vector<8x8xf32>
    %167 = arith.mulf %162, %166 : vector<8x8xf32>
    %168 = arith.truncf %167 : vector<8x8xf32> to vector<8x8xbf16>
    %cst_57 = arith.constant dense<0.000000e+00> : vector<8x32xf32>
    %169 = tpu.matmul %168, %156, %cst_57 {dimension_numbers = #tpu.dot_dimension_numbers<[1], [0], [0], [1], [0, 0, 1, 1], [], []>} : vector<8x8xbf16>, vector<8x32xbf16>, vector<8x32xf32> -> vector<8x32xf32>
    %170 = vector.extract_strided_slice %52 {offsets = [8, 96], sizes = [8, 32], strides = [1, 1]} : vector<16x128xbf16> to vector<8x32xbf16>
    %171 = vector.extract_strided_slice %54 {offsets = [8, 96], sizes = [8, 32], strides = [1, 1]} : vector<16x128xbf16> to vector<8x32xbf16>
    %172 = vector.extract_strided_slice %56 {offsets = [8, 96], sizes = [8, 32], strides = [1, 1]} : vector<16x128xbf16> to vector<8x32xbf16>
    %cst_58 = arith.constant dense<0.000000e+00> : vector<8x8xf32>
    %173 = tpu.matmul %170, %171, %cst_58 {dimension_numbers = #tpu.dot_dimension_numbers<[1], [1], [0], [0], [0, 0, 1, 0], [], []>} : vector<8x32xbf16>, vector<8x32xbf16>, vector<8x8xf32> -> vector<8x8xf32>
    %cst_59 = arith.constant dense<0xFF800000> : vector<8xf32>
    %174 = vector.multi_reduction <maximumf>, %173, %cst_59 [1] : vector<8x8xf32> to vector<8xf32>
    %175 = vector.shape_cast %174 : vector<8xf32> to vector<8x1xf32>
    %176 = vector.broadcast %175 : vector<8x1xf32> to vector<8x8xf32>
    %177 = arith.subf %173, %176 : vector<8x8xf32>
    %178 = math.exp %177 : vector<8x8xf32>
    %cst_60 = arith.constant dense<0.000000e+00> : vector<8xf32>
    %179 = vector.multi_reduction <add>, %178, %cst_60 [1] : vector<8x8xf32> to vector<8xf32>
    %180 = vector.shape_cast %179 : vector<8xf32> to vector<8x1xf32>
    %181 = tpu.reciprocal %180 {approx = true} : vector<8x1xf32> -> vector<8x1xf32>
    %182 = vector.broadcast %181 : vector<8x1xf32> to vector<8x8xf32>
    %183 = arith.mulf %178, %182 : vector<8x8xf32>
    %184 = arith.truncf %183 : vector<8x8xf32> to vector<8x8xbf16>
    %cst_61 = arith.constant dense<0.000000e+00> : vector<8x32xf32>
    %185 = tpu.matmul %184, %172, %cst_61 {dimension_numbers = #tpu.dot_dimension_numbers<[1], [0], [0], [1], [0, 0, 1, 1], [], []>} : vector<8x8xbf16>, vector<8x32xbf16>, vector<8x32xf32> -> vector<8x32xf32>
    %186 = tpu.concatenate %137, %153, %169, %185 in 1 : vector<8x32xf32>, vector<8x32xf32>, vector<8x32xf32>, vector<8x32xf32> -> vector<8x128xf32>
    %187 = tpu.concatenate %121, %186 in 0 : vector<8x128xf32>, vector<8x128xf32> -> vector<16x128xf32>
    %188 = arith.truncf %187 : vector<16x128xf32> to vector<16x128xbf16>
    %cst_62 = arith.constant dense<0.000000e+00> : vector<16x128xf32>
    %189 = tpu.matmul %188, %1, %cst_62 {dimension_numbers = #tpu.dot_dimension_numbers<[1], [0], [0], [1], [0, 0, 1, 1], [], []>} : vector<16x128xbf16>, vector<128x128xbf16>, vector<16x128xf32> -> vector<16x128xf32>
    %190 = arith.addf %189, %18 : vector<16x128xf32>
    %191 = arith.addf %26, %190 : vector<16x128xf32>
    %cst_63 = arith.constant dense<0.000000e+00> : vector<16xf32>
    %192 = vector.multi_reduction <add>, %191, %cst_63 [1] : vector<16x128xf32> to vector<16xf32>
    %193 = vector.shape_cast %192 : vector<16xf32> to vector<16x1xf32>
    %cst_64 = arith.constant 1.280000e+02 : f32
    %194 = vector.broadcast %cst_64 : f32 to vector<16x1xf32>
    %195 = arith.divf %193, %194 : vector<16x1xf32>
    %196 = vector.broadcast %195 : vector<16x1xf32> to vector<16x128xf32>
    %197 = arith.subf %191, %196 : vector<16x128xf32>
    %198 = arith.mulf %197, %197 : vector<16x128xf32>
    %cst_65 = arith.constant dense<0.000000e+00> : vector<16xf32>
    %199 = vector.multi_reduction <add>, %198, %cst_65 [1] : vector<16x128xf32> to vector<16xf32>
    %200 = vector.shape_cast %199 : vector<16xf32> to vector<16x1xf32>
    %cst_66 = arith.constant 1.280000e+02 : f32
    %201 = vector.broadcast %cst_66 : f32 to vector<16x1xf32>
    %202 = arith.divf %200, %201 : vector<16x1xf32>
    %203 = vector.broadcast %195 : vector<16x1xf32> to vector<16x128xf32>
    %204 = arith.subf %191, %203 : vector<16x128xf32>
    %cst_67 = arith.constant 9.99999974E-6 : f32
    %205 = vector.broadcast %cst_67 : f32 to vector<16x1xf32>
    %206 = arith.addf %202, %205 : vector<16x1xf32>
    %207 = math.rsqrt %206 : vector<16x1xf32>
    %208 = vector.broadcast %207 : vector<16x1xf32> to vector<16x128xf32>
    %209 = arith.mulf %204, %208 : vector<16x128xf32>
    %210 = arith.mulf %209, %12 : vector<16x128xf32>
    %211 = arith.addf %210, %15 : vector<16x128xf32>
    %212 = arith.truncf %211 : vector<16x128xf32> to vector<16x128xbf16>
    %cst_68 = arith.constant dense<0.000000e+00> : vector<16x128xf32>
    %213 = tpu.matmul %212, %2, %cst_68 {dimension_numbers = #tpu.dot_dimension_numbers<[1], [0], [0], [1], [0, 0, 1, 1], [], []>} : vector<16x128xbf16>, vector<128x128xbf16>, vector<16x128xf32> -> vector<16x128xf32>
    %214 = arith.addf %213, %21 : vector<16x128xf32>
    %cst_69 = arith.constant 5.000000e-01 : f32
    %215 = vector.broadcast %cst_69 : f32 to vector<16x128xf32>
    %216 = arith.mulf %215, %214 : vector<16x128xf32>
    %cst_70 = arith.constant 0.707106769 : f32
    %217 = vector.broadcast %cst_70 : f32 to vector<16x128xf32>
    %218 = arith.mulf %214, %217 : vector<16x128xf32>
    %219 = math.erf %218 : vector<16x128xf32>
    %cst_71 = arith.constant 1.000000e+00 : f32
    %220 = vector.broadcast %cst_71 : f32 to vector<16x128xf32>
    %221 = arith.addf %220, %219 : vector<16x128xf32>
    %222 = arith.mulf %216, %221 : vector<16x128xf32>
    %223 = arith.truncf %222 : vector<16x128xf32> to vector<16x128xbf16>
    %cst_72 = arith.constant dense<0.000000e+00> : vector<16x128xf32>
    %224 = tpu.matmul %223, %3, %cst_72 {dimension_numbers = #tpu.dot_dimension_numbers<[1], [0], [0], [1], [0, 0, 1, 1], [], []>} : vector<16x128xbf16>, vector<128x128xbf16>, vector<16x128xf32> -> vector<16x128xf32>
    %225 = arith.addf %224, %24 : vector<16x128xf32>
    %226 = arith.addf %191, %225 : vector<16x128xf32>
    %c1_i32 = arith.constant 1 : i32
    %cst_73 = arith.constant dense<0.000000e+00> : vector<16xf32>
    %227 = vector.multi_reduction <add>, %226, %cst_73 [1] : vector<16x128xf32> to vector<16xf32>
    %228 = vector.shape_cast %227 : vector<16xf32> to vector<16x1xf32>
    %cst_74 = arith.constant 1.280000e+02 : f32
    %229 = vector.broadcast %cst_74 : f32 to vector<16x1xf32>
    %230 = arith.divf %228, %229 : vector<16x1xf32>
    %231 = vector.broadcast %230 : vector<16x1xf32> to vector<16x128xf32>
    %232 = arith.subf %226, %231 : vector<16x128xf32>
    %233 = arith.mulf %232, %232 : vector<16x128xf32>
    %cst_75 = arith.constant dense<0.000000e+00> : vector<16xf32>
    %234 = vector.multi_reduction <add>, %233, %cst_75 [1] : vector<16x128xf32> to vector<16xf32>
    %235 = vector.shape_cast %234 : vector<16xf32> to vector<16x1xf32>
    %cst_76 = arith.constant 1.280000e+02 : f32
    %236 = vector.broadcast %cst_76 : f32 to vector<16x1xf32>
    %237 = arith.divf %235, %236 : vector<16x1xf32>
    %238 = vector.broadcast %230 : vector<16x1xf32> to vector<16x128xf32>
    %239 = arith.subf %226, %238 : vector<16x128xf32>
    %cst_77 = arith.constant 9.99999974E-6 : f32
    %240 = vector.broadcast %cst_77 : f32 to vector<16x1xf32>
    %241 = arith.addf %237, %240 : vector<16x1xf32>
    %242 = math.rsqrt %241 : vector<16x1xf32>
    %243 = vector.broadcast %242 : vector<16x1xf32> to vector<16x128xf32>
    %244 = arith.mulf %239, %243 : vector<16x128xf32>
    %245 = arith.mulf %244, %6 : vector<16x128xf32>
    %246 = arith.addf %245, %9 : vector<16x128xf32>
    %247 = arith.truncf %246 : vector<16x128xf32> to vector<16x128xbf16>
    %cst_78 = arith.constant dense<0.000000e+00> : vector<16x384xf32>
    %248 = tpu.matmul %247, %0, %cst_78 {dimension_numbers = #tpu.dot_dimension_numbers<[1], [0], [0], [1], [0, 0, 1, 1], [], []>} : vector<16x128xbf16>, vector<128x384xbf16>, vector<16x384xf32> -> vector<16x384xf32>
    %249 = vector.extract_strided_slice %248 {offsets = [0, 0], sizes = [16, 128], strides = [1, 1]} : vector<16x384xf32> to vector<16x128xf32>
    %cst_79 = arith.constant 0.176776692 : f32
    %250 = vector.broadcast %cst_79 : f32 to vector<16x128xf32>
    %251 = arith.mulf %249, %250 : vector<16x128xf32>
    %252 = arith.truncf %251 : vector<16x128xf32> to vector<16x128xbf16>
    %253 = vector.extract_strided_slice %248 {offsets = [0, 128], sizes = [16, 128], strides = [1, 1]} : vector<16x384xf32> to vector<16x128xf32>
    %254 = arith.truncf %253 : vector<16x128xf32> to vector<16x128xbf16>
    %255 = vector.extract_strided_slice %248 {offsets = [0, 256], sizes = [16, 128], strides = [1, 1]} : vector<16x384xf32> to vector<16x128xf32>
    %256 = arith.truncf %255 : vector<16x128xf32> to vector<16x128xbf16>
    %257 = vector.extract_strided_slice %252 {offsets = [0, 0], sizes = [8, 32], strides = [1, 1]} : vector<16x128xbf16> to vector<8x32xbf16>
    %258 = vector.extract_strided_slice %254 {offsets = [0, 0], sizes = [8, 32], strides = [1, 1]} : vector<16x128xbf16> to vector<8x32xbf16>
    %259 = vector.extract_strided_slice %256 {offsets = [0, 0], sizes = [8, 32], strides = [1, 1]} : vector<16x128xbf16> to vector<8x32xbf16>
    %cst_80 = arith.constant dense<0.000000e+00> : vector<8x8xf32>
    %260 = tpu.matmul %257, %258, %cst_80 {dimension_numbers = #tpu.dot_dimension_numbers<[1], [1], [0], [0], [0, 0, 1, 0], [], []>} : vector<8x32xbf16>, vector<8x32xbf16>, vector<8x8xf32> -> vector<8x8xf32>
    %cst_81 = arith.constant dense<0xFF800000> : vector<8xf32>
    %261 = vector.multi_reduction <maximumf>, %260, %cst_81 [1] : vector<8x8xf32> to vector<8xf32>
    %262 = vector.shape_cast %261 : vector<8xf32> to vector<8x1xf32>
    %263 = vector.broadcast %262 : vector<8x1xf32> to vector<8x8xf32>
    %264 = arith.subf %260, %263 : vector<8x8xf32>
    %265 = math.exp %264 : vector<8x8xf32>
    %cst_82 = arith.constant dense<0.000000e+00> : vector<8xf32>
    %266 = vector.multi_reduction <add>, %265, %cst_82 [1] : vector<8x8xf32> to vector<8xf32>
    %267 = vector.shape_cast %266 : vector<8xf32> to vector<8x1xf32>
    %268 = tpu.reciprocal %267 {approx = true} : vector<8x1xf32> -> vector<8x1xf32>
    %269 = vector.broadcast %268 : vector<8x1xf32> to vector<8x8xf32>
    %270 = arith.mulf %265, %269 : vector<8x8xf32>
    %271 = arith.truncf %270 : vector<8x8xf32> to vector<8x8xbf16>
    %cst_83 = arith.constant dense<0.000000e+00> : vector<8x32xf32>
    %272 = tpu.matmul %271, %259, %cst_83 {dimension_numbers = #tpu.dot_dimension_numbers<[1], [0], [0], [1], [0, 0, 1, 1], [], []>} : vector<8x8xbf16>, vector<8x32xbf16>, vector<8x32xf32> -> vector<8x32xf32>
    %273 = vector.extract_strided_slice %252 {offsets = [0, 32], sizes = [8, 32], strides = [1, 1]} : vector<16x128xbf16> to vector<8x32xbf16>
    %274 = vector.extract_strided_slice %254 {offsets = [0, 32], sizes = [8, 32], strides = [1, 1]} : vector<16x128xbf16> to vector<8x32xbf16>
    %275 = vector.extract_strided_slice %256 {offsets = [0, 32], sizes = [8, 32], strides = [1, 1]} : vector<16x128xbf16> to vector<8x32xbf16>
    %cst_84 = arith.constant dense<0.000000e+00> : vector<8x8xf32>
    %276 = tpu.matmul %273, %274, %cst_84 {dimension_numbers = #tpu.dot_dimension_numbers<[1], [1], [0], [0], [0, 0, 1, 0], [], []>} : vector<8x32xbf16>, vector<8x32xbf16>, vector<8x8xf32> -> vector<8x8xf32>
    %cst_85 = arith.constant dense<0xFF800000> : vector<8xf32>
    %277 = vector.multi_reduction <maximumf>, %276, %cst_85 [1] : vector<8x8xf32> to vector<8xf32>
    %278 = vector.shape_cast %277 : vector<8xf32> to vector<8x1xf32>
    %279 = vector.broadcast %278 : vector<8x1xf32> to vector<8x8xf32>
    %280 = arith.subf %276, %279 : vector<8x8xf32>
    %281 = math.exp %280 : vector<8x8xf32>
    %cst_86 = arith.constant dense<0.000000e+00> : vector<8xf32>
    %282 = vector.multi_reduction <add>, %281, %cst_86 [1] : vector<8x8xf32> to vector<8xf32>
    %283 = vector.shape_cast %282 : vector<8xf32> to vector<8x1xf32>
    %284 = tpu.reciprocal %283 {approx = true} : vector<8x1xf32> -> vector<8x1xf32>
    %285 = vector.broadcast %284 : vector<8x1xf32> to vector<8x8xf32>
    %286 = arith.mulf %281, %285 : vector<8x8xf32>
    %287 = arith.truncf %286 : vector<8x8xf32> to vector<8x8xbf16>
    %cst_87 = arith.constant dense<0.000000e+00> : vector<8x32xf32>
    %288 = tpu.matmul %287, %275, %cst_87 {dimension_numbers = #tpu.dot_dimension_numbers<[1], [0], [0], [1], [0, 0, 1, 1], [], []>} : vector<8x8xbf16>, vector<8x32xbf16>, vector<8x32xf32> -> vector<8x32xf32>
    %289 = vector.extract_strided_slice %252 {offsets = [0, 64], sizes = [8, 32], strides = [1, 1]} : vector<16x128xbf16> to vector<8x32xbf16>
    %290 = vector.extract_strided_slice %254 {offsets = [0, 64], sizes = [8, 32], strides = [1, 1]} : vector<16x128xbf16> to vector<8x32xbf16>
    %291 = vector.extract_strided_slice %256 {offsets = [0, 64], sizes = [8, 32], strides = [1, 1]} : vector<16x128xbf16> to vector<8x32xbf16>
    %cst_88 = arith.constant dense<0.000000e+00> : vector<8x8xf32>
    %292 = tpu.matmul %289, %290, %cst_88 {dimension_numbers = #tpu.dot_dimension_numbers<[1], [1], [0], [0], [0, 0, 1, 0], [], []>} : vector<8x32xbf16>, vector<8x32xbf16>, vector<8x8xf32> -> vector<8x8xf32>
    %cst_89 = arith.constant dense<0xFF800000> : vector<8xf32>
    %293 = vector.multi_reduction <maximumf>, %292, %cst_89 [1] : vector<8x8xf32> to vector<8xf32>
    %294 = vector.shape_cast %293 : vector<8xf32> to vector<8x1xf32>
    %295 = vector.broadcast %294 : vector<8x1xf32> to vector<8x8xf32>
    %296 = arith.subf %292, %295 : vector<8x8xf32>
    %297 = math.exp %296 : vector<8x8xf32>
    %cst_90 = arith.constant dense<0.000000e+00> : vector<8xf32>
    %298 = vector.multi_reduction <add>, %297, %cst_90 [1] : vector<8x8xf32> to vector<8xf32>
    %299 = vector.shape_cast %298 : vector<8xf32> to vector<8x1xf32>
    %300 = tpu.reciprocal %299 {approx = true} : vector<8x1xf32> -> vector<8x1xf32>
    %301 = vector.broadcast %300 : vector<8x1xf32> to vector<8x8xf32>
    %302 = arith.mulf %297, %301 : vector<8x8xf32>
    %303 = arith.truncf %302 : vector<8x8xf32> to vector<8x8xbf16>
    %cst_91 = arith.constant dense<0.000000e+00> : vector<8x32xf32>
    %304 = tpu.matmul %303, %291, %cst_91 {dimension_numbers = #tpu.dot_dimension_numbers<[1], [0], [0], [1], [0, 0, 1, 1], [], []>} : vector<8x8xbf16>, vector<8x32xbf16>, vector<8x32xf32> -> vector<8x32xf32>
    %305 = vector.extract_strided_slice %252 {offsets = [0, 96], sizes = [8, 32], strides = [1, 1]} : vector<16x128xbf16> to vector<8x32xbf16>
    %306 = vector.extract_strided_slice %254 {offsets = [0, 96], sizes = [8, 32], strides = [1, 1]} : vector<16x128xbf16> to vector<8x32xbf16>
    %307 = vector.extract_strided_slice %256 {offsets = [0, 96], sizes = [8, 32], strides = [1, 1]} : vector<16x128xbf16> to vector<8x32xbf16>
    %cst_92 = arith.constant dense<0.000000e+00> : vector<8x8xf32>
    %308 = tpu.matmul %305, %306, %cst_92 {dimension_numbers = #tpu.dot_dimension_numbers<[1], [1], [0], [0], [0, 0, 1, 0], [], []>} : vector<8x32xbf16>, vector<8x32xbf16>, vector<8x8xf32> -> vector<8x8xf32>
    %cst_93 = arith.constant dense<0xFF800000> : vector<8xf32>
    %309 = vector.multi_reduction <maximumf>, %308, %cst_93 [1] : vector<8x8xf32> to vector<8xf32>
    %310 = vector.shape_cast %309 : vector<8xf32> to vector<8x1xf32>
    %311 = vector.broadcast %310 : vector<8x1xf32> to vector<8x8xf32>
    %312 = arith.subf %308, %311 : vector<8x8xf32>
    %313 = math.exp %312 : vector<8x8xf32>
    %cst_94 = arith.constant dense<0.000000e+00> : vector<8xf32>
    %314 = vector.multi_reduction <add>, %313, %cst_94 [1] : vector<8x8xf32> to vector<8xf32>
    %315 = vector.shape_cast %314 : vector<8xf32> to vector<8x1xf32>
    %316 = tpu.reciprocal %315 {approx = true} : vector<8x1xf32> -> vector<8x1xf32>
    %317 = vector.broadcast %316 : vector<8x1xf32> to vector<8x8xf32>
    %318 = arith.mulf %313, %317 : vector<8x8xf32>
    %319 = arith.truncf %318 : vector<8x8xf32> to vector<8x8xbf16>
    %cst_95 = arith.constant dense<0.000000e+00> : vector<8x32xf32>
    %320 = tpu.matmul %319, %307, %cst_95 {dimension_numbers = #tpu.dot_dimension_numbers<[1], [0], [0], [1], [0, 0, 1, 1], [], []>} : vector<8x8xbf16>, vector<8x32xbf16>, vector<8x32xf32> -> vector<8x32xf32>
    %321 = tpu.concatenate %272, %288, %304, %320 in 1 : vector<8x32xf32>, vector<8x32xf32>, vector<8x32xf32>, vector<8x32xf32> -> vector<8x128xf32>
    %322 = vector.extract_strided_slice %252 {offsets = [8, 0], sizes = [8, 32], strides = [1, 1]} : vector<16x128xbf16> to vector<8x32xbf16>
    %323 = vector.extract_strided_slice %254 {offsets = [8, 0], sizes = [8, 32], strides = [1, 1]} : vector<16x128xbf16> to vector<8x32xbf16>
    %324 = vector.extract_strided_slice %256 {offsets = [8, 0], sizes = [8, 32], strides = [1, 1]} : vector<16x128xbf16> to vector<8x32xbf16>
    %cst_96 = arith.constant dense<0.000000e+00> : vector<8x8xf32>
    %325 = tpu.matmul %322, %323, %cst_96 {dimension_numbers = #tpu.dot_dimension_numbers<[1], [1], [0], [0], [0, 0, 1, 0], [], []>} : vector<8x32xbf16>, vector<8x32xbf16>, vector<8x8xf32> -> vector<8x8xf32>
    %cst_97 = arith.constant dense<0xFF800000> : vector<8xf32>
    %326 = vector.multi_reduction <maximumf>, %325, %cst_97 [1] : vector<8x8xf32> to vector<8xf32>
    %327 = vector.shape_cast %326 : vector<8xf32> to vector<8x1xf32>
    %328 = vector.broadcast %327 : vector<8x1xf32> to vector<8x8xf32>
    %329 = arith.subf %325, %328 : vector<8x8xf32>
    %330 = math.exp %329 : vector<8x8xf32>
    %cst_98 = arith.constant dense<0.000000e+00> : vector<8xf32>
    %331 = vector.multi_reduction <add>, %330, %cst_98 [1] : vector<8x8xf32> to vector<8xf32>
    %332 = vector.shape_cast %331 : vector<8xf32> to vector<8x1xf32>
    %333 = tpu.reciprocal %332 {approx = true} : vector<8x1xf32> -> vector<8x1xf32>
    %334 = vector.broadcast %333 : vector<8x1xf32> to vector<8x8xf32>
    %335 = arith.mulf %330, %334 : vector<8x8xf32>
    %336 = arith.truncf %335 : vector<8x8xf32> to vector<8x8xbf16>
    %cst_99 = arith.constant dense<0.000000e+00> : vector<8x32xf32>
    %337 = tpu.matmul %336, %324, %cst_99 {dimension_numbers = #tpu.dot_dimension_numbers<[1], [0], [0], [1], [0, 0, 1, 1], [], []>} : vector<8x8xbf16>, vector<8x32xbf16>, vector<8x32xf32> -> vector<8x32xf32>
    %338 = vector.extract_strided_slice %252 {offsets = [8, 32], sizes = [8, 32], strides = [1, 1]} : vector<16x128xbf16> to vector<8x32xbf16>
    %339 = vector.extract_strided_slice %254 {offsets = [8, 32], sizes = [8, 32], strides = [1, 1]} : vector<16x128xbf16> to vector<8x32xbf16>
    %340 = vector.extract_strided_slice %256 {offsets = [8, 32], sizes = [8, 32], strides = [1, 1]} : vector<16x128xbf16> to vector<8x32xbf16>
    %cst_100 = arith.constant dense<0.000000e+00> : vector<8x8xf32>
    %341 = tpu.matmul %338, %339, %cst_100 {dimension_numbers = #tpu.dot_dimension_numbers<[1], [1], [0], [0], [0, 0, 1, 0], [], []>} : vector<8x32xbf16>, vector<8x32xbf16>, vector<8x8xf32> -> vector<8x8xf32>
    %cst_101 = arith.constant dense<0xFF800000> : vector<8xf32>
    %342 = vector.multi_reduction <maximumf>, %341, %cst_101 [1] : vector<8x8xf32> to vector<8xf32>
    %343 = vector.shape_cast %342 : vector<8xf32> to vector<8x1xf32>
    %344 = vector.broadcast %343 : vector<8x1xf32> to vector<8x8xf32>
    %345 = arith.subf %341, %344 : vector<8x8xf32>
    %346 = math.exp %345 : vector<8x8xf32>
    %cst_102 = arith.constant dense<0.000000e+00> : vector<8xf32>
    %347 = vector.multi_reduction <add>, %346, %cst_102 [1] : vector<8x8xf32> to vector<8xf32>
    %348 = vector.shape_cast %347 : vector<8xf32> to vector<8x1xf32>
    %349 = tpu.reciprocal %348 {approx = true} : vector<8x1xf32> -> vector<8x1xf32>
    %350 = vector.broadcast %349 : vector<8x1xf32> to vector<8x8xf32>
    %351 = arith.mulf %346, %350 : vector<8x8xf32>
    %352 = arith.truncf %351 : vector<8x8xf32> to vector<8x8xbf16>
    %cst_103 = arith.constant dense<0.000000e+00> : vector<8x32xf32>
    %353 = tpu.matmul %352, %340, %cst_103 {dimension_numbers = #tpu.dot_dimension_numbers<[1], [0], [0], [1], [0, 0, 1, 1], [], []>} : vector<8x8xbf16>, vector<8x32xbf16>, vector<8x32xf32> -> vector<8x32xf32>
    %354 = vector.extract_strided_slice %252 {offsets = [8, 64], sizes = [8, 32], strides = [1, 1]} : vector<16x128xbf16> to vector<8x32xbf16>
    %355 = vector.extract_strided_slice %254 {offsets = [8, 64], sizes = [8, 32], strides = [1, 1]} : vector<16x128xbf16> to vector<8x32xbf16>
    %356 = vector.extract_strided_slice %256 {offsets = [8, 64], sizes = [8, 32], strides = [1, 1]} : vector<16x128xbf16> to vector<8x32xbf16>
    %cst_104 = arith.constant dense<0.000000e+00> : vector<8x8xf32>
    %357 = tpu.matmul %354, %355, %cst_104 {dimension_numbers = #tpu.dot_dimension_numbers<[1], [1], [0], [0], [0, 0, 1, 0], [], []>} : vector<8x32xbf16>, vector<8x32xbf16>, vector<8x8xf32> -> vector<8x8xf32>
    %cst_105 = arith.constant dense<0xFF800000> : vector<8xf32>
    %358 = vector.multi_reduction <maximumf>, %357, %cst_105 [1] : vector<8x8xf32> to vector<8xf32>
    %359 = vector.shape_cast %358 : vector<8xf32> to vector<8x1xf32>
    %360 = vector.broadcast %359 : vector<8x1xf32> to vector<8x8xf32>
    %361 = arith.subf %357, %360 : vector<8x8xf32>
    %362 = math.exp %361 : vector<8x8xf32>
    %cst_106 = arith.constant dense<0.000000e+00> : vector<8xf32>
    %363 = vector.multi_reduction <add>, %362, %cst_106 [1] : vector<8x8xf32> to vector<8xf32>
    %364 = vector.shape_cast %363 : vector<8xf32> to vector<8x1xf32>
    %365 = tpu.reciprocal %364 {approx = true} : vector<8x1xf32> -> vector<8x1xf32>
    %366 = vector.broadcast %365 : vector<8x1xf32> to vector<8x8xf32>
    %367 = arith.mulf %362, %366 : vector<8x8xf32>
    %368 = arith.truncf %367 : vector<8x8xf32> to vector<8x8xbf16>
    %cst_107 = arith.constant dense<0.000000e+00> : vector<8x32xf32>
    %369 = tpu.matmul %368, %356, %cst_107 {dimension_numbers = #tpu.dot_dimension_numbers<[1], [0], [0], [1], [0, 0, 1, 1], [], []>} : vector<8x8xbf16>, vector<8x32xbf16>, vector<8x32xf32> -> vector<8x32xf32>
    %370 = vector.extract_strided_slice %252 {offsets = [8, 96], sizes = [8, 32], strides = [1, 1]} : vector<16x128xbf16> to vector<8x32xbf16>
    %371 = vector.extract_strided_slice %254 {offsets = [8, 96], sizes = [8, 32], strides = [1, 1]} : vector<16x128xbf16> to vector<8x32xbf16>
    %372 = vector.extract_strided_slice %256 {offsets = [8, 96], sizes = [8, 32], strides = [1, 1]} : vector<16x128xbf16> to vector<8x32xbf16>
    %cst_108 = arith.constant dense<0.000000e+00> : vector<8x8xf32>
    %373 = tpu.matmul %370, %371, %cst_108 {dimension_numbers = #tpu.dot_dimension_numbers<[1], [1], [0], [0], [0, 0, 1, 0], [], []>} : vector<8x32xbf16>, vector<8x32xbf16>, vector<8x8xf32> -> vector<8x8xf32>
    %cst_109 = arith.constant dense<0xFF800000> : vector<8xf32>
    %374 = vector.multi_reduction <maximumf>, %373, %cst_109 [1] : vector<8x8xf32> to vector<8xf32>
    %375 = vector.shape_cast %374 : vector<8xf32> to vector<8x1xf32>
    %376 = vector.broadcast %375 : vector<8x1xf32> to vector<8x8xf32>
    %377 = arith.subf %373, %376 : vector<8x8xf32>
    %378 = math.exp %377 : vector<8x8xf32>
    %cst_110 = arith.constant dense<0.000000e+00> : vector<8xf32>
    %379 = vector.multi_reduction <add>, %378, %cst_110 [1] : vector<8x8xf32> to vector<8xf32>
    %380 = vector.shape_cast %379 : vector<8xf32> to vector<8x1xf32>
    %381 = tpu.reciprocal %380 {approx = true} : vector<8x1xf32> -> vector<8x1xf32>
    %382 = vector.broadcast %381 : vector<8x1xf32> to vector<8x8xf32>
    %383 = arith.mulf %378, %382 : vector<8x8xf32>
    %384 = arith.truncf %383 : vector<8x8xf32> to vector<8x8xbf16>
    %cst_111 = arith.constant dense<0.000000e+00> : vector<8x32xf32>
    %385 = tpu.matmul %384, %372, %cst_111 {dimension_numbers = #tpu.dot_dimension_numbers<[1], [0], [0], [1], [0, 0, 1, 1], [], []>} : vector<8x8xbf16>, vector<8x32xbf16>, vector<8x32xf32> -> vector<8x32xf32>
    %386 = tpu.concatenate %337, %353, %369, %385 in 1 : vector<8x32xf32>, vector<8x32xf32>, vector<8x32xf32>, vector<8x32xf32> -> vector<8x128xf32>
    %387 = tpu.concatenate %321, %386 in 0 : vector<8x128xf32>, vector<8x128xf32> -> vector<16x128xf32>
    %388 = arith.truncf %387 : vector<16x128xf32> to vector<16x128xbf16>
    %cst_112 = arith.constant dense<0.000000e+00> : vector<16x128xf32>
    %389 = tpu.matmul %388, %1, %cst_112 {dimension_numbers = #tpu.dot_dimension_numbers<[1], [0], [0], [1], [0, 0, 1, 1], [], []>} : vector<16x128xbf16>, vector<128x128xbf16>, vector<16x128xf32> -> vector<16x128xf32>
    %390 = arith.addf %389, %18 : vector<16x128xf32>
    %391 = arith.addf %226, %390 : vector<16x128xf32>
    %cst_113 = arith.constant dense<0.000000e+00> : vector<16xf32>
    %392 = vector.multi_reduction <add>, %391, %cst_113 [1] : vector<16x128xf32> to vector<16xf32>
    %393 = vector.shape_cast %392 : vector<16xf32> to vector<16x1xf32>
    %cst_114 = arith.constant 1.280000e+02 : f32
    %394 = vector.broadcast %cst_114 : f32 to vector<16x1xf32>
    %395 = arith.divf %393, %394 : vector<16x1xf32>
    %396 = vector.broadcast %395 : vector<16x1xf32> to vector<16x128xf32>
    %397 = arith.subf %391, %396 : vector<16x128xf32>
    %398 = arith.mulf %397, %397 : vector<16x128xf32>
    %cst_115 = arith.constant dense<0.000000e+00> : vector<16xf32>
    %399 = vector.multi_reduction <add>, %398, %cst_115 [1] : vector<16x128xf32> to vector<16xf32>
    %400 = vector.shape_cast %399 : vector<16xf32> to vector<16x1xf32>
    %cst_116 = arith.constant 1.280000e+02 : f32
    %401 = vector.broadcast %cst_116 : f32 to vector<16x1xf32>
    %402 = arith.divf %400, %401 : vector<16x1xf32>
    %403 = vector.broadcast %395 : vector<16x1xf32> to vector<16x128xf32>
    %404 = arith.subf %391, %403 : vector<16x128xf32>
    %cst_117 = arith.constant 9.99999974E-6 : f32
    %405 = vector.broadcast %cst_117 : f32 to vector<16x1xf32>
    %406 = arith.addf %402, %405 : vector<16x1xf32>
    %407 = math.rsqrt %406 : vector<16x1xf32>
    %408 = vector.broadcast %407 : vector<16x1xf32> to vector<16x128xf32>
    %409 = arith.mulf %404, %408 : vector<16x128xf32>
    %410 = arith.mulf %409, %12 : vector<16x128xf32>
    %411 = arith.addf %410, %15 : vector<16x128xf32>
    %412 = arith.truncf %411 : vector<16x128xf32> to vector<16x128xbf16>
    %cst_118 = arith.constant dense<0.000000e+00> : vector<16x128xf32>
    %413 = tpu.matmul %412, %2, %cst_118 {dimension_numbers = #tpu.dot_dimension_numbers<[1], [0], [0], [1], [0, 0, 1, 1], [], []>} : vector<16x128xbf16>, vector<128x128xbf16>, vector<16x128xf32> -> vector<16x128xf32>
    %414 = arith.addf %413, %21 : vector<16x128xf32>
    %cst_119 = arith.constant 5.000000e-01 : f32
    %415 = vector.broadcast %cst_119 : f32 to vector<16x128xf32>
    %416 = arith.mulf %415, %414 : vector<16x128xf32>
    %cst_120 = arith.constant 0.707106769 : f32
    %417 = vector.broadcast %cst_120 : f32 to vector<16x128xf32>
    %418 = arith.mulf %414, %417 : vector<16x128xf32>
    %419 = math.erf %418 : vector<16x128xf32>
    %cst_121 = arith.constant 1.000000e+00 : f32
    %420 = vector.broadcast %cst_121 : f32 to vector<16x128xf32>
    %421 = arith.addf %420, %419 : vector<16x128xf32>
    %422 = arith.mulf %416, %421 : vector<16x128xf32>
    %423 = arith.truncf %422 : vector<16x128xf32> to vector<16x128xbf16>
    %cst_122 = arith.constant dense<0.000000e+00> : vector<16x128xf32>
    %424 = tpu.matmul %423, %3, %cst_122 {dimension_numbers = #tpu.dot_dimension_numbers<[1], [0], [0], [1], [0, 0, 1, 1], [], []>} : vector<16x128xbf16>, vector<128x128xbf16>, vector<16x128xf32> -> vector<16x128xf32>
    %425 = arith.addf %424, %24 : vector<16x128xf32>
    %426 = arith.addf %391, %425 : vector<16x128xf32>
    %427 = vector.shape_cast %426 : vector<16x128xf32> to vector<2x8x128xf32>
    %c0_123 = arith.constant 0 : index
    %c0_124 = arith.constant 0 : index
    %c0_125 = arith.constant 0 : index
    %428 = vector.load %arg13[%c0_123, %c0_124, %c0_125] : memref<2x8x128xf32, #tpu.memory_space<vmem>>, vector<2x8x128xf32>
    tpu.vector_store %arg13[%c0_123, %c0_124, %c0_125], %427 {strides = array<i32>} : memref<2x8x128xf32, #tpu.memory_space<vmem>>, vector<2x8x128xf32>,
    return
  }
  func.func @transform_0(%arg0: i32) -> (i32, i32, i32) {
    %c0_i32 = arith.constant 0 : i32
    %c0_i32_0 = arith.constant 0 : i32
    %c0_i32_1 = arith.constant 0 : i32
    return %arg0, %c0_i32, %c0_i32_0 : i32, i32, i32
  }
  func.func @transform_1(%arg0: i32) -> (i32, i32) {
    %c0_i32 = arith.constant 0 : i32
    %c0_i32_0 = arith.constant 0 : i32
    %c0_i32_1 = arith.constant 0 : i32
    return %c0_i32, %c0_i32_0 : i32, i32
  }
  func.func @transform_2(%arg0: i32) -> (i32, i32) {
    %c0_i32 = arith.constant 0 : i32
    %c0_i32_0 = arith.constant 0 : i32
    %c0_i32_1 = arith.constant 0 : i32
    return %c0_i32, %c0_i32_0 : i32, i32
  }
  func.func @transform_3(%arg0: i32) -> (i32, i32) {
    %c0_i32 = arith.constant 0 : i32
    %c0_i32_0 = arith.constant 0 : i32
    %c0_i32_1 = arith.constant 0 : i32
    return %c0_i32, %c0_i32_0 : i32, i32
  }
  func.func @transform_4(%arg0: i32) -> (i32, i32) {
    %c0_i32 = arith.constant 0 : i32
    %c0_i32_0 = arith.constant 0 : i32
    %c0_i32_1 = arith.constant 0 : i32
    return %c0_i32, %c0_i32_0 : i32, i32
  }
  func.func @transform_5(%arg0: i32) -> (i32, i32) {
    %c0_i32 = arith.constant 0 : i32
    %c0_i32_0 = arith.constant 0 : i32
    %c0_i32_1 = arith.constant 0 : i32
    return %c0_i32, %c0_i32_0 : i32, i32
  }
  func.func @transform_6(%arg0: i32) -> (i32, i32) {
    %c0_i32 = arith.constant 0 : i32
    %c0_i32_0 = arith.constant 0 : i32
    %c0_i32_1 = arith.constant 0 : i32
    return %c0_i32, %c0_i32_0 : i32, i32
  }
  func.func @transform_7(%arg0: i32) -> (i32, i32) {
    %c0_i32 = arith.constant 0 : i32
    %c0_i32_0 = arith.constant 0 : i32
    %c0_i32_1 = arith.constant 0 : i32
    return %c0_i32, %c0_i32_0 : i32, i32
  }
  func.func @transform_8(%arg0: i32) -> (i32, i32) {
    %c0_i32 = arith.constant 0 : i32
    %c0_i32_0 = arith.constant 0 : i32
    %c0_i32_1 = arith.constant 0 : i32
    return %c0_i32, %c0_i32_0 : i32, i32
  }
  func.func @transform_9(%arg0: i32) -> (i32, i32) {
    %c0_i32 = arith.constant 0 : i32
    %c0_i32_0 = arith.constant 0 : i32
    %c0_i32_1 = arith.constant 0 : i32
    return %c0_i32, %c0_i32_0 : i32, i32
  }
  func.func @transform_10(%arg0: i32) -> (i32, i32) {
    %c0_i32 = arith.constant 0 : i32
    %c0_i32_0 = arith.constant 0 : i32
    %c0_i32_1 = arith.constant 0 : i32
    return %c0_i32, %c0_i32_0 : i32, i32
  }
  func.func @transform_11(%arg0: i32) -> (i32, i32) {
    %c0_i32 = arith.constant 0 : i32
    %c0_i32_0 = arith.constant 0 : i32
    %c0_i32_1 = arith.constant 0 : i32
    return %c0_i32, %c0_i32_0 : i32, i32
  }
  func.func @transform_12(%arg0: i32) -> (i32, i32, i32) {
    %c0_i32 = arith.constant 0 : i32
    %c0_i32_0 = arith.constant 0 : i32
    %c0_i32_1 = arith.constant 0 : i32
    return %arg0, %c0_i32, %c0_i32_0 : i32, i32, i32
  }
}

</mosaic_0001>

<llo_original>
// kernel: tpu_custom_call.1
$region0: #{tpu_custom_call.1}
  #allocation0 [shape = 'u32[]', space=smem, size = 0x4, offset = 0x4, fixed_abs, tag = 'smem constant byte address 0x4 - core index']
  #allocation1 [shape = 'u32[144,128]{1,0:T(1,128)}', space=vmem, size = 0x12000, scoped, tag = 'internal scratch']
  %s0 = inlined_call_operand.hbm [shape: f32[2,8,128], index: 0, kind: input, shape index: {}]
  %s1 = inlined_call_operand.vmem [shape: f32[1,128], index: 1, kind: input, shape index: {}]
  %s2 = inlined_call_operand.vmem [shape: f32[1,128], index: 2, kind: input, shape index: {}]
  %s3 = inlined_call_operand.hbm [shape: bf16[128,384], index: 3, kind: input, shape index: {}]
  %s4 = inlined_call_operand.hbm [shape: bf16[128,128], index: 4, kind: input, shape index: {}]
  %s5 = inlined_call_operand.vmem [shape: f32[1,128], index: 5, kind: input, shape index: {}]
  %s6 = inlined_call_operand.vmem [shape: f32[1,128], index: 6, kind: input, shape index: {}]
  %s7 = inlined_call_operand.vmem [shape: f32[1,128], index: 7, kind: input, shape index: {}]
  %s8 = inlined_call_operand.hbm [shape: bf16[128,128], index: 8, kind: input, shape index: {}]
  %s9 = inlined_call_operand.vmem [shape: f32[1,128], index: 9, kind: input, shape index: {}]
  %s10 = inlined_call_operand.hbm [shape: bf16[128,128], index: 10, kind: input, shape index: {}]
  %s11 = inlined_call_operand.vmem [shape: f32[1,128], index: 11, kind: input, shape index: {}]
  %s12 = inlined_call_operand.hbm [shape: f32[2,8,128], index: 12, kind: output, shape index: {}]
  %s13 = sld [smem:[#allocation0]]
  $region78: #{tpu_custom_call.1} parent=0
    _
  %s15 = ssub.s32 1, %s13
  %s16 = scalar_select 0, %s15, %s13
  $region1: #{tpu_custom_call.1} parent=0
    #allocation2 [shape = 'u8[8192]{0}', space=vmem, size = 0x2000, scoped, tag = 'input window, operand 0, single buffered']
    #allocation3 [shape = 's32[1]{0}', space=sflag, size = 0x4, scoped, tag = 'scoped memory for tpu_custom_call.1']
    #allocation4 [shape = 's32[1]{0}', space=sflag, size = 0x4, scoped, tag = 'scoped memory for tpu_custom_call.1']
    #allocation5 [shape = 'u8[98304]{0}', space=vmem, size = 0x18000, scoped, tag = 'input window, operand 3, single buffered']
    #allocation6 [shape = 's32[1]{0}', space=sflag, size = 0x4, scoped, tag = 'scoped memory for tpu_custom_call.1']
    #allocation7 [shape = 'u8[32768]{0}', space=vmem, size = 0x8000, scoped, tag = 'input window, operand 4, single buffered']
    #allocation8 [shape = 'u8[32768]{0}', space=vmem, size = 0x8000, scoped, tag = 'input window, operand 8, single buffered']
    #allocation9 [shape = 's32[1]{0}', space=sflag, size = 0x4, scoped, tag = 'scoped memory for tpu_custom_call.1']
    #allocation10 [shape = 'u8[32768]{0}', space=vmem, size = 0x8000, scoped, tag = 'input window, operand 10, single buffered']
    #allocation11 [shape = 'u8[8192]{0}', space=vmem, size = 0x2000, scoped, tag = 'output window, operand 0, single buffered']
    %17 = vsyncpa [#allocation3], 0
    %18 = vsyncpa [#allocation6], 0
    %19 = vsyncpa [#allocation9], 0
    %20 = vsyncpa [#allocation4], 0
    // Predicated region
    $region2: #{tpu_custom_call.1} parent=1 // pred_check
      _
    $region3: #{tpu_custom_call.1} parent=1 // pred_check_branch
      %22 = sbr.rel (0) target = $region5
    $region4: #{tpu_custom_call.1} parent=1 // pred_region
      %s24 = ssub.s32 256, 256
      %25 = vsyncadd [#allocation3], %s24
      %s26 = sshll.u32 [#allocation2], 4
      %s27 = int_to_ptr.vmem [resolvable:$true] %s26
      %32 = dma.hbm_to_vmem [thread:$0]  %s0, 256, %s27, [#allocation3], 128, 128, 8
    $region5: #{tpu_custom_call.1} parent=1 // pred_fallthru
      _
    // Predicated region
    $region6: #{tpu_custom_call.1} parent=1 // pred_check
      _
    $region7: #{tpu_custom_call.1} parent=1 // pred_check_branch
      %34 = sbr.rel (0) target = $region9
    $region8: #{tpu_custom_call.1} parent=1 // pred_region
      _
    $region9: #{tpu_custom_call.1} parent=1 // pred_fallthru
      _
    // Predicated region
    $region10: #{tpu_custom_call.1} parent=1 // pred_check
      _
    $region11: #{tpu_custom_call.1} parent=1 // pred_check_branch
      %36 = sbr.rel (0) target = $region13
    $region12: #{tpu_custom_call.1} parent=1 // pred_region
      _
    $region13: #{tpu_custom_call.1} parent=1 // pred_fallthru
      _
    // Predicated region
    $region14: #{tpu_custom_call.1} parent=1 // pred_check
      _
    $region15: #{tpu_custom_call.1} parent=1 // pred_check_branch
      %38 = sbr.rel (0) target = $region17
    $region16: #{tpu_custom_call.1} parent=1 // pred_region
      %s40 = ssub.s32 3072, 3072
      %41 = vsyncadd [#allocation6], %s40
      %s42 = sshll.u32 [#allocation5], 4
      %s43 = int_to_ptr.vmem [resolvable:$true] %s42
      %48 = dma.hbm_to_vmem [thread:$0]  %s3, 3072, %s43, [#allocation6], 192, 192, 12
    $region17: #{tpu_custom_call.1} parent=1 // pred_fallthru
      _
    // Predicated region
    $region18: #{tpu_custom_call.1} parent=1 // pred_check
      _
    $region19: #{tpu_custom_call.1} parent=1 // pred_check_branch
      %50 = sbr.rel (0) target = $region21
    $region20: #{tpu_custom_call.1} parent=1 // pred_region
      %s52 = ssub.s32 1024, 1024
      %53 = vsyncadd [#allocation6], %s52
      %s54 = sshll.u32 [#allocation7], 4
      %s55 = int_to_ptr.vmem [resolvable:$true] %s54
      %60 = dma.hbm_to_vmem [thread:$0]  %s4, 1024, %s55, [#allocation6], 64, 64, 4
    $region21: #{tpu_custom_call.1} parent=1 // pred_fallthru
      _
    // Predicated region
    $region22: #{tpu_custom_call.1} parent=1 // pred_check
      _
    $region23: #{tpu_custom_call.1} parent=1 // pred_check_branch
      %62 = sbr.rel (0) target = $region25
    $region24: #{tpu_custom_call.1} parent=1 // pred_region
      _
    $region25: #{tpu_custom_call.1} parent=1 // pred_fallthru
      _
    // Predicated region
    $region26: #{tpu_custom_call.1} parent=1 // pred_check
      _
    $region27: #{tpu_custom_call.1} parent=1 // pred_check_branch
      %64 = sbr.rel (0) target = $region29
    $region28: #{tpu_custom_call.1} parent=1 // pred_region
      _
    $region29: #{tpu_custom_call.1} parent=1 // pred_fallthru
      _
    // Predicated region
    $region30: #{tpu_custom_call.1} parent=1 // pred_check
      _
    $region31: #{tpu_custom_call.1} parent=1 // pred_check_branch
      %66 = sbr.rel (0) target = $region33
    $region32: #{tpu_custom_call.1} parent=1 // pred_region
      _
    $region33: #{tpu_custom_call.1} parent=1 // pred_fallthru
      _
    // Predicated region
    $region34: #{tpu_custom_call.1} parent=1 // pred_check
      _
    $region35: #{tpu_custom_call.1} parent=1 // pred_check_branch
      %68 = sbr.rel (0) target = $region37
    $region36: #{tpu_custom_call.1} parent=1 // pred_region
      %s70 = ssub.s32 1024, 1024
      %71 = vsyncadd [#allocation9], %s70
      %s72 = sshll.u32 [#allocation8], 4
      %s73 = int_to_ptr.vmem [resolvable:$true] %s72
      %78 = dma.hbm_to_vmem [thread:$0]  %s8, 1024, %s73, [#allocation9], 64, 64, 4
    $region37: #{tpu_custom_call.1} parent=1 // pred_fallthru
      _
    // Predicated region
    $region38: #{tpu_custom_call.1} parent=1 // pred_check
      _
    $region39: #{tpu_custom_call.1} parent=1 // pred_check_branch
      %80 = sbr.rel (0) target = $region41
    $region40: #{tpu_custom_call.1} parent=1 // pred_region
      _
    $region41: #{tpu_custom_call.1} parent=1 // pred_fallthru
      _
    // Predicated region
    $region42: #{tpu_custom_call.1} parent=1 // pred_check
      _
    $region43: #{tpu_custom_call.1} parent=1 // pred_check_branch
      %82 = sbr.rel (0) target = $region45
    $region44: #{tpu_custom_call.1} parent=1 // pred_region
      %s84 = ssub.s32 1024, 1024
      %85 = vsyncadd [#allocation9], %s84
      %s86 = sshll.u32 [#allocation10], 4
      %s87 = int_to_ptr.vmem [resolvable:$true] %s86
      %92 = dma.hbm_to_vmem [thread:$0]  %s10, 1024, %s87, [#allocation9], 64, 64, 4
    $region45: #{tpu_custom_call.1} parent=1 // pred_fallthru
      _
    // Predicated region
    $region46: #{tpu_custom_call.1} parent=1 // pred_check
      _
    $region47: #{tpu_custom_call.1} parent=1 // pred_check_branch
      %94 = sbr.rel (0) target = $region49
    $region48: #{tpu_custom_call.1} parent=1 // pred_region
      _
    $region49: #{tpu_custom_call.1} parent=1 // pred_fallthru
      _
    // Predicated region
    $region50: #{tpu_custom_call.1} parent=1 // pred_check
      _
    $region51: #{tpu_custom_call.1} parent=1 // pred_check_branch
      %96 = sbr.rel (0) target = $region53
    $region52: #{tpu_custom_call.1} parent=1 // pred_region
      %97 = dma.done [#allocation3], 256
    $region53: #{tpu_custom_call.1} parent=1 // pred_fallthru
      _
    // Predicated region
    $region54: #{tpu_custom_call.1} parent=1 // pred_check
      _
    $region55: #{tpu_custom_call.1} parent=1 // pred_check_branch
      %99 = sbr.rel (0) target = $region57
    $region56: #{tpu_custom_call.1} parent=1 // pred_region
      %100 = dma.done [#allocation6], 3072
    $region57: #{tpu_custom_call.1} parent=1 // pred_fallthru
      _
    // Predicated region
    $region58: #{tpu_custom_call.1} parent=1 // pred_check
      _
    $region59: #{tpu_custom_call.1} parent=1 // pred_check_branch
      %102 = sbr.rel (0) target = $region61
    $region60: #{tpu_custom_call.1} parent=1 // pred_region
      %103 = dma.done [#allocation6], 1024
    $region61: #{tpu_custom_call.1} parent=1 // pred_fallthru
      _
    // Predicated region
    $region62: #{tpu_custom_call.1} parent=1 // pred_check
      _
    $region63: #{tpu_custom_call.1} parent=1 // pred_check_branch
      %105 = sbr.rel (0) target = $region65
    $region64: #{tpu_custom_call.1} parent=1 // pred_region
      %106 = dma.done [#allocation9], 1024
    $region65: #{tpu_custom_call.1} parent=1 // pred_fallthru
      _
    // Predicated region
    $region66: #{tpu_custom_call.1} parent=1 // pred_check
      _
    $region67: #{tpu_custom_call.1} parent=1 // pred_check_branch
      %108 = sbr.rel (0) target = $region69
    $region68: #{tpu_custom_call.1} parent=1 // pred_region
      %109 = dma.done [#allocation9], 1024
    $region69: #{tpu_custom_call.1} parent=1 // pred_fallthru
      _
    %v111 = vld [vmem:[#allocation5] sm:$0xff]
    %v112 = vld [vmem:[#allocation5 + $0x8] sm:$0xf]
    %v113 = vld [vmem:[#allocation5 + $0xc] sm:$0xff]
    %v114 = vld [vmem:[#allocation5 + $0x14] sm:$0xf]
    %v115 = vld [vmem:[#allocation5 + $0x18] sm:$0xff]
    %v116 = vld [vmem:[#allocation5 + $0x20] sm:$0xf]
    %v117 = vld [vmem:[#allocation5 + $0x24] sm:$0xff]
    %v118 = vld [vmem:[#allocation5 + $0x2c] sm:$0xf]
    %v119 = vld [vmem:[#allocation5 + $0x30] sm:$0xff]
    %v120 = vld [vmem:[#allocation5 + $0x38] sm:$0xf]
    %v121 = vld [vmem:[#allocation5 + $0x3c] sm:$0xff]
    %v122 = vld [vmem:[#allocation5 + $0x44] sm:$0xf]
    %v123 = vld [vmem:[#allocation5 + $0x48] sm:$0xff]
    %v124 = vld [vmem:[#allocation5 + $0x50] sm:$0xf]
    %v125 = vld [vmem:[#allocation5 + $0x54] sm:$0xff]
    %v126 = vld [vmem:[#allocation5 + $0x5c] sm:$0xf]
    %v127 = vld [vmem:[#allocation5 + $0x60] sm:$0xff]
    %v128 = vld [vmem:[#allocation5 + $0x68] sm:$0xf]
    %v129 = vld [vmem:[#allocation5 + $0x6c] sm:$0xff]
    %v130 = vld [vmem:[#allocation5 + $0x74] sm:$0xf]
    %v131 = vld [vmem:[#allocation5 + $0x78] sm:$0xff]
    %v132 = vld [vmem:[#allocation5 + $0x80] sm:$0xf]
    %v133 = vld [vmem:[#allocation5 + $0x84] sm:$0xff]
    %v134 = vld [vmem:[#allocation5 + $0x8c] sm:$0xf]
    %v135 = vld [vmem:[#allocation5 + $0x90] sm:$0xff]
    %v136 = vld [vmem:[#allocation5 + $0x98] sm:$0xf]
    %v137 = vld [vmem:[#allocation5 + $0x9c] sm:$0xff]
    %v138 = vld [vmem:[#allocation5 + $0xa4] sm:$0xf]
    %v139 = vld [vmem:[#allocation5 + $0xa8] sm:$0xff]
    %v140 = vld [vmem:[#allocation5 + $0xb0] sm:$0xf]
    %v141 = vld [vmem:[#allocation5 + $0xb4] sm:$0xff]
    %v142 = vld [vmem:[#allocation5 + $0xbc] sm:$0xf]
    %v143 = vld [vmem:[#allocation7] sm:$0xf]
    %v144 = vld [vmem:[#allocation7 + $0x4] sm:$0xf]
    %v145 = vld [vmem:[#allocation7 + $0x8] sm:$0xf]
    %v146 = vld [vmem:[#allocation7 + $0xc] sm:$0xf]
    %v147 = vld [vmem:[#allocation7 + $0x10] sm:$0xf]
    %v148 = vld [vmem:[#allocation7 + $0x14] sm:$0xf]
    %v149 = vld [vmem:[#allocation7 + $0x18] sm:$0xf]
    %v150 = vld [vmem:[#allocation7 + $0x1c] sm:$0xf]
    %v151 = vld [vmem:[#allocation7 + $0x20] sm:$0xf]
    %v152 = vld [vmem:[#allocation7 + $0x24] sm:$0xf]
    %v153 = vld [vmem:[#allocation7 + $0x28] sm:$0xf]
    %v154 = vld [vmem:[#allocation7 + $0x2c] sm:$0xf]
    %v155 = vld [vmem:[#allocation7 + $0x30] sm:$0xf]
    %v156 = vld [vmem:[#allocation7 + $0x34] sm:$0xf]
    %v157 = vld [vmem:[#allocation7 + $0x38] sm:$0xf]
    %v158 = vld [vmem:[#allocation7 + $0x3c] sm:$0xf]
    %v159 = vld [vmem:[#allocation8] sm:$0xf]
    %v160 = vld [vmem:[#allocation8 + $0x4] sm:$0xf]
    %v161 = vld [vmem:[#allocation8 + $0x8] sm:$0xf]
    %v162 = vld [vmem:[#allocation8 + $0xc] sm:$0xf]
    %v163 = vld [vmem:[#allocation8 + $0x10] sm:$0xf]
    %v164 = vld [vmem:[#allocation8 + $0x14] sm:$0xf]
    %v165 = vld [vmem:[#allocation8 + $0x18] sm:$0xf]
    %v166 = vld [vmem:[#allocation8 + $0x1c] sm:$0xf]
    %v167 = vld [vmem:[#allocation8 + $0x20] sm:$0xf]
    %v168 = vld [vmem:[#allocation8 + $0x24] sm:$0xf]
    %v169 = vld [vmem:[#allocation8 + $0x28] sm:$0xf]
    %v170 = vld [vmem:[#allocation8 + $0x2c] sm:$0xf]
    %v171 = vld [vmem:[#allocation8 + $0x30] sm:$0xf]
    %v172 = vld [vmem:[#allocation8 + $0x34] sm:$0xf]
    %v173 = vld [vmem:[#allocation8 + $0x38] sm:$0xf]
    %v174 = vld [vmem:[#allocation8 + $0x3c] sm:$0xf]
    %v175 = vld [vmem:[#allocation10] sm:$0xf]
    %v176 = vld [vmem:[#allocation10 + $0x4] sm:$0xf]
    %v177 = vld [vmem:[#allocation10 + $0x8] sm:$0xf]
    %v178 = vld [vmem:[#allocation10 + $0xc] sm:$0xf]
    %v179 = vld [vmem:[#allocation10 + $0x10] sm:$0xf]
    %v180 = vld [vmem:[#allocation10 + $0x14] sm:$0xf]
    %v181 = vld [vmem:[#allocation10 + $0x18] sm:$0xf]
    %v182 = vld [vmem:[#allocation10 + $0x1c] sm:$0xf]
    %v183 = vld [vmem:[#allocation10 + $0x20] sm:$0xf]
    %v184 = vld [vmem:[#allocation10 + $0x24] sm:$0xf]
    %v185 = vld [vmem:[#allocation10 + $0x28] sm:$0xf]
    %v186 = vld [vmem:[#allocation10 + $0x2c] sm:$0xf]
    %v187 = vld [vmem:[#allocation10 + $0x30] sm:$0xf]
    %v188 = vld [vmem:[#allocation10 + $0x34] sm:$0xf]
    %v189 = vld [vmem:[#allocation10 + $0x38] sm:$0xf]
    %v190 = vld [vmem:[#allocation10 + $0x3c] sm:$0xf]
    %v191 = vld [vmem:[%s1] sm:$0x1]
    %v193 = vlaneseq
    %v194 = vshrl.u32 %v193, 7
    %v195 = vsub.s32 0, %v194
    %v196 = vrot.slane %v191, %v195
    %v198 = vld [vmem:[%s2] sm:$0x1]
    %v200 = vlaneseq
    %v201 = vshrl.u32 %v200, 7
    %v202 = vsub.s32 0, %v201
    %v203 = vrot.slane %v198, %v202
    %v205 = vld [vmem:[%s6] sm:$0x1]
    %v207 = vlaneseq
    %v208 = vshrl.u32 %v207, 7
    %v209 = vsub.s32 0, %v208
    %v210 = vrot.slane %v205, %v209
    %v212 = vld [vmem:[%s7] sm:$0x1]
    %v214 = vlaneseq
    %v215 = vshrl.u32 %v214, 7
    %v216 = vsub.s32 0, %v215
    %v217 = vrot.slane %v212, %v216
    %v219 = vld [vmem:[%s5] sm:$0x1]
    %v221 = vlaneseq
    %v222 = vshrl.u32 %v221, 7
    %v223 = vsub.s32 0, %v222
    %v224 = vrot.slane %v219, %v223
    %v226 = vld [vmem:[%s9] sm:$0x1]
    %v228 = vlaneseq
    %v229 = vshrl.u32 %v228, 7
    %v230 = vsub.s32 0, %v229
    %v231 = vrot.slane %v226, %v230
    %v233 = vld [vmem:[%s11] sm:$0x1]
    %v235 = vlaneseq
    %v236 = vshrl.u32 %v235, 7
    %v237 = vsub.s32 0, %v236
    %v238 = vrot.slane %v233, %v237
    %v240 = vld [vmem:[#allocation2] sm:$0xff]
    %v241 = vld [vmem:[#allocation2 + $0x8] sm:$0xff]
    %242 = vadd.xlane.f32.xlu0 %v240
    %v243 = vpop.xlane.xlu0 %242
    %244 = vadd.xlane.f32.xlu0 %v241
    %v245 = vpop.xlane.xlu0 %244
    %v246 = vrcp.pop 128.0
    %v247 = vmul.f32 %v243, %v246
    %v248 = vmul.f32 %v245, %v246
    %v249 = vsub.f32 %v240, %v247
    %v250 = vsub.f32 %v241, %v248
    %v251 = vmul.f32 %v249, %v249
    %v252 = vmul.f32 %v250, %v250
    %253 = vadd.xlane.f32.xlu0 %v251
    %v254 = vpop.xlane.xlu0 %253
    %255 = vadd.xlane.f32.xlu0 %v252
    %v256 = vpop.xlane.xlu0 %255
    %v257 = vmul.f32 %v254, %v246
    %v258 = vmul.f32 %v256, %v246
    %v259 = vadd.f32 %v257, 1e-05
    %v260 = vadd.f32 %v258, 1e-05
    %v261 = vrsqrt.pop %v259
    %v262 = vrsqrt.pop %v260
    %v263 = vmul.f32 %v249, %v261
    %v264 = vmul.f32 %v250, %v262
    %v265 = vmul.f32 %v263, %v196
    %v266 = vmul.f32 %v264, %v196
    %v267 = vadd.f32 %v265, %v203
    %v268 = vadd.f32 %v266, %v203
    %v269 = vpack.c.bf16 %v268, %v267
    %v302 = vunpack.c.l.b16 %v111
    %v303 = vunpack.c.h.b16 %v111
    %v304 = vunpack.c.l.b16 %v112
    %v305 = vunpack.c.l.b16 %v113
    %v306 = vunpack.c.h.b16 %v113
    %v307 = vunpack.c.l.b16 %v114
    %v308 = vunpack.c.l.b16 %v115
    %v309 = vunpack.c.h.b16 %v115
    %v310 = vunpack.c.l.b16 %v116
    %v311 = vunpack.c.l.b16 %v117
    %v312 = vunpack.c.h.b16 %v117
    %v313 = vunpack.c.l.b16 %v118
    %v314 = vunpack.c.l.b16 %v119
    %v315 = vunpack.c.h.b16 %v119
    %v316 = vunpack.c.l.b16 %v120
    %v317 = vunpack.c.l.b16 %v121
    %v318 = vunpack.c.h.b16 %v121
    %v319 = vunpack.c.l.b16 %v122
    %v320 = vunpack.c.l.b16 %v123
    %v321 = vunpack.c.h.b16 %v123
    %v322 = vunpack.c.l.b16 %v124
    %v323 = vunpack.c.l.b16 %v125
    %v324 = vunpack.c.h.b16 %v125
    %v325 = vunpack.c.l.b16 %v126
    %v326 = vunpack.c.l.b16 %v127
    %v327 = vunpack.c.h.b16 %v127
    %v328 = vunpack.c.l.b16 %v128
    %v329 = vunpack.c.l.b16 %v129
    %v330 = vunpack.c.h.b16 %v129
    %v331 = vunpack.c.l.b16 %v130
    %v332 = vunpack.c.l.b16 %v131
    %v333 = vunpack.c.h.b16 %v131
    %v334 = vunpack.c.l.b16 %v132
    %v335 = vunpack.c.l.b16 %v133
    %v336 = vunpack.c.h.b16 %v133
    %v337 = vunpack.c.l.b16 %v134
    %v338 = vunpack.c.l.b16 %v135
    %v339 = vunpack.c.h.b16 %v135
    %v340 = vunpack.c.l.b16 %v136
    %v341 = vunpack.c.l.b16 %v137
    %v342 = vunpack.c.h.b16 %v137
    %v343 = vunpack.c.l.b16 %v138
    %v344 = vunpack.c.l.b16 %v139
    %v345 = vunpack.c.h.b16 %v139
    %v346 = vunpack.c.l.b16 %v140
    %v347 = vunpack.c.l.b16 %v141
    %v348 = vunpack.c.h.b16 %v141
    %v349 = vunpack.c.l.b16 %v142
    %v350 = vpack.c.b16 %v305, %v302
    %v351 = vpack.c.b16 %v306, %v303
    %v352 = vpack.c.b16 %v307, %v304
    %v353 = vpack.c.b16 %v311, %v308
    %v354 = vpack.c.b16 %v312, %v309
    %v355 = vpack.c.b16 %v313, %v310
    %v356 = vpack.c.b16 %v317, %v314
    %v357 = vpack.c.b16 %v318, %v315
    %v358 = vpack.c.b16 %v319, %v316
    %v359 = vpack.c.b16 %v323, %v320
    %v360 = vpack.c.b16 %v324, %v321
    %v361 = vpack.c.b16 %v325, %v322
    %v362 = vpack.c.b16 %v329, %v326
    %v363 = vpack.c.b16 %v330, %v327
    %v364 = vpack.c.b16 %v331, %v328
    %v365 = vpack.c.b16 %v335, %v332
    %v366 = vpack.c.b16 %v336, %v333
    %v367 = vpack.c.b16 %v337, %v334
    %v368 = vpack.c.b16 %v341, %v338
    %v369 = vpack.c.b16 %v342, %v339
    %v370 = vpack.c.b16 %v343, %v340
    %v371 = vpack.c.b16 %v347, %v344
    %v372 = vpack.c.b16 %v348, %v345
    %v373 = vpack.c.b16 %v349, %v346
    %398 = vmatprep.subr.bf16.mxu0 %v351
    %399 = vmatpush1.bf16.msra.mxu0 %v350
    %400 = vmatprep.subr.bf16.mxu0 %v354
    %401 = vmatpush1.bf16.msra.mxu0 %v353
    %402 = vmatprep.subr.bf16.mxu0 %v357
    %403 = vmatpush1.bf16.msra.mxu0 %v356
    %404 = vmatprep.subr.bf16.mxu0 %v360
    %405 = vmatpush1.bf16.msra.mxu0 %v359
    %406 = vmatprep.subr.bf16.mxu0 %v363
    %407 = vmatpush1.bf16.msra.mxu0 %v362
    %408 = vmatprep.subr.bf16.mxu0 %v366
    %409 = vmatpush1.bf16.msra.mxu0 %v365
    %410 = vmatprep.subr.bf16.mxu0 %v369
    %411 = vmatpush1.bf16.msra.mxu0 %v368
    %412 = vmatprep.subr.bf16.mxu0 %v372
    %413 = vmatpush1.bf16.msra.mxu0 %v371
    %414 = vmatprep.subr.bf16.mxu0 0
    %415 = vmatpush1.bf16.msra.mxu0 0
    %416 = vmatprep.subr.bf16.mxu0 0
    %417 = vmatpush1.bf16.msra.mxu0 0
    %418 = vmatprep.subr.bf16.mxu0 0
    %419 = vmatpush1.bf16.msra.mxu0 0
    %420 = vmatprep.subr.bf16.mxu0 0
    %421 = vmatpush1.bf16.msra.mxu0 0
    %422 = vmatprep.subr.bf16.mxu0 0
    %423 = vmatpush1.bf16.msra.mxu0 0
    %424 = vmatprep.subr.bf16.mxu0 0
    %425 = vmatpush1.bf16.msra.mxu0 0
    %426 = vmatprep.subr.bf16.mxu0 0
    %427 = vmatpush1.bf16.msra.mxu0 0
    %428 = vmatprep.subr.bf16.mxu0 0
    %429 = vmatpush1.bf16.msra.mxu0 0
    %430 = vmatprep.mubr.bf16.mxu0 0
    %431 = vmatmul.mubr.bf16.gmra.mrb[0].mxu0 %v269
    %v432 = vpop.f32.mrb[0].mxu0
    %v433 = vadd.f32 0.0, %v432
    %v434 = vpop.f32.mrb[0].mxu0
    %v435 = vadd.f32 0.0, %v434
    %v436 = vpop.f32.mrb[0].mxu0
    %v437 = vadd.f32 0.0, %v436
    %v438 = vpop.f32.mrb[0].mxu0
    %v439 = vadd.f32 0.0, %v438
    %440 = vdwg.mxu0
    %441 = vmatprep.subr.bf16.mxu0 0
    %442 = vmatpush1.bf16.msra.mxu0 %v352
    %443 = vmatprep.subr.bf16.mxu0 0
    %444 = vmatpush1.bf16.msra.mxu0 %v355
    %445 = vmatprep.subr.bf16.mxu0 0
    %446 = vmatpush1.bf16.msra.mxu0 %v358
    %447 = vmatprep.subr.bf16.mxu0 0
    %448 = vmatpush1.bf16.msra.mxu0 %v361
    %449 = vmatprep.subr.bf16.mxu0 0
    %450 = vmatpush1.bf16.msra.mxu0 %v364
    %451 = vmatprep.subr.bf16.mxu0 0
    %452 = vmatpush1.bf16.msra.mxu0 %v367
    %453 = vmatprep.subr.bf16.mxu0 0
    %454 = vmatpush1.bf16.msra.mxu0 %v370
    %455 = vmatprep.subr.bf16.mxu0 0
    %456 = vmatpush1.bf16.msra.mxu0 %v373
    %457 = vmatprep.subr.bf16.mxu0 0
    %458 = vmatpush1.bf16.msra.mxu0 0
    %459 = vmatprep.subr.bf16.mxu0 0
    %460 = vmatpush1.bf16.msra.mxu0 0
    %461 = vmatprep.subr.bf16.mxu0 0
    %462 = vmatpush1.bf16.msra.mxu0 0
    %463 = vmatprep.subr.bf16.mxu0 0
    %464 = vmatpush1.bf16.msra.mxu0 0
    %465 = vmatprep.subr.bf16.mxu0 0
    %466 = vmatpush1.bf16.msra.mxu0 0
    %467 = vmatprep.subr.bf16.mxu0 0
    %468 = vmatpush1.bf16.msra.mxu0 0
    %469 = vmatprep.subr.bf16.mxu0 0
    %470 = vmatpush1.bf16.msra.mxu0 0
    %471 = vmatprep.subr.bf16.mxu0 0
    %472 = vmatpush1.bf16.msra.mxu0 0
    %473 = vmatprep.mubr.bf16.mxu0 0
    %474 = vmatmul.mubr.bf16.gmra.mrb[0].mxu0 %v269
    %v475 = vpop.f32.mrb[0].mxu0
    %v476 = vadd.f32 0.0, %v475
    %v477 = vpop.f32.mrb[0].mxu0
    %v478 = vpop.f32.mrb[0].mxu0
    %v479 = vadd.f32 0.0, %v478
    %v480 = vpop.f32.mrb[0].mxu0
    %481 = vdwg.mxu0
    %v482 = vmul.f32 %v433, 0.17677669
    %v483 = vmul.f32 %v437, 0.17677669
    %v484 = vpack.c.bf16 %v483, %v482
    %v485 = vpack.c.bf16 %v439, %v435
    %v486 = vpack.c.bf16 %v479, %v476
    %vm487 = vcmask 261120
    %v489 = vsel %vm487, %v484, 0
    %v492 = vsel %vm487, %v485, 0
    %494 = vmatprep.subr.bf16.mxu0 0
    %495 = vmatpush1.bf16.xpose.msra.mxu0 %v492
    %496 = vmatprep.subr.bf16.mxu0 0
    %497 = vmatpush1.bf16.xpose.msra.mxu0 0
    %498 = vmatprep.subr.bf16.mxu0 0
    %499 = vmatpush1.bf16.xpose.msra.mxu0 0
    %500 = vmatprep.subr.bf16.mxu0 0
    %501 = vmatpush1.bf16.xpose.msra.mxu0 0
    %502 = vmatprep.subr.bf16.mxu0 0
    %503 = vmatpush1.bf16.xpose.msra.mxu0 0
    %504 = vmatprep.subr.bf16.mxu0 0
    %505 = vmatpush1.bf16.xpose.msra.mxu0 0
    %506 = vmatprep.subr.bf16.mxu0 0
    %507 = vmatpush1.bf16.xpose.msra.mxu0 0
    %508 = vmatprep.subr.bf16.mxu0 0
    %509 = vmatpush1.bf16.xpose.msra.mxu0 0
    %510 = vmatprep.subr.bf16.mxu0 0
    %511 = vmatpush1.bf16.xpose.msra.mxu0 0
    %512 = vmatprep.subr.bf16.mxu0 0
    %513 = vmatpush1.bf16.xpose.msra.mxu0 0
    %514 = vmatprep.subr.bf16.mxu0 0
    %515 = vmatpush1.bf16.xpose.msra.mxu0 0
    %516 = vmatprep.subr.bf16.mxu0 0
    %517 = vmatpush1.bf16.xpose.msra.mxu0 0
    %518 = vmatprep.subr.bf16.mxu0 0
    %519 = vmatpush1.bf16.xpose.msra.mxu0 0
    %520 = vmatprep.subr.bf16.mxu0 0
    %521 = vmatpush1.bf16.xpose.msra.mxu0 0
    %522 = vmatprep.subr.bf16.mxu0 0
    %523 = vmatpush1.bf16.xpose.msra.mxu0 0
    %524 = vmatprep.subr.bf16.mxu0 0
    %525 = vmatpush1.bf16.xpose.msra.mxu0 0
    %526 = vmatprep.mubr.bf16.mxu0 0
    %527 = vmatmul.mubr.bf16.gmra.mrb[0].mxu0 %v489
    %v528 = vpop.f32.mrb[0].mxu0
    %v529 = vadd.f32 0.0, %v528
    %v530 = vpop.f32.mrb[0].mxu0
    %v531 = vpop.f32.mrb[0].mxu0
    %v532 = vpop.f32.mrb[0].mxu0
    %533 = vdwg.mxu0
    %vm534 = vcmask 64512
    %v535 = vsel %vm534, %v529, -inf
    %536 = vmax.xlane.f32.xlu0 %v535
    %v537 = vpop.xlane.xlu0 %536
    %v538 = vsub.f32 %v529, %v537
    %v539 = vmul.f32 %v538, 1.442695
    %v540 = vpow.pop %v539
    %v541 = vsel %vm534, %v540, 0.0
    %542 = vadd.xlane.f32.xlu0 %v541
    %v543 = vpop.xlane.xlu0 %542
    %v544 = vrcp.pop %v543
    %v545 = vmul.f32 %v540, %v544
    %v546 = vpack.c.bf16 %v545, %v545
    %v548 = vsel %vm534, %v546, 0
    %vm550 = vcmask 1043456
    %v552 = vsel %vm550, %v486, 0
    %554 = vmatprep.subr.bf16.mxu0 0
    %555 = vmatpush1.bf16.msra.mxu0 %v552
    %556 = vmatprep.subr.bf16.mxu0 0
    %557 = vmatpush1.bf16.msra.mxu0 0
    %558 = vmatprep.subr.bf16.mxu0 0
    %559 = vmatpush1.bf16.msra.mxu0 0
    %560 = vmatprep.subr.bf16.mxu0 0
    %561 = vmatpush1.bf16.msra.mxu0 0
    %562 = vmatprep.subr.bf16.mxu0 0
    %563 = vmatpush1.bf16.msra.mxu0 0
    %564 = vmatprep.subr.bf16.mxu0 0
    %565 = vmatpush1.bf16.msra.mxu0 0
    %566 = vmatprep.subr.bf16.mxu0 0
    %567 = vmatpush1.bf16.msra.mxu0 0
    %568 = vmatprep.subr.bf16.mxu0 0
    %569 = vmatpush1.bf16.msra.mxu0 0
    %570 = vmatprep.subr.bf16.mxu0 0
    %571 = vmatpush1.bf16.msra.mxu0 0
    %572 = vmatprep.subr.bf16.mxu0 0
    %573 = vmatpush1.bf16.msra.mxu0 0
    %574 = vmatprep.subr.bf16.mxu0 0
    %575 = vmatpush1.bf16.msra.mxu0 0
    %576 = vmatprep.subr.bf16.mxu0 0
    %577 = vmatpush1.bf16.msra.mxu0 0
    %578 = vmatprep.subr.bf16.mxu0 0
    %579 = vmatpush1.bf16.msra.mxu0 0
    %580 = vmatprep.subr.bf16.mxu0 0
    %581 = vmatpush1.bf16.msra.mxu0 0
    %582 = vmatprep.subr.bf16.mxu0 0
    %583 = vmatpush1.bf16.msra.mxu0 0
    %584 = vmatprep.subr.bf16.mxu0 0
    %585 = vmatpush1.bf16.msra.mxu0 0
    %586 = vmatprep.mubr.bf16.mxu0 0
    %587 = vmatmul.mubr.bf16.gmra.mrb[0].mxu0 %v548
    %v588 = vpop.f32.mrb[0].mxu0
    %v589 = vadd.f32 0.0, %v588
    %v590 = vpop.f32.mrb[0].mxu0
    %v591 = vpop.f32.mrb[0].mxu0
    %v592 = vpop.f32.mrb[0].mxu0
    %593 = vdwg.mxu0
    %595 = vrot.lane.b32.xlu0 %v484, 96
    %v596 = vpop.permute.xlu0 %595
    %598 = vrot.lane.b32.xlu0 %v485, 96
    %v599 = vpop.permute.xlu0 %598
    %v601 = vsel %vm487, %v596, 0
    %v604 = vsel %vm487, %v599, 0
    %606 = vmatprep.subr.bf16.mxu0 0
    %607 = vmatpush1.bf16.xpose.msra.mxu0 %v604
    %608 = vmatprep.subr.bf16.mxu0 0
    %609 = vmatpush1.bf16.xpose.msra.mxu0 0
    %610 = vmatprep.subr.bf16.mxu0 0
    %611 = vmatpush1.bf16.xpose.msra.mxu0 0
    %612 = vmatprep.subr.bf16.mxu0 0
    %613 = vmatpush1.bf16.xpose.msra.mxu0 0
    %614 = vmatprep.subr.bf16.mxu0 0
    %615 = vmatpush1.bf16.xpose.msra.mxu0 0
    %616 = vmatprep.subr.bf16.mxu0 0
    %617 = vmatpush1.bf16.xpose.msra.mxu0 0
    %618 = vmatprep.subr.bf16.mxu0 0
    %619 = vmatpush1.bf16.xpose.msra.mxu0 0
    %620 = vmatprep.subr.bf16.mxu0 0
    %621 = vmatpush1.bf16.xpose.msra.mxu0 0
    %622 = vmatprep.subr.bf16.mxu0 0
    %623 = vmatpush1.bf16.xpose.msra.mxu0 0
    %624 = vmatprep.subr.bf16.mxu0 0
    %625 = vmatpush1.bf16.xpose.msra.mxu0 0
    %626 = vmatprep.subr.bf16.mxu0 0
    %627 = vmatpush1.bf16.xpose.msra.mxu0 0
    %628 = vmatprep.subr.bf16.mxu0 0
    %629 = vmatpush1.bf16.xpose.msra.mxu0 0
    %630 = vmatprep.subr.bf16.mxu0 0
    %631 = vmatpush1.bf16.xpose.msra.mxu0 0
    %632 = vmatprep.subr.bf16.mxu0 0
    %633 = vmatpush1.bf16.xpose.msra.mxu0 0
    %634 = vmatprep.subr.bf16.mxu0 0
    %635 = vmatpush1.bf16.xpose.msra.mxu0 0
    %636 = vmatprep.subr.bf16.mxu0 0
    %637 = vmatpush1.bf16.xpose.msra.mxu0 0
    %638 = vmatprep.mubr.bf16.mxu0 0
    %639 = vmatmul.mubr.bf16.gmra.mrb[0].mxu0 %v601
    %v640 = vpop.f32.mrb[0].mxu0
    %v641 = vadd.f32 0.0, %v640
    %v642 = vpop.f32.mrb[0].mxu0
    %v643 = vpop.f32.mrb[0].mxu0
    %v644 = vpop.f32.mrb[0].mxu0
    %645 = vdwg.mxu0
    %v646 = vsel %vm534, %v641, -inf
    %647 = vmax.xlane.f32.xlu0 %v646
    %v648 = vpop.xlane.xlu0 %647
    %v649 = vsub.f32 %v641, %v648
    %v650 = vmul.f32 %v649, 1.442695
    %v651 = vpow.pop %v650
    %v652 = vsel %vm534, %v651, 0.0
    %653 = vadd.xlane.f32.xlu0 %v652
    %v654 = vpop.xlane.xlu0 %653
    %v655 = vrcp.pop %v654
    %v656 = vmul.f32 %v651, %v655
    %v657 = vpack.c.bf16 %v656, %v656
    %659 = vrot.lane.b32.xlu0 %v486, 96
    %v660 = vpop.permute.xlu0 %659
    %v662 = vsel %vm534, %v657, 0
    %v665 = vsel %vm550, %v660, 0
    %667 = vmatprep.subr.bf16.mxu0 0
    %668 = vmatpush1.bf16.msra.mxu0 %v665
    %669 = vmatprep.subr.bf16.mxu0 0
    %670 = vmatpush1.bf16.msra.mxu0 0
    %671 = vmatprep.subr.bf16.mxu0 0
    %672 = vmatpush1.bf16.msra.mxu0 0
    %673 = vmatprep.subr.bf16.mxu0 0
    %674 = vmatpush1.bf16.msra.mxu0 0
    %675 = vmatprep.subr.bf16.mxu0 0
    %676 = vmatpush1.bf16.msra.mxu0 0
    %677 = vmatprep.subr.bf16.mxu0 0
    %678 = vmatpush1.bf16.msra.mxu0 0
    %679 = vmatprep.subr.bf16.mxu0 0
    %680 = vmatpush1.bf16.msra.mxu0 0
    %681 = vmatprep.subr.bf16.mxu0 0
    %682 = vmatpush1.bf16.msra.mxu0 0
    %683 = vmatprep.subr.bf16.mxu0 0
    %684 = vmatpush1.bf16.msra.mxu0 0
    %685 = vmatprep.subr.bf16.mxu0 0
    %686 = vmatpush1.bf16.msra.mxu0 0
    %687 = vmatprep.subr.bf16.mxu0 0
    %688 = vmatpush1.bf16.msra.mxu0 0
    %689 = vmatprep.subr.bf16.mxu0 0
    %690 = vmatpush1.bf16.msra.mxu0 0
    %691 = vmatprep.subr.bf16.mxu0 0
    %692 = vmatpush1.bf16.msra.mxu0 0
    %693 = vmatprep.subr.bf16.mxu0 0
    %694 = vmatpush1.bf16.msra.mxu0 0
    %695 = vmatprep.subr.bf16.mxu0 0
    %696 = vmatpush1.bf16.msra.mxu0 0
    %697 = vmatprep.subr.bf16.mxu0 0
    %698 = vmatpush1.bf16.msra.mxu0 0
    %699 = vmatprep.mubr.bf16.mxu0 0
    %700 = vmatmul.mubr.bf16.gmra.mrb[0].mxu0 %v662
    %v701 = vpop.f32.mrb[0].mxu0
    %v702 = vadd.f32 0.0, %v701
    %v703 = vpop.f32.mrb[0].mxu0
    %v704 = vpop.f32.mrb[0].mxu0
    %v705 = vpop.f32.mrb[0].mxu0
    %706 = vdwg.mxu0
    %707 = vrot.lane.b32.xlu0 %v484, 64
    %v708 = vpop.permute.xlu0 %707
    %709 = vrot.lane.b32.xlu0 %v485, 64
    %v710 = vpop.permute.xlu0 %709
    %v712 = vsel %vm487, %v708, 0
    %v715 = vsel %vm487, %v710, 0
    %717 = vmatprep.subr.bf16.mxu0 0
    %718 = vmatpush1.bf16.xpose.msra.mxu0 %v715
    %719 = vmatprep.subr.bf16.mxu0 0
    %720 = vmatpush1.bf16.xpose.msra.mxu0 0
    %721 = vmatprep.subr.bf16.mxu0 0
    %722 = vmatpush1.bf16.xpose.msra.mxu0 0
    %723 = vmatprep.subr.bf16.mxu0 0
    %724 = vmatpush1.bf16.xpose.msra.mxu0 0
    %725 = vmatprep.subr.bf16.mxu0 0
    %726 = vmatpush1.bf16.xpose.msra.mxu0 0
    %727 = vmatprep.subr.bf16.mxu0 0
    %728 = vmatpush1.bf16.xpose.msra.mxu0 0
    %729 = vmatprep.subr.bf16.mxu0 0
    %730 = vmatpush1.bf16.xpose.msra.mxu0 0
    %731 = vmatprep.subr.bf16.mxu0 0
    %732 = vmatpush1.bf16.xpose.msra.mxu0 0
    %733 = vmatprep.subr.bf16.mxu0 0
    %734 = vmatpush1.bf16.xpose.msra.mxu0 0
    %735 = vmatprep.subr.bf16.mxu0 0
    %736 = vmatpush1.bf16.xpose.msra.mxu0 0
    %737 = vmatprep.subr.bf16.mxu0 0
    %738 = vmatpush1.bf16.xpose.msra.mxu0 0
    %739 = vmatprep.subr.bf16.mxu0 0
    %740 = vmatpush1.bf16.xpose.msra.mxu0 0
    %741 = vmatprep.subr.bf16.mxu0 0
    %742 = vmatpush1.bf16.xpose.msra.mxu0 0
    %743 = vmatprep.subr.bf16.mxu0 0
    %744 = vmatpush1.bf16.xpose.msra.mxu0 0
    %745 = vmatprep.subr.bf16.mxu0 0
    %746 = vmatpush1.bf16.xpose.msra.mxu0 0
    %747 = vmatprep.subr.bf16.mxu0 0
    %748 = vmatpush1.bf16.xpose.msra.mxu0 0
    %749 = vmatprep.mubr.bf16.mxu0 0
    %750 = vmatmul.mubr.bf16.gmra.mrb[0].mxu0 %v712
    %v751 = vpop.f32.mrb[0].mxu0
    %v752 = vadd.f32 0.0, %v751
    %v753 = vpop.f32.mrb[0].mxu0
    %v754 = vpop.f32.mrb[0].mxu0
    %v755 = vpop.f32.mrb[0].mxu0
    %756 = vdwg.mxu0
    %v757 = vsel %vm534, %v752, -inf
    %758 = vmax.xlane.f32.xlu0 %v757
    %v759 = vpop.xlane.xlu0 %758
    %v760 = vsub.f32 %v752, %v759
    %v761 = vmul.f32 %v760, 1.442695
    %v762 = vpow.pop %v761
    %v763 = vsel %vm534, %v762, 0.0
    %764 = vadd.xlane.f32.xlu0 %v763
    %v765 = vpop.xlane.xlu0 %764
    %v766 = vrcp.pop %v765
    %v767 = vmul.f32 %v762, %v766
    %v768 = vpack.c.bf16 %v767, %v767
    %769 = vrot.lane.b32.xlu0 %v486, 64
    %v770 = vpop.permute.xlu0 %769
    %v772 = vsel %vm534, %v768, 0
    %v775 = vsel %vm550, %v770, 0
    %777 = vmatprep.subr.bf16.mxu0 0
    %778 = vmatpush1.bf16.msra.mxu0 %v775
    %779 = vmatprep.subr.bf16.mxu0 0
    %780 = vmatpush1.bf16.msra.mxu0 0
    %781 = vmatprep.subr.bf16.mxu0 0
    %782 = vmatpush1.bf16.msra.mxu0 0
    %783 = vmatprep.subr.bf16.mxu0 0
    %784 = vmatpush1.bf16.msra.mxu0 0
    %785 = vmatprep.subr.bf16.mxu0 0
    %786 = vmatpush1.bf16.msra.mxu0 0
    %787 = vmatprep.subr.bf16.mxu0 0
    %788 = vmatpush1.bf16.msra.mxu0 0
    %789 = vmatprep.subr.bf16.mxu0 0
    %790 = vmatpush1.bf16.msra.mxu0 0
    %791 = vmatprep.subr.bf16.mxu0 0
    %792 = vmatpush1.bf16.msra.mxu0 0
    %793 = vmatprep.subr.bf16.mxu0 0
    %794 = vmatpush1.bf16.msra.mxu0 0
    %795 = vmatprep.subr.bf16.mxu0 0
    %796 = vmatpush1.bf16.msra.mxu0 0
    %797 = vmatprep.subr.bf16.mxu0 0
    %798 = vmatpush1.bf16.msra.mxu0 0
    %799 = vmatprep.subr.bf16.mxu0 0
    %800 = vmatpush1.bf16.msra.mxu0 0
    %801 = vmatprep.subr.bf16.mxu0 0
    %802 = vmatpush1.bf16.msra.mxu0 0
    %803 = vmatprep.subr.bf16.mxu0 0
    %804 = vmatpush1.bf16.msra.mxu0 0
    %805 = vmatprep.subr.bf16.mxu0 0
    %806 = vmatpush1.bf16.msra.mxu0 0
    %807 = vmatprep.subr.bf16.mxu0 0
    %808 = vmatpush1.bf16.msra.mxu0 0
    %809 = vmatprep.mubr.bf16.mxu0 0
    %810 = vmatmul.mubr.bf16.gmra.mrb[0].mxu0 %v772
    %v811 = vpop.f32.mrb[0].mxu0
    %v812 = vadd.f32 0.0, %v811
    %v813 = vpop.f32.mrb[0].mxu0
    %v814 = vpop.f32.mrb[0].mxu0
    %v815 = vpop.f32.mrb[0].mxu0
    %816 = vdwg.mxu0
    %817 = vrot.lane.b32.xlu0 %v484, 32
    %v818 = vpop.permute.xlu0 %817
    %819 = vrot.lane.b32.xlu0 %v485, 32
    %v820 = vpop.permute.xlu0 %819
    %v822 = vsel %vm487, %v818, 0
    %v825 = vsel %vm487, %v820, 0
    %827 = vmatprep.subr.bf16.mxu0 0
    %828 = vmatpush1.bf16.xpose.msra.mxu0 %v825
    %829 = vmatprep.subr.bf16.mxu0 0
    %830 = vmatpush1.bf16.xpose.msra.mxu0 0
    %831 = vmatprep.subr.bf16.mxu0 0
    %832 = vmatpush1.bf16.xpose.msra.mxu0 0
    %833 = vmatprep.subr.bf16.mxu0 0
    %834 = vmatpush1.bf16.xpose.msra.mxu0 0
    %835 = vmatprep.subr.bf16.mxu0 0
    %836 = vmatpush1.bf16.xpose.msra.mxu0 0
    %837 = vmatprep.subr.bf16.mxu0 0
    %838 = vmatpush1.bf16.xpose.msra.mxu0 0
    %839 = vmatprep.subr.bf16.mxu0 0
    %840 = vmatpush1.bf16.xpose.msra.mxu0 0
    %841 = vmatprep.subr.bf16.mxu0 0
    %842 = vmatpush1.bf16.xpose.msra.mxu0 0
    %843 = vmatprep.subr.bf16.mxu0 0
    %844 = vmatpush1.bf16.xpose.msra.mxu0 0
    %845 = vmatprep.subr.bf16.mxu0 0
    %846 = vmatpush1.bf16.xpose.msra.mxu0 0
    %847 = vmatprep.subr.bf16.mxu0 0
    %848 = vmatpush1.bf16.xpose.msra.mxu0 0
    %849 = vmatprep.subr.bf16.mxu0 0
    %850 = vmatpush1.bf16.xpose.msra.mxu0 0
    %851 = vmatprep.subr.bf16.mxu0 0
    %852 = vmatpush1.bf16.xpose.msra.mxu0 0
    %853 = vmatprep.subr.bf16.mxu0 0
    %854 = vmatpush1.bf16.xpose.msra.mxu0 0
    %855 = vmatprep.subr.bf16.mxu0 0
    %856 = vmatpush1.bf16.xpose.msra.mxu0 0
    %857 = vmatprep.subr.bf16.mxu0 0
    %858 = vmatpush1.bf16.xpose.msra.mxu0 0
    %859 = vmatprep.mubr.bf16.mxu0 0
    %860 = vmatmul.mubr.bf16.gmra.mrb[0].mxu0 %v822
    %v861 = vpop.f32.mrb[0].mxu0
    %v862 = vadd.f32 0.0, %v861
    %v863 = vpop.f32.mrb[0].mxu0
    %v864 = vpop.f32.mrb[0].mxu0
    %v865 = vpop.f32.mrb[0].mxu0
    %866 = vdwg.mxu0
    %v867 = vsel %vm534, %v862, -inf
    %868 = vmax.xlane.f32.xlu0 %v867
    %v869 = vpop.xlane.xlu0 %868
    %v870 = vsub.f32 %v862, %v869
    %v871 = vmul.f32 %v870, 1.442695
    %v872 = vpow.pop %v871
    %v873 = vsel %vm534, %v872, 0.0
    %874 = vadd.xlane.f32.xlu0 %v873
    %v875 = vpop.xlane.xlu0 %874
    %v876 = vrcp.pop %v875
    %v877 = vmul.f32 %v872, %v876
    %v878 = vpack.c.bf16 %v877, %v877
    %879 = vrot.lane.b32.xlu0 %v486, 32
    %v880 = vpop.permute.xlu0 %879
    %v882 = vsel %vm534, %v878, 0
    %v885 = vsel %vm550, %v880, 0
    %887 = vmatprep.subr.bf16.mxu0 0
    %888 = vmatpush1.bf16.msra.mxu0 %v885
    %889 = vmatprep.subr.bf16.mxu0 0
    %890 = vmatpush1.bf16.msra.mxu0 0
    %891 = vmatprep.subr.bf16.mxu0 0
    %892 = vmatpush1.bf16.msra.mxu0 0
    %893 = vmatprep.subr.bf16.mxu0 0
    %894 = vmatpush1.bf16.msra.mxu0 0
    %895 = vmatprep.subr.bf16.mxu0 0
    %896 = vmatpush1.bf16.msra.mxu0 0
    %897 = vmatprep.subr.bf16.mxu0 0
    %898 = vmatpush1.bf16.msra.mxu0 0
    %899 = vmatprep.subr.bf16.mxu0 0
    %900 = vmatpush1.bf16.msra.mxu0 0
    %901 = vmatprep.subr.bf16.mxu0 0
    %902 = vmatpush1.bf16.msra.mxu0 0
    %903 = vmatprep.subr.bf16.mxu0 0
    %904 = vmatpush1.bf16.msra.mxu0 0
    %905 = vmatprep.subr.bf16.mxu0 0
    %906 = vmatpush1.bf16.msra.mxu0 0
    %907 = vmatprep.subr.bf16.mxu0 0
    %908 = vmatpush1.bf16.msra.mxu0 0
    %909 = vmatprep.subr.bf16.mxu0 0
    %910 = vmatpush1.bf16.msra.mxu0 0
    %911 = vmatprep.subr.bf16.mxu0 0
    %912 = vmatpush1.bf16.msra.mxu0 0
    %913 = vmatprep.subr.bf16.mxu0 0
    %914 = vmatpush1.bf16.msra.mxu0 0
    %915 = vmatprep.subr.bf16.mxu0 0
    %916 = vmatpush1.bf16.msra.mxu0 0
    %917 = vmatprep.subr.bf16.mxu0 0
    %918 = vmatpush1.bf16.msra.mxu0 0
    %919 = vmatprep.mubr.bf16.mxu0 0
    %920 = vmatmul.mubr.bf16.gmra.mrb[0].mxu0 %v882
    %v921 = vpop.f32.mrb[0].mxu0
    %v922 = vadd.f32 0.0, %v921
    %v923 = vpop.f32.mrb[0].mxu0
    %v924 = vpop.f32.mrb[0].mxu0
    %v925 = vpop.f32.mrb[0].mxu0
    %926 = vdwg.mxu0
    %928 = vrot.lane.b32.xlu0 %v702, 32
    %v929 = vpop.permute.xlu0 %928
    %932 = vrot.lane.b32.xlu0 %v812, 64
    %v933 = vpop.permute.xlu0 %932
    %936 = vrot.lane.b32.xlu0 %v922, 96
    %v937 = vpop.permute.xlu0 %936
    %v939 = vsel %vm487, %v589, %v929
    %vm940 = vcmask 523264
    %v941 = vsel %vm940, %v939, %v933
    %vm942 = vcmask 785408
    %v943 = vsel %vm942, %v941, %v937
    %v944 = vrot.slane %v484, 4
    %v945 = vrot.slane %v485, 4
    %v947 = vsel %vm487, %v944, 0
    %v950 = vsel %vm487, %v945, 0
    %952 = vmatprep.subr.bf16.mxu0 0
    %953 = vmatpush1.bf16.xpose.msra.mxu0 %v950
    %954 = vmatprep.subr.bf16.mxu0 0
    %955 = vmatpush1.bf16.xpose.msra.mxu0 0
    %956 = vmatprep.subr.bf16.mxu0 0
    %957 = vmatpush1.bf16.xpose.msra.mxu0 0
    %958 = vmatprep.subr.bf16.mxu0 0
    %959 = vmatpush1.bf16.xpose.msra.mxu0 0
    %960 = vmatprep.subr.bf16.mxu0 0
    %961 = vmatpush1.bf16.xpose.msra.mxu0 0
    %962 = vmatprep.subr.bf16.mxu0 0
    %963 = vmatpush1.bf16.xpose.msra.mxu0 0
    %964 = vmatprep.subr.bf16.mxu0 0
    %965 = vmatpush1.bf16.xpose.msra.mxu0 0
    %966 = vmatprep.subr.bf16.mxu0 0
    %967 = vmatpush1.bf16.xpose.msra.mxu0 0
    %968 = vmatprep.subr.bf16.mxu0 0
    %969 = vmatpush1.bf16.xpose.msra.mxu0 0
    %970 = vmatprep.subr.bf16.mxu0 0
    %971 = vmatpush1.bf16.xpose.msra.mxu0 0
    %972 = vmatprep.subr.bf16.mxu0 0
    %973 = vmatpush1.bf16.xpose.msra.mxu0 0
    %974 = vmatprep.subr.bf16.mxu0 0
    %975 = vmatpush1.bf16.xpose.msra.mxu0 0
    %976 = vmatprep.subr.bf16.mxu0 0
    %977 = vmatpush1.bf16.xpose.msra.mxu0 0
    %978 = vmatprep.subr.bf16.mxu0 0
    %979 = vmatpush1.bf16.xpose.msra.mxu0 0
    %980 = vmatprep.subr.bf16.mxu0 0
    %981 = vmatpush1.bf16.xpose.msra.mxu0 0
    %982 = vmatprep.subr.bf16.mxu0 0
    %983 = vmatpush1.bf16.xpose.msra.mxu0 0
    %984 = vmatprep.mubr.bf16.mxu0 0
    %985 = vmatmul.mubr.bf16.gmra.mrb[0].mxu0 %v947
    %v986 = vpop.f32.mrb[0].mxu0
    %v987 = vadd.f32 0.0, %v986
    %v988 = vpop.f32.mrb[0].mxu0
    %v989 = vpop.f32.mrb[0].mxu0
    %v990 = vpop.f32.mrb[0].mxu0
    %991 = vdwg.mxu0
    %v992 = vsel %vm534, %v987, -inf
    %993 = vmax.xlane.f32.xlu0 %v992
    %v994 = vpop.xlane.xlu0 %993
    %v995 = vsub.f32 %v987, %v994
    %v996 = vmul.f32 %v995, 1.442695
    %v997 = vpow.pop %v996
    %v998 = vsel %vm534, %v997, 0.0
    %999 = vadd.xlane.f32.xlu0 %v998
    %v1000 = vpop.xlane.xlu0 %999
    %v1001 = vrcp.pop %v1000
    %v1002 = vmul.f32 %v997, %v1001
    %v1003 = vpack.c.bf16 %v1002, %v1002
    %v1004 = vrot.slane %v486, 4
    %v1006 = vsel %vm534, %v1003, 0
    %v1009 = vsel %vm550, %v1004, 0
    %1011 = vmatprep.subr.bf16.mxu0 0
    %1012 = vmatpush1.bf16.msra.mxu0 %v1009
    %1013 = vmatprep.subr.bf16.mxu0 0
    %1014 = vmatpush1.bf16.msra.mxu0 0
    %1015 = vmatprep.subr.bf16.mxu0 0
    %1016 = vmatpush1.bf16.msra.mxu0 0
    %1017 = vmatprep.subr.bf16.mxu0 0
    %1018 = vmatpush1.bf16.msra.mxu0 0
    %1019 = vmatprep.subr.bf16.mxu0 0
    %1020 = vmatpush1.bf16.msra.mxu0 0
    %1021 = vmatprep.subr.bf16.mxu0 0
    %1022 = vmatpush1.bf16.msra.mxu0 0
    %1023 = vmatprep.subr.bf16.mxu0 0
    %1024 = vmatpush1.bf16.msra.mxu0 0
    %1025 = vmatprep.subr.bf16.mxu0 0
    %1026 = vmatpush1.bf16.msra.mxu0 0
    %1027 = vmatprep.subr.bf16.mxu0 0
    %1028 = vmatpush1.bf16.msra.mxu0 0
    %1029 = vmatprep.subr.bf16.mxu0 0
    %1030 = vmatpush1.bf16.msra.mxu0 0
    %1031 = vmatprep.subr.bf16.mxu0 0
    %1032 = vmatpush1.bf16.msra.mxu0 0
    %1033 = vmatprep.subr.bf16.mxu0 0
    %1034 = vmatpush1.bf16.msra.mxu0 0
    %1035 = vmatprep.subr.bf16.mxu0 0
    %1036 = vmatpush1.bf16.msra.mxu0 0
    %1037 = vmatprep.subr.bf16.mxu0 0
    %1038 = vmatpush1.bf16.msra.mxu0 0
    %1039 = vmatprep.subr.bf16.mxu0 0
    %1040 = vmatpush1.bf16.msra.mxu0 0
    %1041 = vmatprep.subr.bf16.mxu0 0
    %1042 = vmatpush1.bf16.msra.mxu0 0
    %1043 = vmatprep.mubr.bf16.mxu0 0
    %1044 = vmatmul.mubr.bf16.gmra.mrb[0].mxu0 %v1006
    %v1045 = vpop.f32.mrb[0].mxu0
    %v1046 = vadd.f32 0.0, %v1045
    %v1047 = vpop.f32.mrb[0].mxu0
    %v1048 = vpop.f32.mrb[0].mxu0
    %v1049 = vpop.f32.mrb[0].mxu0
    %1050 = vdwg.mxu0
    %1051 = vrot.lane.b32.xlu0 %v944, 96
    %v1052 = vpop.permute.xlu0 %1051
    %1053 = vrot.lane.b32.xlu0 %v945, 96
    %v1054 = vpop.permute.xlu0 %1053
    %v1056 = vsel %vm487, %v1052, 0
    %v1059 = vsel %vm487, %v1054, 0
    %1061 = vmatprep.subr.bf16.mxu0 0
    %1062 = vmatpush1.bf16.xpose.msra.mxu0 %v1059
    %1063 = vmatprep.subr.bf16.mxu0 0
    %1064 = vmatpush1.bf16.xpose.msra.mxu0 0
    %1065 = vmatprep.subr.bf16.mxu0 0
    %1066 = vmatpush1.bf16.xpose.msra.mxu0 0
    %1067 = vmatprep.subr.bf16.mxu0 0
    %1068 = vmatpush1.bf16.xpose.msra.mxu0 0
    %1069 = vmatprep.subr.bf16.mxu0 0
    %1070 = vmatpush1.bf16.xpose.msra.mxu0 0
    %1071 = vmatprep.subr.bf16.mxu0 0
    %1072 = vmatpush1.bf16.xpose.msra.mxu0 0
    %1073 = vmatprep.subr.bf16.mxu0 0
    %1074 = vmatpush1.bf16.xpose.msra.mxu0 0
    %1075 = vmatprep.subr.bf16.mxu0 0
    %1076 = vmatpush1.bf16.xpose.msra.mxu0 0
    %1077 = vmatprep.subr.bf16.mxu0 0
    %1078 = vmatpush1.bf16.xpose.msra.mxu0 0
    %1079 = vmatprep.subr.bf16.mxu0 0
    %1080 = vmatpush1.bf16.xpose.msra.mxu0 0
    %1081 = vmatprep.subr.bf16.mxu0 0
    %1082 = vmatpush1.bf16.xpose.msra.mxu0 0
    %1083 = vmatprep.subr.bf16.mxu0 0
    %1084 = vmatpush1.bf16.xpose.msra.mxu0 0
    %1085 = vmatprep.subr.bf16.mxu0 0
    %1086 = vmatpush1.bf16.xpose.msra.mxu0 0
    %1087 = vmatprep.subr.bf16.mxu0 0
    %1088 = vmatpush1.bf16.xpose.msra.mxu0 0
    %1089 = vmatprep.subr.bf16.mxu0 0
    %1090 = vmatpush1.bf16.xpose.msra.mxu0 0
    %1091 = vmatprep.subr.bf16.mxu0 0
    %1092 = vmatpush1.bf16.xpose.msra.mxu0 0
    %1093 = vmatprep.mubr.bf16.mxu0 0
    %1094 = vmatmul.mubr.bf16.gmra.mrb[0].mxu0 %v1056
    %v1095 = vpop.f32.mrb[0].mxu0
    %v1096 = vadd.f32 0.0, %v1095
    %v1097 = vpop.f32.mrb[0].mxu0
    %v1098 = vpop.f32.mrb[0].mxu0
    %v1099 = vpop.f32.mrb[0].mxu0
    %1100 = vdwg.mxu0
    %v1101 = vsel %vm534, %v1096, -inf
    %1102 = vmax.xlane.f32.xlu0 %v1101
    %v1103 = vpop.xlane.xlu0 %1102
    %v1104 = vsub.f32 %v1096, %v1103
    %v1105 = vmul.f32 %v1104, 1.442695
    %v1106 = vpow.pop %v1105
    %v1107 = vsel %vm534, %v1106, 0.0
    %1108 = vadd.xlane.f32.xlu0 %v1107
    %v1109 = vpop.xlane.xlu0 %1108
    %v1110 = vrcp.pop %v1109
    %v1111 = vmul.f32 %v1106, %v1110
    %v1112 = vpack.c.bf16 %v1111, %v1111
    %1113 = vrot.lane.b32.xlu0 %v1004, 96
    %v1114 = vpop.permute.xlu0 %1113
    %v1116 = vsel %vm534, %v1112, 0
    %v1119 = vsel %vm550, %v1114, 0
    %1121 = vmatprep.subr.bf16.mxu0 0
    %1122 = vmatpush1.bf16.msra.mxu0 %v1119
    %1123 = vmatprep.subr.bf16.mxu0 0
    %1124 = vmatpush1.bf16.msra.mxu0 0
    %1125 = vmatprep.subr.bf16.mxu0 0
    %1126 = vmatpush1.bf16.msra.mxu0 0
    %1127 = vmatprep.subr.bf16.mxu0 0
    %1128 = vmatpush1.bf16.msra.mxu0 0
    %1129 = vmatprep.subr.bf16.mxu0 0
    %1130 = vmatpush1.bf16.msra.mxu0 0
    %1131 = vmatprep.subr.bf16.mxu0 0
    %1132 = vmatpush1.bf16.msra.mxu0 0
    %1133 = vmatprep.subr.bf16.mxu0 0
    %1134 = vmatpush1.bf16.msra.mxu0 0
    %1135 = vmatprep.subr.bf16.mxu0 0
    %1136 = vmatpush1.bf16.msra.mxu0 0
    %1137 = vmatprep.subr.bf16.mxu0 0
    %1138 = vmatpush1.bf16.msra.mxu0 0
    %1139 = vmatprep.subr.bf16.mxu0 0
    %1140 = vmatpush1.bf16.msra.mxu0 0
    %1141 = vmatprep.subr.bf16.mxu0 0
    %1142 = vmatpush1.bf16.msra.mxu0 0
    %1143 = vmatprep.subr.bf16.mxu0 0
    %1144 = vmatpush1.bf16.msra.mxu0 0
    %1145 = vmatprep.subr.bf16.mxu0 0
    %1146 = vmatpush1.bf16.msra.mxu0 0
    %1147 = vmatprep.subr.bf16.mxu0 0
    %1148 = vmatpush1.bf16.msra.mxu0 0
    %1149 = vmatprep.subr.bf16.mxu0 0
    %1150 = vmatpush1.bf16.msra.mxu0 0
    %1151 = vmatprep.subr.bf16.mxu0 0
    %1152 = vmatpush1.bf16.msra.mxu0 0
    %1153 = vmatprep.mubr.bf16.mxu0 0
    %1154 = vmatmul.mubr.bf16.gmra.mrb[0].mxu0 %v1116
    %v1155 = vpop.f32.mrb[0].mxu0
    %v1156 = vadd.f32 0.0, %v1155
    %v1157 = vpop.f32.mrb[0].mxu0
    %v1158 = vpop.f32.mrb[0].mxu0
    %v1159 = vpop.f32.mrb[0].mxu0
    %1160 = vdwg.mxu0
    %1161 = vrot.lane.b32.xlu0 %v944, 64
    %v1162 = vpop.permute.xlu0 %1161
    %1163 = vrot.lane.b32.xlu0 %v945, 64
    %v1164 = vpop.permute.xlu0 %1163
    %v1166 = vsel %vm487, %v1162, 0
    %v1169 = vsel %vm487, %v1164, 0
    %1171 = vmatprep.subr.bf16.mxu0 0
    %1172 = vmatpush1.bf16.xpose.msra.mxu0 %v1169
    %1173 = vmatprep.subr.bf16.mxu0 0
    %1174 = vmatpush1.bf16.xpose.msra.mxu0 0
    %1175 = vmatprep.subr.bf16.mxu0 0
    %1176 = vmatpush1.bf16.xpose.msra.mxu0 0
    %1177 = vmatprep.subr.bf16.mxu0 0
    %1178 = vmatpush1.bf16.xpose.msra.mxu0 0
    %1179 = vmatprep.subr.bf16.mxu0 0
    %1180 = vmatpush1.bf16.xpose.msra.mxu0 0
    %1181 = vmatprep.subr.bf16.mxu0 0
    %1182 = vmatpush1.bf16.xpose.msra.mxu0 0
    %1183 = vmatprep.subr.bf16.mxu0 0
    %1184 = vmatpush1.bf16.xpose.msra.mxu0 0
    %1185 = vmatprep.subr.bf16.mxu0 0
    %1186 = vmatpush1.bf16.xpose.msra.mxu0 0
    %1187 = vmatprep.subr.bf16.mxu0 0
    %1188 = vmatpush1.bf16.xpose.msra.mxu0 0
    %1189 = vmatprep.subr.bf16.mxu0 0
    %1190 = vmatpush1.bf16.xpose.msra.mxu0 0
    %1191 = vmatprep.subr.bf16.mxu0 0
    %1192 = vmatpush1.bf16.xpose.msra.mxu0 0
    %1193 = vmatprep.subr.bf16.mxu0 0
    %1194 = vmatpush1.bf16.xpose.msra.mxu0 0
    %1195 = vmatprep.subr.bf16.mxu0 0
    %1196 = vmatpush1.bf16.xpose.msra.mxu0 0
    %1197 = vmatprep.subr.bf16.mxu0 0
    %1198 = vmatpush1.bf16.xpose.msra.mxu0 0
    %1199 = vmatprep.subr.bf16.mxu0 0
    %1200 = vmatpush1.bf16.xpose.msra.mxu0 0
    %1201 = vmatprep.subr.bf16.mxu0 0
    %1202 = vmatpush1.bf16.xpose.msra.mxu0 0
    %1203 = vmatprep.mubr.bf16.mxu0 0
    %1204 = vmatmul.mubr.bf16.gmra.mrb[0].mxu0 %v1166
    %v1205 = vpop.f32.mrb[0].mxu0
    %v1206 = vadd.f32 0.0, %v1205
    %v1207 = vpop.f32.mrb[0].mxu0
    %v1208 = vpop.f32.mrb[0].mxu0
    %v1209 = vpop.f32.mrb[0].mxu0
    %1210 = vdwg.mxu0
    %v1211 = vsel %vm534, %v1206, -inf
    %1212 = vmax.xlane.f32.xlu0 %v1211
    %v1213 = vpop.xlane.xlu0 %1212
    %v1214 = vsub.f32 %v1206, %v1213
    %v1215 = vmul.f32 %v1214, 1.442695
    %v1216 = vpow.pop %v1215
    %v1217 = vsel %vm534, %v1216, 0.0
    %1218 = vadd.xlane.f32.xlu0 %v1217
    %v1219 = vpop.xlane.xlu0 %1218
    %v1220 = vrcp.pop %v1219
    %v1221 = vmul.f32 %v1216, %v1220
    %v1222 = vpack.c.bf16 %v1221, %v1221
    %1223 = vrot.lane.b32.xlu0 %v1004, 64
    %v1224 = vpop.permute.xlu0 %1223
    %v1226 = vsel %vm534, %v1222, 0
    %v1229 = vsel %vm550, %v1224, 0
    %1231 = vmatprep.subr.bf16.mxu0 0
    %1232 = vmatpush1.bf16.msra.mxu0 %v1229
    %1233 = vmatprep.subr.bf16.mxu0 0
    %1234 = vmatpush1.bf16.msra.mxu0 0
    %1235 = vmatprep.subr.bf16.mxu0 0
    %1236 = vmatpush1.bf16.msra.mxu0 0
    %1237 = vmatprep.subr.bf16.mxu0 0
    %1238 = vmatpush1.bf16.msra.mxu0 0
    %1239 = vmatprep.subr.bf16.mxu0 0
    %1240 = vmatpush1.bf16.msra.mxu0 0
    %1241 = vmatprep.subr.bf16.mxu0 0
    %1242 = vmatpush1.bf16.msra.mxu0 0
    %1243 = vmatprep.subr.bf16.mxu0 0
    %1244 = vmatpush1.bf16.msra.mxu0 0
    %1245 = vmatprep.subr.bf16.mxu0 0
    %1246 = vmatpush1.bf16.msra.mxu0 0
    %1247 = vmatprep.subr.bf16.mxu0 0
    %1248 = vmatpush1.bf16.msra.mxu0 0
    %1249 = vmatprep.subr.bf16.mxu0 0
    %1250 = vmatpush1.bf16.msra.mxu0 0
    %1251 = vmatprep.subr.bf16.mxu0 0
    %1252 = vmatpush1.bf16.msra.mxu0 0
    %1253 = vmatprep.subr.bf16.mxu0 0
    %1254 = vmatpush1.bf16.msra.mxu0 0
    %1255 = vmatprep.subr.bf16.mxu0 0
    %1256 = vmatpush1.bf16.msra.mxu0 0
    %1257 = vmatprep.subr.bf16.mxu0 0
    %1258 = vmatpush1.bf16.msra.mxu0 0
    %1259 = vmatprep.subr.bf16.mxu0 0
    %1260 = vmatpush1.bf16.msra.mxu0 0
    %1261 = vmatprep.subr.bf16.mxu0 0
    %1262 = vmatpush1.bf16.msra.mxu0 0
    %1263 = vmatprep.mubr.bf16.mxu0 0
    %1264 = vmatmul.mubr.bf16.gmra.mrb[0].mxu0 %v1226
    %v1265 = vpop.f32.mrb[0].mxu0
    %v1266 = vadd.f32 0.0, %v1265
    %v1267 = vpop.f32.mrb[0].mxu0
    %v1268 = vpop.f32.mrb[0].mxu0
    %v1269 = vpop.f32.mrb[0].mxu0
    %1270 = vdwg.mxu0
    %1271 = vrot.lane.b32.xlu0 %v944, 32
    %v1272 = vpop.permute.xlu0 %1271
    %1273 = vrot.lane.b32.xlu0 %v945, 32
    %v1274 = vpop.permute.xlu0 %1273
    %v1276 = vsel %vm487, %v1272, 0
    %v1279 = vsel %vm487, %v1274, 0
    %1281 = vmatprep.subr.bf16.mxu0 0
    %1282 = vmatpush1.bf16.xpose.msra.mxu0 %v1279
    %1283 = vmatprep.subr.bf16.mxu0 0
    %1284 = vmatpush1.bf16.xpose.msra.mxu0 0
    %1285 = vmatprep.subr.bf16.mxu0 0
    %1286 = vmatpush1.bf16.xpose.msra.mxu0 0
    %1287 = vmatprep.subr.bf16.mxu0 0
    %1288 = vmatpush1.bf16.xpose.msra.mxu0 0
    %1289 = vmatprep.subr.bf16.mxu0 0
    %1290 = vmatpush1.bf16.xpose.msra.mxu0 0
    %1291 = vmatprep.subr.bf16.mxu0 0
    %1292 = vmatpush1.bf16.xpose.msra.mxu0 0
    %1293 = vmatprep.subr.bf16.mxu0 0
    %1294 = vmatpush1.bf16.xpose.msra.mxu0 0
    %1295 = vmatprep.subr.bf16.mxu0 0
    %1296 = vmatpush1.bf16.xpose.msra.mxu0 0
    %1297 = vmatprep.subr.bf16.mxu0 0
    %1298 = vmatpush1.bf16.xpose.msra.mxu0 0
    %1299 = vmatprep.subr.bf16.mxu0 0
    %1300 = vmatpush1.bf16.xpose.msra.mxu0 0
    %1301 = vmatprep.subr.bf16.mxu0 0
    %1302 = vmatpush1.bf16.xpose.msra.mxu0 0
    %1303 = vmatprep.subr.bf16.mxu0 0
    %1304 = vmatpush1.bf16.xpose.msra.mxu0 0
    %1305 = vmatprep.subr.bf16.mxu0 0
    %1306 = vmatpush1.bf16.xpose.msra.mxu0 0
    %1307 = vmatprep.subr.bf16.mxu0 0
    %1308 = vmatpush1.bf16.xpose.msra.mxu0 0
    %1309 = vmatprep.subr.bf16.mxu0 0
    %1310 = vmatpush1.bf16.xpose.msra.mxu0 0
    %1311 = vmatprep.subr.bf16.mxu0 0
    %1312 = vmatpush1.bf16.xpose.msra.mxu0 0
    %1313 = vmatprep.mubr.bf16.mxu0 0
    %1314 = vmatmul.mubr.bf16.gmra.mrb[0].mxu0 %v1276
    %v1315 = vpop.f32.mrb[0].mxu0
    %v1316 = vadd.f32 0.0, %v1315
    %v1317 = vpop.f32.mrb[0].mxu0
    %v1318 = vpop.f32.mrb[0].mxu0
    %v1319 = vpop.f32.mrb[0].mxu0
    %1320 = vdwg.mxu0
    %v1321 = vsel %vm534, %v1316, -inf
    %1322 = vmax.xlane.f32.xlu0 %v1321
    %v1323 = vpop.xlane.xlu0 %1322
    %v1324 = vsub.f32 %v1316, %v1323
    %v1325 = vmul.f32 %v1324, 1.442695
    %v1326 = vpow.pop %v1325
    %v1327 = vsel %vm534, %v1326, 0.0
    %1328 = vadd.xlane.f32.xlu0 %v1327
    %v1329 = vpop.xlane.xlu0 %1328
    %v1330 = vrcp.pop %v1329
    %v1331 = vmul.f32 %v1326, %v1330
    %v1332 = vpack.c.bf16 %v1331, %v1331
    %1333 = vrot.lane.b32.xlu0 %v1004, 32
    %v1334 = vpop.permute.xlu0 %1333
    %v1336 = vsel %vm534, %v1332, 0
    %v1339 = vsel %vm550, %v1334, 0
    %1341 = vmatprep.subr.bf16.mxu0 0
    %1342 = vmatpush1.bf16.msra.mxu0 %v1339
    %1343 = vmatprep.subr.bf16.mxu0 0
    %1344 = vmatpush1.bf16.msra.mxu0 0
    %1345 = vmatprep.subr.bf16.mxu0 0
    %1346 = vmatpush1.bf16.msra.mxu0 0
    %1347 = vmatprep.subr.bf16.mxu0 0
    %1348 = vmatpush1.bf16.msra.mxu0 0
    %1349 = vmatprep.subr.bf16.mxu0 0
    %1350 = vmatpush1.bf16.msra.mxu0 0
    %1351 = vmatprep.subr.bf16.mxu0 0
    %1352 = vmatpush1.bf16.msra.mxu0 0
    %1353 = vmatprep.subr.bf16.mxu0 0
    %1354 = vmatpush1.bf16.msra.mxu0 0
    %1355 = vmatprep.subr.bf16.mxu0 0
    %1356 = vmatpush1.bf16.msra.mxu0 0
    %1357 = vmatprep.subr.bf16.mxu0 0
    %1358 = vmatpush1.bf16.msra.mxu0 0
    %1359 = vmatprep.subr.bf16.mxu0 0
    %1360 = vmatpush1.bf16.msra.mxu0 0
    %1361 = vmatprep.subr.bf16.mxu0 0
    %1362 = vmatpush1.bf16.msra.mxu0 0
    %1363 = vmatprep.subr.bf16.mxu0 0
    %1364 = vmatpush1.bf16.msra.mxu0 0
    %1365 = vmatprep.subr.bf16.mxu0 0
    %1366 = vmatpush1.bf16.msra.mxu0 0
    %1367 = vmatprep.subr.bf16.mxu0 0
    %1368 = vmatpush1.bf16.msra.mxu0 0
    %1369 = vmatprep.subr.bf16.mxu0 0
    %1370 = vmatpush1.bf16.msra.mxu0 0
    %1371 = vmatprep.subr.bf16.mxu0 0
    %1372 = vmatpush1.bf16.msra.mxu0 0
    %1373 = vmatprep.mubr.bf16.mxu0 0
    %1374 = vmatmul.mubr.bf16.gmra.mrb[0].mxu0 %v1336
    %v1375 = vpop.f32.mrb[0].mxu0
    %v1376 = vadd.f32 0.0, %v1375
    %v1377 = vpop.f32.mrb[0].mxu0
    %v1378 = vpop.f32.mrb[0].mxu0
    %v1379 = vpop.f32.mrb[0].mxu0
    %1380 = vdwg.mxu0
    %1382 = vrot.lane.b32.xlu0 %v1156, 32
    %v1383 = vpop.permute.xlu0 %1382
    %1386 = vrot.lane.b32.xlu0 %v1266, 64
    %v1387 = vpop.permute.xlu0 %1386
    %1390 = vrot.lane.b32.xlu0 %v1376, 96
    %v1391 = vpop.permute.xlu0 %1390
    %v1393 = vsel %vm487, %v1046, %v1383
    %v1394 = vsel %vm940, %v1393, %v1387
    %v1395 = vsel %vm942, %v1394, %v1391
    %v1396 = vpack.c.bf16 %v1395, %v943
    %v1413 = vunpack.c.l.b16 %v143
    %v1414 = vunpack.c.l.b16 %v144
    %v1415 = vunpack.c.l.b16 %v145
    %v1416 = vunpack.c.l.b16 %v146
    %v1417 = vunpack.c.l.b16 %v147
    %v1418 = vunpack.c.l.b16 %v148
    %v1419 = vunpack.c.l.b16 %v149
    %v1420 = vunpack.c.l.b16 %v150
    %v1421 = vunpack.c.l.b16 %v151
    %v1422 = vunpack.c.l.b16 %v152
    %v1423 = vunpack.c.l.b16 %v153
    %v1424 = vunpack.c.l.b16 %v154
    %v1425 = vunpack.c.l.b16 %v155
    %v1426 = vunpack.c.l.b16 %v156
    %v1427 = vunpack.c.l.b16 %v157
    %v1428 = vunpack.c.l.b16 %v158
    %v1429 = vpack.c.b16 %v1414, %v1413
    %v1430 = vpack.c.b16 %v1416, %v1415
    %v1431 = vpack.c.b16 %v1418, %v1417
    %v1432 = vpack.c.b16 %v1420, %v1419
    %v1433 = vpack.c.b16 %v1422, %v1421
    %v1434 = vpack.c.b16 %v1424, %v1423
    %v1435 = vpack.c.b16 %v1426, %v1425
    %v1436 = vpack.c.b16 %v1428, %v1427
    %1445 = vmatprep.subr.bf16.mxu0 0
    %1446 = vmatpush1.bf16.msra.mxu0 %v1429
    %1447 = vmatprep.subr.bf16.mxu0 0
    %1448 = vmatpush1.bf16.msra.mxu0 %v1430
    %1449 = vmatprep.subr.bf16.mxu0 0
    %1450 = vmatpush1.bf16.msra.mxu0 %v1431
    %1451 = vmatprep.subr.bf16.mxu0 0
    %1452 = vmatpush1.bf16.msra.mxu0 %v1432
    %1453 = vmatprep.subr.bf16.mxu0 0
    %1454 = vmatpush1.bf16.msra.mxu0 %v1433
    %1455 = vmatprep.subr.bf16.mxu0 0
    %1456 = vmatpush1.bf16.msra.mxu0 %v1434
    %1457 = vmatprep.subr.bf16.mxu0 0
    %1458 = vmatpush1.bf16.msra.mxu0 %v1435
    %1459 = vmatprep.subr.bf16.mxu0 0
    %1460 = vmatpush1.bf16.msra.mxu0 %v1436
    %1461 = vmatprep.subr.bf16.mxu0 0
    %1462 = vmatpush1.bf16.msra.mxu0 0
    %1463 = vmatprep.subr.bf16.mxu0 0
    %1464 = vmatpush1.bf16.msra.mxu0 0
    %1465 = vmatprep.subr.bf16.mxu0 0
    %1466 = vmatpush1.bf16.msra.mxu0 0
    %1467 = vmatprep.subr.bf16.mxu0 0
    %1468 = vmatpush1.bf16.msra.mxu0 0
    %1469 = vmatprep.subr.bf16.mxu0 0
    %1470 = vmatpush1.bf16.msra.mxu0 0
    %1471 = vmatprep.subr.bf16.mxu0 0
    %1472 = vmatpush1.bf16.msra.mxu0 0
    %1473 = vmatprep.subr.bf16.mxu0 0
    %1474 = vmatpush1.bf16.msra.mxu0 0
    %1475 = vmatprep.subr.bf16.mxu0 0
    %1476 = vmatpush1.bf16.msra.mxu0 0
    %1477 = vmatprep.mubr.bf16.mxu0 0
    %1478 = vmatmul.mubr.bf16.gmra.mrb[0].mxu0 %v1396
    %v1479 = vpop.f32.mrb[0].mxu0
    %v1480 = vadd.f32 %v224, %v1479
    %v1481 = vpop.f32.mrb[0].mxu0
    %v1482 = vpop.f32.mrb[0].mxu0
    %v1483 = vadd.f32 %v224, %v1482
    %v1484 = vpop.f32.mrb[0].mxu0
    %1485 = vdwg.mxu0
    %v1486 = vadd.f32 %v240, %v1480
    %v1487 = vadd.f32 %v241, %v1483
    %1488 = vadd.xlane.f32.xlu0 %v1486
    %v1489 = vpop.xlane.xlu0 %1488
    %1490 = vadd.xlane.f32.xlu0 %v1487
    %v1491 = vpop.xlane.xlu0 %1490
    %v1492 = vmul.f32 %v1489, %v246
    %v1493 = vmul.f32 %v1491, %v246
    %v1494 = vsub.f32 %v1486, %v1492
    %v1495 = vsub.f32 %v1487, %v1493
    %v1496 = vmul.f32 %v1494, %v1494
    %v1497 = vmul.f32 %v1495, %v1495
    %1498 = vadd.xlane.f32.xlu0 %v1496
    %v1499 = vpop.xlane.xlu0 %1498
    %1500 = vadd.xlane.f32.xlu0 %v1497
    %v1501 = vpop.xlane.xlu0 %1500
    %v1502 = vmul.f32 %v1499, %v246
    %v1503 = vmul.f32 %v1501, %v246
    %v1504 = vadd.f32 %v1502, 1e-05
    %v1505 = vadd.f32 %v1503, 1e-05
    %v1506 = vrsqrt.pop %v1504
    %v1507 = vrsqrt.pop %v1505
    %v1508 = vmul.f32 %v1494, %v1506
    %v1509 = vmul.f32 %v1495, %v1507
    %v1510 = vmul.f32 %v1508, %v210
    %v1511 = vmul.f32 %v1509, %v210
    %v1512 = vadd.f32 %v1510, %v217
    %v1513 = vadd.f32 %v1511, %v217
    %v1514 = vpack.c.bf16 %v1513, %v1512
    %v1531 = vunpack.c.l.b16 %v159
    %v1532 = vunpack.c.l.b16 %v160
    %v1533 = vunpack.c.l.b16 %v161
    %v1534 = vunpack.c.l.b16 %v162
    %v1535 = vunpack.c.l.b16 %v163
    %v1536 = vunpack.c.l.b16 %v164
    %v1537 = vunpack.c.l.b16 %v165
    %v1538 = vunpack.c.l.b16 %v166
    %v1539 = vunpack.c.l.b16 %v167
    %v1540 = vunpack.c.l.b16 %v168
    %v1541 = vunpack.c.l.b16 %v169
    %v1542 = vunpack.c.l.b16 %v170
    %v1543 = vunpack.c.l.b16 %v171
    %v1544 = vunpack.c.l.b16 %v172
    %v1545 = vunpack.c.l.b16 %v173
    %v1546 = vunpack.c.l.b16 %v174
    %v1547 = vpack.c.b16 %v1532, %v1531
    %v1548 = vpack.c.b16 %v1534, %v1533
    %v1549 = vpack.c.b16 %v1536, %v1535
    %v1550 = vpack.c.b16 %v1538, %v1537
    %v1551 = vpack.c.b16 %v1540, %v1539
    %v1552 = vpack.c.b16 %v1542, %v1541
    %v1553 = vpack.c.b16 %v1544, %v1543
    %v1554 = vpack.c.b16 %v1546, %v1545
    %1563 = vmatprep.subr.bf16.mxu0 0
    %1564 = vmatpush1.bf16.msra.mxu0 %v1547
    %1565 = vmatprep.subr.bf16.mxu0 0
    %1566 = vmatpush1.bf16.msra.mxu0 %v1548
    %1567 = vmatprep.subr.bf16.mxu0 0
    %1568 = vmatpush1.bf16.msra.mxu0 %v1549
    %1569 = vmatprep.subr.bf16.mxu0 0
    %1570 = vmatpush1.bf16.msra.mxu0 %v1550
    %1571 = vmatprep.subr.bf16.mxu0 0
    %1572 = vmatpush1.bf16.msra.mxu0 %v1551
    %1573 = vmatprep.subr.bf16.mxu0 0
    %1574 = vmatpush1.bf16.msra.mxu0 %v1552
    %1575 = vmatprep.subr.bf16.mxu0 0
    %1576 = vmatpush1.bf16.msra.mxu0 %v1553
    %1577 = vmatprep.subr.bf16.mxu0 0
    %1578 = vmatpush1.bf16.msra.mxu0 %v1554
    %1579 = vmatprep.subr.bf16.mxu0 0
    %1580 = vmatpush1.bf16.msra.mxu0 0
    %1581 = vmatprep.subr.bf16.mxu0 0
    %1582 = vmatpush1.bf16.msra.mxu0 0
    %1583 = vmatprep.subr.bf16.mxu0 0
    %1584 = vmatpush1.bf16.msra.mxu0 0
    %1585 = vmatprep.subr.bf16.mxu0 0
    %1586 = vmatpush1.bf16.msra.mxu0 0
    %1587 = vmatprep.subr.bf16.mxu0 0
    %1588 = vmatpush1.bf16.msra.mxu0 0
    %1589 = vmatprep.subr.bf16.mxu0 0
    %1590 = vmatpush1.bf16.msra.mxu0 0
    %1591 = vmatprep.subr.bf16.mxu0 0
    %1592 = vmatpush1.bf16.msra.mxu0 0
    %1593 = vmatprep.subr.bf16.mxu0 0
    %1594 = vmatpush1.bf16.msra.mxu0 0
    %1595 = vmatprep.mubr.bf16.mxu0 0
    %1596 = vmatmul.mubr.bf16.gmra.mrb[0].mxu0 %v1514
    %v1597 = vpop.f32.mrb[0].mxu0
    %v1598 = vadd.f32 %v231, %v1597
    %v1599 = vpop.f32.mrb[0].mxu0
    %v1600 = vpop.f32.mrb[0].mxu0
    %v1601 = vadd.f32 %v231, %v1600
    %v1602 = vpop.f32.mrb[0].mxu0
    %1603 = vdwg.mxu0
    %v1604 = vmul.f32 %v1598, 0.5
    %v1605 = vmul.f32 %v1601, 0.5
    %v1606 = vmul.f32 %v1598, 0.70710677
    %v1607 = vmul.f32 %v1601, 0.70710677
    %v1608 = verf.f32.pop %v1606
    %v1609 = verf.f32.pop %v1607
    %v1610 = vadd.f32 %v1608, 1.0
    %v1611 = vadd.f32 %v1609, 1.0
    %v1612 = vmul.f32 %v1604, %v1610
    %v1613 = vmul.f32 %v1605, %v1611
    %v1614 = vpack.c.bf16 %v1613, %v1612
    %v1631 = vunpack.c.l.b16 %v175
    %v1632 = vunpack.c.l.b16 %v176
    %v1633 = vunpack.c.l.b16 %v177
    %v1634 = vunpack.c.l.b16 %v178
    %v1635 = vunpack.c.l.b16 %v179
    %v1636 = vunpack.c.l.b16 %v180
    %v1637 = vunpack.c.l.b16 %v181
    %v1638 = vunpack.c.l.b16 %v182
    %v1639 = vunpack.c.l.b16 %v183
    %v1640 = vunpack.c.l.b16 %v184
    %v1641 = vunpack.c.l.b16 %v185
    %v1642 = vunpack.c.l.b16 %v186
    %v1643 = vunpack.c.l.b16 %v187
    %v1644 = vunpack.c.l.b16 %v188
    %v1645 = vunpack.c.l.b16 %v189
    %v1646 = vunpack.c.l.b16 %v190
    %v1647 = vpack.c.b16 %v1632, %v1631
    %v1648 = vpack.c.b16 %v1634, %v1633
    %v1649 = vpack.c.b16 %v1636, %v1635
    %v1650 = vpack.c.b16 %v1638, %v1637
    %v1651 = vpack.c.b16 %v1640, %v1639
    %v1652 = vpack.c.b16 %v1642, %v1641
    %v1653 = vpack.c.b16 %v1644, %v1643
    %v1654 = vpack.c.b16 %v1646, %v1645
    %1663 = vmatprep.subr.bf16.mxu0 0
    %1664 = vmatpush1.bf16.msra.mxu0 %v1647
    %1665 = vmatprep.subr.bf16.mxu0 0
    %1666 = vmatpush1.bf16.msra.mxu0 %v1648
    %1667 = vmatprep.subr.bf16.mxu0 0
    %1668 = vmatpush1.bf16.msra.mxu0 %v1649
    %1669 = vmatprep.subr.bf16.mxu0 0
    %1670 = vmatpush1.bf16.msra.mxu0 %v1650
    %1671 = vmatprep.subr.bf16.mxu0 0
    %1672 = vmatpush1.bf16.msra.mxu0 %v1651
    %1673 = vmatprep.subr.bf16.mxu0 0
    %1674 = vmatpush1.bf16.msra.mxu0 %v1652
    %1675 = vmatprep.subr.bf16.mxu0 0
    %1676 = vmatpush1.bf16.msra.mxu0 %v1653
    %1677 = vmatprep.subr.bf16.mxu0 0
    %1678 = vmatpush1.bf16.msra.mxu0 %v1654
    %1679 = vmatprep.subr.bf16.mxu0 0
    %1680 = vmatpush1.bf16.msra.mxu0 0
    %1681 = vmatprep.subr.bf16.mxu0 0
    %1682 = vmatpush1.bf16.msra.mxu0 0
    %1683 = vmatprep.subr.bf16.mxu0 0
    %1684 = vmatpush1.bf16.msra.mxu0 0
    %1685 = vmatprep.subr.bf16.mxu0 0
    %1686 = vmatpush1.bf16.msra.mxu0 0
    %1687 = vmatprep.subr.bf16.mxu0 0
    %1688 = vmatpush1.bf16.msra.mxu0 0
    %1689 = vmatprep.subr.bf16.mxu0 0
    %1690 = vmatpush1.bf16.msra.mxu0 0
    %1691 = vmatprep.subr.bf16.mxu0 0
    %1692 = vmatpush1.bf16.msra.mxu0 0
    %1693 = vmatprep.subr.bf16.mxu0 0
    %1694 = vmatpush1.bf16.msra.mxu0 0
    %1695 = vmatprep.mubr.bf16.mxu0 0
    %1696 = vmatmul.mubr.bf16.gmra.mrb[0].mxu0 %v1614
    %v1697 = vpop.f32.mrb[0].mxu0
    %v1698 = vadd.f32 %v238, %v1697
    %v1699 = vpop.f32.mrb[0].mxu0
    %v1700 = vpop.f32.mrb[0].mxu0
    %v1701 = vadd.f32 %v238, %v1700
    %v1702 = vpop.f32.mrb[0].mxu0
    %1703 = vdwg.mxu0
    %v1704 = vadd.f32 %v1486, %v1698
    %v1705 = vadd.f32 %v1487, %v1701
    %1706 = vadd.xlane.f32.xlu0 %v1704
    %v1707 = vpop.xlane.xlu0 %1706
    %1708 = vadd.xlane.f32.xlu0 %v1705
    %v1709 = vpop.xlane.xlu0 %1708
    %v1710 = vmul.f32 %v1707, %v246
    %v1711 = vmul.f32 %v1709, %v246
    %v1712 = vsub.f32 %v1704, %v1710
    %v1713 = vsub.f32 %v1705, %v1711
    %v1714 = vmul.f32 %v1712, %v1712
    %v1715 = vmul.f32 %v1713, %v1713
    %1716 = vadd.xlane.f32.xlu0 %v1714
    %v1717 = vpop.xlane.xlu0 %1716
    %1718 = vadd.xlane.f32.xlu0 %v1715
    %v1719 = vpop.xlane.xlu0 %1718
    %v1720 = vmul.f32 %v1717, %v246
    %v1721 = vmul.f32 %v1719, %v246
    %v1722 = vadd.f32 %v1720, 1e-05
    %v1723 = vadd.f32 %v1721, 1e-05
    %v1724 = vrsqrt.pop %v1722
    %v1725 = vrsqrt.pop %v1723
    %v1726 = vmul.f32 %v1712, %v1724
    %v1727 = vmul.f32 %v1713, %v1725
    %v1728 = vmul.f32 %v1726, %v196
    %v1729 = vmul.f32 %v1727, %v196
    %v1730 = vadd.f32 %v1728, %v203
    %v1731 = vadd.f32 %v1729, %v203
    %v1732 = vpack.c.bf16 %v1731, %v1730
    %1733 = vmatprep.subr.bf16.mxu0 %v351
    %1734 = vmatpush1.bf16.msra.mxu0 %v350
    %1735 = vmatprep.subr.bf16.mxu0 %v354
    %1736 = vmatpush1.bf16.msra.mxu0 %v353
    %1737 = vmatprep.subr.bf16.mxu0 %v357
    %1738 = vmatpush1.bf16.msra.mxu0 %v356
    %1739 = vmatprep.subr.bf16.mxu0 %v360
    %1740 = vmatpush1.bf16.msra.mxu0 %v359
    %1741 = vmatprep.subr.bf16.mxu0 %v363
    %1742 = vmatpush1.bf16.msra.mxu0 %v362
    %1743 = vmatprep.subr.bf16.mxu0 %v366
    %1744 = vmatpush1.bf16.msra.mxu0 %v365
    %1745 = vmatprep.subr.bf16.mxu0 %v369
    %1746 = vmatpush1.bf16.msra.mxu0 %v368
    %1747 = vmatprep.subr.bf16.mxu0 %v372
    %1748 = vmatpush1.bf16.msra.mxu0 %v371
    %1749 = vmatprep.subr.bf16.mxu0 0
    %1750 = vmatpush1.bf16.msra.mxu0 0
    %1751 = vmatprep.subr.bf16.mxu0 0
    %1752 = vmatpush1.bf16.msra.mxu0 0
    %1753 = vmatprep.subr.bf16.mxu0 0
    %1754 = vmatpush1.bf16.msra.mxu0 0
    %1755 = vmatprep.subr.bf16.mxu0 0
    %1756 = vmatpush1.bf16.msra.mxu0 0
    %1757 = vmatprep.subr.bf16.mxu0 0
    %1758 = vmatpush1.bf16.msra.mxu0 0
    %1759 = vmatprep.subr.bf16.mxu0 0
    %1760 = vmatpush1.bf16.msra.mxu0 0
    %1761 = vmatprep.subr.bf16.mxu0 0
    %1762 = vmatpush1.bf16.msra.mxu0 0
    %1763 = vmatprep.subr.bf16.mxu0 0
    %1764 = vmatpush1.bf16.msra.mxu0 0
    %1765 = vmatprep.mubr.bf16.mxu0 0
    %1766 = vmatmul.mubr.bf16.gmra.mrb[0].mxu0 %v1732
    %v1767 = vpop.f32.mrb[0].mxu0
    %v1768 = vadd.f32 0.0, %v1767
    %v1769 = vpop.f32.mrb[0].mxu0
    %v1770 = vadd.f32 0.0, %v1769
    %v1771 = vpop.f32.mrb[0].mxu0
    %v1772 = vadd.f32 0.0, %v1771
    %v1773 = vpop.f32.mrb[0].mxu0
    %v1774 = vadd.f32 0.0, %v1773
    %1775 = vdwg.mxu0
    %1776 = vmatprep.subr.bf16.mxu0 0
    %1777 = vmatpush1.bf16.msra.mxu0 %v352
    %1778 = vmatprep.subr.bf16.mxu0 0
    %1779 = vmatpush1.bf16.msra.mxu0 %v355
    %1780 = vmatprep.subr.bf16.mxu0 0
    %1781 = vmatpush1.bf16.msra.mxu0 %v358
    %1782 = vmatprep.subr.bf16.mxu0 0
    %1783 = vmatpush1.bf16.msra.mxu0 %v361
    %1784 = vmatprep.subr.bf16.mxu0 0
    %1785 = vmatpush1.bf16.msra.mxu0 %v364
    %1786 = vmatprep.subr.bf16.mxu0 0
    %1787 = vmatpush1.bf16.msra.mxu0 %v367
    %1788 = vmatprep.subr.bf16.mxu0 0
    %1789 = vmatpush1.bf16.msra.mxu0 %v370
    %1790 = vmatprep.subr.bf16.mxu0 0
    %1791 = vmatpush1.bf16.msra.mxu0 %v373
    %1792 = vmatprep.subr.bf16.mxu0 0
    %1793 = vmatpush1.bf16.msra.mxu0 0
    %1794 = vmatprep.subr.bf16.mxu0 0
    %1795 = vmatpush1.bf16.msra.mxu0 0
    %1796 = vmatprep.subr.bf16.mxu0 0
    %1797 = vmatpush1.bf16.msra.mxu0 0
    %1798 = vmatprep.subr.bf16.mxu0 0
    %1799 = vmatpush1.bf16.msra.mxu0 0
    %1800 = vmatprep.subr.bf16.mxu0 0
    %1801 = vmatpush1.bf16.msra.mxu0 0
    %1802 = vmatprep.subr.bf16.mxu0 0
    %1803 = vmatpush1.bf16.msra.mxu0 0
    %1804 = vmatprep.subr.bf16.mxu0 0
    %1805 = vmatpush1.bf16.msra.mxu0 0
    %1806 = vmatprep.subr.bf16.mxu0 0
    %1807 = vmatpush1.bf16.msra.mxu0 0
    %1808 = vmatprep.mubr.bf16.mxu0 0
    %1809 = vmatmul.mubr.bf16.gmra.mrb[0].mxu0 %v1732
    %v1810 = vpop.f32.mrb[0].mxu0
    %v1811 = vadd.f32 0.0, %v1810
    %v1812 = vpop.f32.mrb[0].mxu0
    %v1813 = vpop.f32.mrb[0].mxu0
    %v1814 = vadd.f32 0.0, %v1813
    %v1815 = vpop.f32.mrb[0].mxu0
    %1816 = vdwg.mxu0
    %v1817 = vmul.f32 %v1768, 0.17677669
    %v1818 = vmul.f32 %v1772, 0.17677669
    %v1819 = vpack.c.bf16 %v1818, %v1817
    %v1820 = vpack.c.bf16 %v1774, %v1770
    %v1821 = vpack.c.bf16 %v1814, %v1811
    %v1823 = vsel %vm487, %v1819, 0
    %v1826 = vsel %vm487, %v1820, 0
    %1828 = vmatprep.subr.bf16.mxu0 0
    %1829 = vmatpush1.bf16.xpose.msra.mxu0 %v1826
    %1830 = vmatprep.subr.bf16.mxu0 0
    %1831 = vmatpush1.bf16.xpose.msra.mxu0 0
    %1832 = vmatprep.subr.bf16.mxu0 0
    %1833 = vmatpush1.bf16.xpose.msra.mxu0 0
    %1834 = vmatprep.subr.bf16.mxu0 0
    %1835 = vmatpush1.bf16.xpose.msra.mxu0 0
    %1836 = vmatprep.subr.bf16.mxu0 0
    %1837 = vmatpush1.bf16.xpose.msra.mxu0 0
    %1838 = vmatprep.subr.bf16.mxu0 0
    %1839 = vmatpush1.bf16.xpose.msra.mxu0 0
    %1840 = vmatprep.subr.bf16.mxu0 0
    %1841 = vmatpush1.bf16.xpose.msra.mxu0 0
    %1842 = vmatprep.subr.bf16.mxu0 0
    %1843 = vmatpush1.bf16.xpose.msra.mxu0 0
    %1844 = vmatprep.subr.bf16.mxu0 0
    %1845 = vmatpush1.bf16.xpose.msra.mxu0 0
    %1846 = vmatprep.subr.bf16.mxu0 0
    %1847 = vmatpush1.bf16.xpose.msra.mxu0 0
    %1848 = vmatprep.subr.bf16.mxu0 0
    %1849 = vmatpush1.bf16.xpose.msra.mxu0 0
    %1850 = vmatprep.subr.bf16.mxu0 0
    %1851 = vmatpush1.bf16.xpose.msra.mxu0 0
    %1852 = vmatprep.subr.bf16.mxu0 0
    %1853 = vmatpush1.bf16.xpose.msra.mxu0 0
    %1854 = vmatprep.subr.bf16.mxu0 0
    %1855 = vmatpush1.bf16.xpose.msra.mxu0 0
    %1856 = vmatprep.subr.bf16.mxu0 0
    %1857 = vmatpush1.bf16.xpose.msra.mxu0 0
    %1858 = vmatprep.subr.bf16.mxu0 0
    %1859 = vmatpush1.bf16.xpose.msra.mxu0 0
    %1860 = vmatprep.mubr.bf16.mxu0 0
    %1861 = vmatmul.mubr.bf16.gmra.mrb[0].mxu0 %v1823
    %v1862 = vpop.f32.mrb[0].mxu0
    %v1863 = vadd.f32 0.0, %v1862
    %v1864 = vpop.f32.mrb[0].mxu0
    %v1865 = vpop.f32.mrb[0].mxu0
    %v1866 = vpop.f32.mrb[0].mxu0
    %1867 = vdwg.mxu0
    %v1868 = vsel %vm534, %v1863, -inf
    %1869 = vmax.xlane.f32.xlu0 %v1868
    %v1870 = vpop.xlane.xlu0 %1869
    %v1871 = vsub.f32 %v1863, %v1870
    %v1872 = vmul.f32 %v1871, 1.442695
    %v1873 = vpow.pop %v1872
    %v1874 = vsel %vm534, %v1873, 0.0
    %1875 = vadd.xlane.f32.xlu0 %v1874
    %v1876 = vpop.xlane.xlu0 %1875
    %v1877 = vrcp.pop %v1876
    %v1878 = vmul.f32 %v1873, %v1877
    %v1879 = vpack.c.bf16 %v1878, %v1878
    %v1881 = vsel %vm534, %v1879, 0
    %v1884 = vsel %vm550, %v1821, 0
    %1886 = vmatprep.subr.bf16.mxu0 0
    %1887 = vmatpush1.bf16.msra.mxu0 %v1884
    %1888 = vmatprep.subr.bf16.mxu0 0
    %1889 = vmatpush1.bf16.msra.mxu0 0
    %1890 = vmatprep.subr.bf16.mxu0 0
    %1891 = vmatpush1.bf16.msra.mxu0 0
    %1892 = vmatprep.subr.bf16.mxu0 0
    %1893 = vmatpush1.bf16.msra.mxu0 0
    %1894 = vmatprep.subr.bf16.mxu0 0
    %1895 = vmatpush1.bf16.msra.mxu0 0
    %1896 = vmatprep.subr.bf16.mxu0 0
    %1897 = vmatpush1.bf16.msra.mxu0 0
    %1898 = vmatprep.subr.bf16.mxu0 0
    %1899 = vmatpush1.bf16.msra.mxu0 0
    %1900 = vmatprep.subr.bf16.mxu0 0
    %1901 = vmatpush1.bf16.msra.mxu0 0
    %1902 = vmatprep.subr.bf16.mxu0 0
    %1903 = vmatpush1.bf16.msra.mxu0 0
    %1904 = vmatprep.subr.bf16.mxu0 0
    %1905 = vmatpush1.bf16.msra.mxu0 0
    %1906 = vmatprep.subr.bf16.mxu0 0
    %1907 = vmatpush1.bf16.msra.mxu0 0
    %1908 = vmatprep.subr.bf16.mxu0 0
    %1909 = vmatpush1.bf16.msra.mxu0 0
    %1910 = vmatprep.subr.bf16.mxu0 0
    %1911 = vmatpush1.bf16.msra.mxu0 0
    %1912 = vmatprep.subr.bf16.mxu0 0
    %1913 = vmatpush1.bf16.msra.mxu0 0
    %1914 = vmatprep.subr.bf16.mxu0 0
    %1915 = vmatpush1.bf16.msra.mxu0 0
    %1916 = vmatprep.subr.bf16.mxu0 0
    %1917 = vmatpush1.bf16.msra.mxu0 0
    %1918 = vmatprep.mubr.bf16.mxu0 0
    %1919 = vmatmul.mubr.bf16.gmra.mrb[0].mxu0 %v1881
    %v1920 = vpop.f32.mrb[0].mxu0
    %v1921 = vadd.f32 0.0, %v1920
    %v1922 = vpop.f32.mrb[0].mxu0
    %v1923 = vpop.f32.mrb[0].mxu0
    %v1924 = vpop.f32.mrb[0].mxu0
    %1925 = vdwg.mxu0
    %1927 = vrot.lane.b32.xlu0 %v1819, 96
    %v1928 = vpop.permute.xlu0 %1927
    %1930 = vrot.lane.b32.xlu0 %v1820, 96
    %v1931 = vpop.permute.xlu0 %1930
    %v1933 = vsel %vm487, %v1928, 0
    %v1936 = vsel %vm487, %v1931, 0
    %1938 = vmatprep.subr.bf16.mxu0 0
    %1939 = vmatpush1.bf16.xpose.msra.mxu0 %v1936
    %1940 = vmatprep.subr.bf16.mxu0 0
    %1941 = vmatpush1.bf16.xpose.msra.mxu0 0
    %1942 = vmatprep.subr.bf16.mxu0 0
    %1943 = vmatpush1.bf16.xpose.msra.mxu0 0
    %1944 = vmatprep.subr.bf16.mxu0 0
    %1945 = vmatpush1.bf16.xpose.msra.mxu0 0
    %1946 = vmatprep.subr.bf16.mxu0 0
    %1947 = vmatpush1.bf16.xpose.msra.mxu0 0
    %1948 = vmatprep.subr.bf16.mxu0 0
    %1949 = vmatpush1.bf16.xpose.msra.mxu0 0
    %1950 = vmatprep.subr.bf16.mxu0 0
    %1951 = vmatpush1.bf16.xpose.msra.mxu0 0
    %1952 = vmatprep.subr.bf16.mxu0 0
    %1953 = vmatpush1.bf16.xpose.msra.mxu0 0
    %1954 = vmatprep.subr.bf16.mxu0 0
    %1955 = vmatpush1.bf16.xpose.msra.mxu0 0
    %1956 = vmatprep.subr.bf16.mxu0 0
    %1957 = vmatpush1.bf16.xpose.msra.mxu0 0
    %1958 = vmatprep.subr.bf16.mxu0 0
    %1959 = vmatpush1.bf16.xpose.msra.mxu0 0
    %1960 = vmatprep.subr.bf16.mxu0 0
    %1961 = vmatpush1.bf16.xpose.msra.mxu0 0
    %1962 = vmatprep.subr.bf16.mxu0 0
    %1963 = vmatpush1.bf16.xpose.msra.mxu0 0
    %1964 = vmatprep.subr.bf16.mxu0 0
    %1965 = vmatpush1.bf16.xpose.msra.mxu0 0
    %1966 = vmatprep.subr.bf16.mxu0 0
    %1967 = vmatpush1.bf16.xpose.msra.mxu0 0
    %1968 = vmatprep.subr.bf16.mxu0 0
    %1969 = vmatpush1.bf16.xpose.msra.mxu0 0
    %1970 = vmatprep.mubr.bf16.mxu0 0
    %1971 = vmatmul.mubr.bf16.gmra.mrb[0].mxu0 %v1933
    %v1972 = vpop.f32.mrb[0].mxu0
    %v1973 = vadd.f32 0.0, %v1972
    %v1974 = vpop.f32.mrb[0].mxu0
    %v1975 = vpop.f32.mrb[0].mxu0
    %v1976 = vpop.f32.mrb[0].mxu0
    %1977 = vdwg.mxu0
    %v1978 = vsel %vm534, %v1973, -inf
    %1979 = vmax.xlane.f32.xlu0 %v1978
    %v1980 = vpop.xlane.xlu0 %1979
    %v1981 = vsub.f32 %v1973, %v1980
    %v1982 = vmul.f32 %v1981, 1.442695
    %v1983 = vpow.pop %v1982
    %v1984 = vsel %vm534, %v1983, 0.0
    %1985 = vadd.xlane.f32.xlu0 %v1984
    %v1986 = vpop.xlane.xlu0 %1985
    %v1987 = vrcp.pop %v1986
    %v1988 = vmul.f32 %v1983, %v1987
    %v1989 = vpack.c.bf16 %v1988, %v1988
    %1991 = vrot.lane.b32.xlu0 %v1821, 96
    %v1992 = vpop.permute.xlu0 %1991
    %v1994 = vsel %vm534, %v1989, 0
    %v1997 = vsel %vm550, %v1992, 0
    %1999 = vmatprep.subr.bf16.mxu0 0
    %2000 = vmatpush1.bf16.msra.mxu0 %v1997
    %2001 = vmatprep.subr.bf16.mxu0 0
    %2002 = vmatpush1.bf16.msra.mxu0 0
    %2003 = vmatprep.subr.bf16.mxu0 0
    %2004 = vmatpush1.bf16.msra.mxu0 0
    %2005 = vmatprep.subr.bf16.mxu0 0
    %2006 = vmatpush1.bf16.msra.mxu0 0
    %2007 = vmatprep.subr.bf16.mxu0 0
    %2008 = vmatpush1.bf16.msra.mxu0 0
    %2009 = vmatprep.subr.bf16.mxu0 0
    %2010 = vmatpush1.bf16.msra.mxu0 0
    %2011 = vmatprep.subr.bf16.mxu0 0
    %2012 = vmatpush1.bf16.msra.mxu0 0
    %2013 = vmatprep.subr.bf16.mxu0 0
    %2014 = vmatpush1.bf16.msra.mxu0 0
    %2015 = vmatprep.subr.bf16.mxu0 0
    %2016 = vmatpush1.bf16.msra.mxu0 0
    %2017 = vmatprep.subr.bf16.mxu0 0
    %2018 = vmatpush1.bf16.msra.mxu0 0
    %2019 = vmatprep.subr.bf16.mxu0 0
    %2020 = vmatpush1.bf16.msra.mxu0 0
    %2021 = vmatprep.subr.bf16.mxu0 0
    %2022 = vmatpush1.bf16.msra.mxu0 0
    %2023 = vmatprep.subr.bf16.mxu0 0
    %2024 = vmatpush1.bf16.msra.mxu0 0
    %2025 = vmatprep.subr.bf16.mxu0 0
    %2026 = vmatpush1.bf16.msra.mxu0 0
    %2027 = vmatprep.subr.bf16.mxu0 0
    %2028 = vmatpush1.bf16.msra.mxu0 0
    %2029 = vmatprep.subr.bf16.mxu0 0
    %2030 = vmatpush1.bf16.msra.mxu0 0
    %2031 = vmatprep.mubr.bf16.mxu0 0
    %2032 = vmatmul.mubr.bf16.gmra.mrb[0].mxu0 %v1994
    %v2033 = vpop.f32.mrb[0].mxu0
    %v2034 = vadd.f32 0.0, %v2033
    %v2035 = vpop.f32.mrb[0].mxu0
    %v2036 = vpop.f32.mrb[0].mxu0
    %v2037 = vpop.f32.mrb[0].mxu0
    %2038 = vdwg.mxu0
    %2039 = vrot.lane.b32.xlu0 %v1819, 64
    %v2040 = vpop.permute.xlu0 %2039
    %2041 = vrot.lane.b32.xlu0 %v1820, 64
    %v2042 = vpop.permute.xlu0 %2041
    %v2044 = vsel %vm487, %v2040, 0
    %v2047 = vsel %vm487, %v2042, 0
    %2049 = vmatprep.subr.bf16.mxu0 0
    %2050 = vmatpush1.bf16.xpose.msra.mxu0 %v2047
    %2051 = vmatprep.subr.bf16.mxu0 0
    %2052 = vmatpush1.bf16.xpose.msra.mxu0 0
    %2053 = vmatprep.subr.bf16.mxu0 0
    %2054 = vmatpush1.bf16.xpose.msra.mxu0 0
    %2055 = vmatprep.subr.bf16.mxu0 0
    %2056 = vmatpush1.bf16.xpose.msra.mxu0 0
    %2057 = vmatprep.subr.bf16.mxu0 0
    %2058 = vmatpush1.bf16.xpose.msra.mxu0 0
    %2059 = vmatprep.subr.bf16.mxu0 0
    %2060 = vmatpush1.bf16.xpose.msra.mxu0 0
    %2061 = vmatprep.subr.bf16.mxu0 0
    %2062 = vmatpush1.bf16.xpose.msra.mxu0 0
    %2063 = vmatprep.subr.bf16.mxu0 0
    %2064 = vmatpush1.bf16.xpose.msra.mxu0 0
    %2065 = vmatprep.subr.bf16.mxu0 0
    %2066 = vmatpush1.bf16.xpose.msra.mxu0 0
    %2067 = vmatprep.subr.bf16.mxu0 0
    %2068 = vmatpush1.bf16.xpose.msra.mxu0 0
    %2069 = vmatprep.subr.bf16.mxu0 0
    %2070 = vmatpush1.bf16.xpose.msra.mxu0 0
    %2071 = vmatprep.subr.bf16.mxu0 0
    %2072 = vmatpush1.bf16.xpose.msra.mxu0 0
    %2073 = vmatprep.subr.bf16.mxu0 0
    %2074 = vmatpush1.bf16.xpose.msra.mxu0 0
    %2075 = vmatprep.subr.bf16.mxu0 0
    %2076 = vmatpush1.bf16.xpose.msra.mxu0 0
    %2077 = vmatprep.subr.bf16.mxu0 0
    %2078 = vmatpush1.bf16.xpose.msra.mxu0 0
    %2079 = vmatprep.subr.bf16.mxu0 0
    %2080 = vmatpush1.bf16.xpose.msra.mxu0 0
    %2081 = vmatprep.mubr.bf16.mxu0 0
    %2082 = vmatmul.mubr.bf16.gmra.mrb[0].mxu0 %v2044
    %v2083 = vpop.f32.mrb[0].mxu0
    %v2084 = vadd.f32 0.0, %v2083
    %v2085 = vpop.f32.mrb[0].mxu0
    %v2086 = vpop.f32.mrb[0].mxu0
    %v2087 = vpop.f32.mrb[0].mxu0
    %2088 = vdwg.mxu0
    %v2089 = vsel %vm534, %v2084, -inf
    %2090 = vmax.xlane.f32.xlu0 %v2089
    %v2091 = vpop.xlane.xlu0 %2090
    %v2092 = vsub.f32 %v2084, %v2091
    %v2093 = vmul.f32 %v2092, 1.442695
    %v2094 = vpow.pop %v2093
    %v2095 = vsel %vm534, %v2094, 0.0
    %2096 = vadd.xlane.f32.xlu0 %v2095
    %v2097 = vpop.xlane.xlu0 %2096
    %v2098 = vrcp.pop %v2097
    %v2099 = vmul.f32 %v2094, %v2098
    %v2100 = vpack.c.bf16 %v2099, %v2099
    %2101 = vrot.lane.b32.xlu0 %v1821, 64
    %v2102 = vpop.permute.xlu0 %2101
    %v2104 = vsel %vm534, %v2100, 0
    %v2107 = vsel %vm550, %v2102, 0
    %2109 = vmatprep.subr.bf16.mxu0 0
    %2110 = vmatpush1.bf16.msra.mxu0 %v2107
    %2111 = vmatprep.subr.bf16.mxu0 0
    %2112 = vmatpush1.bf16.msra.mxu0 0
    %2113 = vmatprep.subr.bf16.mxu0 0
    %2114 = vmatpush1.bf16.msra.mxu0 0
    %2115 = vmatprep.subr.bf16.mxu0 0
    %2116 = vmatpush1.bf16.msra.mxu0 0
    %2117 = vmatprep.subr.bf16.mxu0 0
    %2118 = vmatpush1.bf16.msra.mxu0 0
    %2119 = vmatprep.subr.bf16.mxu0 0
    %2120 = vmatpush1.bf16.msra.mxu0 0
    %2121 = vmatprep.subr.bf16.mxu0 0
    %2122 = vmatpush1.bf16.msra.mxu0 0
    %2123 = vmatprep.subr.bf16.mxu0 0
    %2124 = vmatpush1.bf16.msra.mxu0 0
    %2125 = vmatprep.subr.bf16.mxu0 0
    %2126 = vmatpush1.bf16.msra.mxu0 0
    %2127 = vmatprep.subr.bf16.mxu0 0
    %2128 = vmatpush1.bf16.msra.mxu0 0
    %2129 = vmatprep.subr.bf16.mxu0 0
    %2130 = vmatpush1.bf16.msra.mxu0 0
    %2131 = vmatprep.subr.bf16.mxu0 0
    %2132 = vmatpush1.bf16.msra.mxu0 0
    %2133 = vmatprep.subr.bf16.mxu0 0
    %2134 = vmatpush1.bf16.msra.mxu0 0
    %2135 = vmatprep.subr.bf16.mxu0 0
    %2136 = vmatpush1.bf16.msra.mxu0 0
    %2137 = vmatprep.subr.bf16.mxu0 0
    %2138 = vmatpush1.bf16.msra.mxu0 0
    %2139 = vmatprep.subr.bf16.mxu0 0
    %2140 = vmatpush1.bf16.msra.mxu0 0
    %2141 = vmatprep.mubr.bf16.mxu0 0
    %2142 = vmatmul.mubr.bf16.gmra.mrb[0].mxu0 %v2104
    %v2143 = vpop.f32.mrb[0].mxu0
    %v2144 = vadd.f32 0.0, %v2143
    %v2145 = vpop.f32.mrb[0].mxu0
    %v2146 = vpop.f32.mrb[0].mxu0
    %v2147 = vpop.f32.mrb[0].mxu0
    %2148 = vdwg.mxu0
    %2149 = vrot.lane.b32.xlu0 %v1819, 32
    %v2150 = vpop.permute.xlu0 %2149
    %2151 = vrot.lane.b32.xlu0 %v1820, 32
    %v2152 = vpop.permute.xlu0 %2151
    %v2154 = vsel %vm487, %v2150, 0
    %v2157 = vsel %vm487, %v2152, 0
    %2159 = vmatprep.subr.bf16.mxu0 0
    %2160 = vmatpush1.bf16.xpose.msra.mxu0 %v2157
    %2161 = vmatprep.subr.bf16.mxu0 0
    %2162 = vmatpush1.bf16.xpose.msra.mxu0 0
    %2163 = vmatprep.subr.bf16.mxu0 0
    %2164 = vmatpush1.bf16.xpose.msra.mxu0 0
    %2165 = vmatprep.subr.bf16.mxu0 0
    %2166 = vmatpush1.bf16.xpose.msra.mxu0 0
    %2167 = vmatprep.subr.bf16.mxu0 0
    %2168 = vmatpush1.bf16.xpose.msra.mxu0 0
    %2169 = vmatprep.subr.bf16.mxu0 0
    %2170 = vmatpush1.bf16.xpose.msra.mxu0 0
    %2171 = vmatprep.subr.bf16.mxu0 0
    %2172 = vmatpush1.bf16.xpose.msra.mxu0 0
    %2173 = vmatprep.subr.bf16.mxu0 0
    %2174 = vmatpush1.bf16.xpose.msra.mxu0 0
    %2175 = vmatprep.subr.bf16.mxu0 0
    %2176 = vmatpush1.bf16.xpose.msra.mxu0 0
    %2177 = vmatprep.subr.bf16.mxu0 0
    %2178 = vmatpush1.bf16.xpose.msra.mxu0 0
    %2179 = vmatprep.subr.bf16.mxu0 0
    %2180 = vmatpush1.bf16.xpose.msra.mxu0 0
    %2181 = vmatprep.subr.bf16.mxu0 0
    %2182 = vmatpush1.bf16.xpose.msra.mxu0 0
    %2183 = vmatprep.subr.bf16.mxu0 0
    %2184 = vmatpush1.bf16.xpose.msra.mxu0 0
    %2185 = vmatprep.subr.bf16.mxu0 0
    %2186 = vmatpush1.bf16.xpose.msra.mxu0 0
    %2187 = vmatprep.subr.bf16.mxu0 0
    %2188 = vmatpush1.bf16.xpose.msra.mxu0 0
    %2189 = vmatprep.subr.bf16.mxu0 0
    %2190 = vmatpush1.bf16.xpose.msra.mxu0 0
    %2191 = vmatprep.mubr.bf16.mxu0 0
    %2192 = vmatmul.mubr.bf16.gmra.mrb[0].mxu0 %v2154
    %v2193 = vpop.f32.mrb[0].mxu0
    %v2194 = vadd.f32 0.0, %v2193
    %v2195 = vpop.f32.mrb[0].mxu0
    %v2196 = vpop.f32.mrb[0].mxu0
    %v2197 = vpop.f32.mrb[0].mxu0
    %2198 = vdwg.mxu0
    %v2199 = vsel %vm534, %v2194, -inf
    %2200 = vmax.xlane.f32.xlu0 %v2199
    %v2201 = vpop.xlane.xlu0 %2200
    %v2202 = vsub.f32 %v2194, %v2201
    %v2203 = vmul.f32 %v2202, 1.442695
    %v2204 = vpow.pop %v2203
    %v2205 = vsel %vm534, %v2204, 0.0
    %2206 = vadd.xlane.f32.xlu0 %v2205
    %v2207 = vpop.xlane.xlu0 %2206
    %v2208 = vrcp.pop %v2207
    %v2209 = vmul.f32 %v2204, %v2208
    %v2210 = vpack.c.bf16 %v2209, %v2209
    %2211 = vrot.lane.b32.xlu0 %v1821, 32
    %v2212 = vpop.permute.xlu0 %2211
    %v2214 = vsel %vm534, %v2210, 0
    %v2217 = vsel %vm550, %v2212, 0
    %2219 = vmatprep.subr.bf16.mxu0 0
    %2220 = vmatpush1.bf16.msra.mxu0 %v2217
    %2221 = vmatprep.subr.bf16.mxu0 0
    %2222 = vmatpush1.bf16.msra.mxu0 0
    %2223 = vmatprep.subr.bf16.mxu0 0
    %2224 = vmatpush1.bf16.msra.mxu0 0
    %2225 = vmatprep.subr.bf16.mxu0 0
    %2226 = vmatpush1.bf16.msra.mxu0 0
    %2227 = vmatprep.subr.bf16.mxu0 0
    %2228 = vmatpush1.bf16.msra.mxu0 0
    %2229 = vmatprep.subr.bf16.mxu0 0
    %2230 = vmatpush1.bf16.msra.mxu0 0
    %2231 = vmatprep.subr.bf16.mxu0 0
    %2232 = vmatpush1.bf16.msra.mxu0 0
    %2233 = vmatprep.subr.bf16.mxu0 0
    %2234 = vmatpush1.bf16.msra.mxu0 0
    %2235 = vmatprep.subr.bf16.mxu0 0
    %2236 = vmatpush1.bf16.msra.mxu0 0
    %2237 = vmatprep.subr.bf16.mxu0 0
    %2238 = vmatpush1.bf16.msra.mxu0 0
    %2239 = vmatprep.subr.bf16.mxu0 0
    %2240 = vmatpush1.bf16.msra.mxu0 0
    %2241 = vmatprep.subr.bf16.mxu0 0
    %2242 = vmatpush1.bf16.msra.mxu0 0
    %2243 = vmatprep.subr.bf16.mxu0 0
    %2244 = vmatpush1.bf16.msra.mxu0 0
    %2245 = vmatprep.subr.bf16.mxu0 0
    %2246 = vmatpush1.bf16.msra.mxu0 0
    %2247 = vmatprep.subr.bf16.mxu0 0
    %2248 = vmatpush1.bf16.msra.mxu0 0
    %2249 = vmatprep.subr.bf16.mxu0 0
    %2250 = vmatpush1.bf16.msra.mxu0 0
    %2251 = vmatprep.mubr.bf16.mxu0 0
    %2252 = vmatmul.mubr.bf16.gmra.mrb[0].mxu0 %v2214
    %v2253 = vpop.f32.mrb[0].mxu0
    %v2254 = vadd.f32 0.0, %v2253
    %v2255 = vpop.f32.mrb[0].mxu0
    %v2256 = vpop.f32.mrb[0].mxu0
    %v2257 = vpop.f32.mrb[0].mxu0
    %2258 = vdwg.mxu0
    %2260 = vrot.lane.b32.xlu0 %v2034, 32
    %v2261 = vpop.permute.xlu0 %2260
    %2264 = vrot.lane.b32.xlu0 %v2144, 64
    %v2265 = vpop.permute.xlu0 %2264
    %2268 = vrot.lane.b32.xlu0 %v2254, 96
    %v2269 = vpop.permute.xlu0 %2268
    %v2271 = vsel %vm487, %v1921, %v2261
    %v2272 = vsel %vm940, %v2271, %v2265
    %v2273 = vsel %vm942, %v2272, %v2269
    %v2274 = vrot.slane %v1819, 4
    %v2275 = vrot.slane %v1820, 4
    %v2277 = vsel %vm487, %v2274, 0
    %v2280 = vsel %vm487, %v2275, 0
    %2282 = vmatprep.subr.bf16.mxu0 0
    %2283 = vmatpush1.bf16.xpose.msra.mxu0 %v2280
    %2284 = vmatprep.subr.bf16.mxu0 0
    %2285 = vmatpush1.bf16.xpose.msra.mxu0 0
    %2286 = vmatprep.subr.bf16.mxu0 0
    %2287 = vmatpush1.bf16.xpose.msra.mxu0 0
    %2288 = vmatprep.subr.bf16.mxu0 0
    %2289 = vmatpush1.bf16.xpose.msra.mxu0 0
    %2290 = vmatprep.subr.bf16.mxu0 0
    %2291 = vmatpush1.bf16.xpose.msra.mxu0 0
    %2292 = vmatprep.subr.bf16.mxu0 0
    %2293 = vmatpush1.bf16.xpose.msra.mxu0 0
    %2294 = vmatprep.subr.bf16.mxu0 0
    %2295 = vmatpush1.bf16.xpose.msra.mxu0 0
    %2296 = vmatprep.subr.bf16.mxu0 0
    %2297 = vmatpush1.bf16.xpose.msra.mxu0 0
    %2298 = vmatprep.subr.bf16.mxu0 0
    %2299 = vmatpush1.bf16.xpose.msra.mxu0 0
    %2300 = vmatprep.subr.bf16.mxu0 0
    %2301 = vmatpush1.bf16.xpose.msra.mxu0 0
    %2302 = vmatprep.subr.bf16.mxu0 0
    %2303 = vmatpush1.bf16.xpose.msra.mxu0 0
    %2304 = vmatprep.subr.bf16.mxu0 0
    %2305 = vmatpush1.bf16.xpose.msra.mxu0 0
    %2306 = vmatprep.subr.bf16.mxu0 0
    %2307 = vmatpush1.bf16.xpose.msra.mxu0 0
    %2308 = vmatprep.subr.bf16.mxu0 0
    %2309 = vmatpush1.bf16.xpose.msra.mxu0 0
    %2310 = vmatprep.subr.bf16.mxu0 0
    %2311 = vmatpush1.bf16.xpose.msra.mxu0 0
    %2312 = vmatprep.subr.bf16.mxu0 0
    %2313 = vmatpush1.bf16.xpose.msra.mxu0 0
    %2314 = vmatprep.mubr.bf16.mxu0 0
    %2315 = vmatmul.mubr.bf16.gmra.mrb[0].mxu0 %v2277
    %v2316 = vpop.f32.mrb[0].mxu0
    %v2317 = vadd.f32 0.0, %v2316
    %v2318 = vpop.f32.mrb[0].mxu0
    %v2319 = vpop.f32.mrb[0].mxu0
    %v2320 = vpop.f32.mrb[0].mxu0
    %2321 = vdwg.mxu0
    %v2322 = vsel %vm534, %v2317, -inf
    %2323 = vmax.xlane.f32.xlu0 %v2322
    %v2324 = vpop.xlane.xlu0 %2323
    %v2325 = vsub.f32 %v2317, %v2324
    %v2326 = vmul.f32 %v2325, 1.442695
    %v2327 = vpow.pop %v2326
    %v2328 = vsel %vm534, %v2327, 0.0
    %2329 = vadd.xlane.f32.xlu0 %v2328
    %v2330 = vpop.xlane.xlu0 %2329
    %v2331 = vrcp.pop %v2330
    %v2332 = vmul.f32 %v2327, %v2331
    %v2333 = vpack.c.bf16 %v2332, %v2332
    %v2334 = vrot.slane %v1821, 4
    %v2336 = vsel %vm534, %v2333, 0
    %v2339 = vsel %vm550, %v2334, 0
    %2341 = vmatprep.subr.bf16.mxu0 0
    %2342 = vmatpush1.bf16.msra.mxu0 %v2339
    %2343 = vmatprep.subr.bf16.mxu0 0
    %2344 = vmatpush1.bf16.msra.mxu0 0
    %2345 = vmatprep.subr.bf16.mxu0 0
    %2346 = vmatpush1.bf16.msra.mxu0 0
    %2347 = vmatprep.subr.bf16.mxu0 0
    %2348 = vmatpush1.bf16.msra.mxu0 0
    %2349 = vmatprep.subr.bf16.mxu0 0
    %2350 = vmatpush1.bf16.msra.mxu0 0
    %2351 = vmatprep.subr.bf16.mxu0 0
    %2352 = vmatpush1.bf16.msra.mxu0 0
    %2353 = vmatprep.subr.bf16.mxu0 0
    %2354 = vmatpush1.bf16.msra.mxu0 0
    %2355 = vmatprep.subr.bf16.mxu0 0
    %2356 = vmatpush1.bf16.msra.mxu0 0
    %2357 = vmatprep.subr.bf16.mxu0 0
    %2358 = vmatpush1.bf16.msra.mxu0 0
    %2359 = vmatprep.subr.bf16.mxu0 0
    %2360 = vmatpush1.bf16.msra.mxu0 0
    %2361 = vmatprep.subr.bf16.mxu0 0
    %2362 = vmatpush1.bf16.msra.mxu0 0
    %2363 = vmatprep.subr.bf16.mxu0 0
    %2364 = vmatpush1.bf16.msra.mxu0 0
    %2365 = vmatprep.subr.bf16.mxu0 0
    %2366 = vmatpush1.bf16.msra.mxu0 0
    %2367 = vmatprep.subr.bf16.mxu0 0
    %2368 = vmatpush1.bf16.msra.mxu0 0
    %2369 = vmatprep.subr.bf16.mxu0 0
    %2370 = vmatpush1.bf16.msra.mxu0 0
    %2371 = vmatprep.subr.bf16.mxu0 0
    %2372 = vmatpush1.bf16.msra.mxu0 0
    %2373 = vmatprep.mubr.bf16.mxu0 0
    %2374 = vmatmul.mubr.bf16.gmra.mrb[0].mxu0 %v2336
    %v2375 = vpop.f32.mrb[0].mxu0
    %v2376 = vadd.f32 0.0, %v2375
    %v2377 = vpop.f32.mrb[0].mxu0
    %v2378 = vpop.f32.mrb[0].mxu0
    %v2379 = vpop.f32.mrb[0].mxu0
    %2380 = vdwg.mxu0
    %2381 = vrot.lane.b32.xlu0 %v2274, 96
    %v2382 = vpop.permute.xlu0 %2381
    %2383 = vrot.lane.b32.xlu0 %v2275, 96
    %v2384 = vpop.permute.xlu0 %2383
    %v2386 = vsel %vm487, %v2382, 0
    %v2389 = vsel %vm487, %v2384, 0
    %2391 = vmatprep.subr.bf16.mxu0 0
    %2392 = vmatpush1.bf16.xpose.msra.mxu0 %v2389
    %2393 = vmatprep.subr.bf16.mxu0 0
    %2394 = vmatpush1.bf16.xpose.msra.mxu0 0
    %2395 = vmatprep.subr.bf16.mxu0 0
    %2396 = vmatpush1.bf16.xpose.msra.mxu0 0
    %2397 = vmatprep.subr.bf16.mxu0 0
    %2398 = vmatpush1.bf16.xpose.msra.mxu0 0
    %2399 = vmatprep.subr.bf16.mxu0 0
    %2400 = vmatpush1.bf16.xpose.msra.mxu0 0
    %2401 = vmatprep.subr.bf16.mxu0 0
    %2402 = vmatpush1.bf16.xpose.msra.mxu0 0
    %2403 = vmatprep.subr.bf16.mxu0 0
    %2404 = vmatpush1.bf16.xpose.msra.mxu0 0
    %2405 = vmatprep.subr.bf16.mxu0 0
    %2406 = vmatpush1.bf16.xpose.msra.mxu0 0
    %2407 = vmatprep.subr.bf16.mxu0 0
    %2408 = vmatpush1.bf16.xpose.msra.mxu0 0
    %2409 = vmatprep.subr.bf16.mxu0 0
    %2410 = vmatpush1.bf16.xpose.msra.mxu0 0
    %2411 = vmatprep.subr.bf16.mxu0 0
    %2412 = vmatpush1.bf16.xpose.msra.mxu0 0
    %2413 = vmatprep.subr.bf16.mxu0 0
    %2414 = vmatpush1.bf16.xpose.msra.mxu0 0
    %2415 = vmatprep.subr.bf16.mxu0 0
    %2416 = vmatpush1.bf16.xpose.msra.mxu0 0
    %2417 = vmatprep.subr.bf16.mxu0 0
    %2418 = vmatpush1.bf16.xpose.msra.mxu0 0
    %2419 = vmatprep.subr.bf16.mxu0 0
    %2420 = vmatpush1.bf16.xpose.msra.mxu0 0
    %2421 = vmatprep.subr.bf16.mxu0 0
    %2422 = vmatpush1.bf16.xpose.msra.mxu0 0
    %2423 = vmatprep.mubr.bf16.mxu0 0
    %2424 = vmatmul.mubr.bf16.gmra.mrb[0].mxu0 %v2386
    %v2425 = vpop.f32.mrb[0].mxu0
    %v2426 = vadd.f32 0.0, %v2425
    %v2427 = vpop.f32.mrb[0].mxu0
    %v2428 = vpop.f32.mrb[0].mxu0
    %v2429 = vpop.f32.mrb[0].mxu0
    %2430 = vdwg.mxu0
    %v2431 = vsel %vm534, %v2426, -inf
    %2432 = vmax.xlane.f32.xlu0 %v2431
    %v2433 = vpop.xlane.xlu0 %2432
    %v2434 = vsub.f32 %v2426, %v2433
    %v2435 = vmul.f32 %v2434, 1.442695
    %v2436 = vpow.pop %v2435
    %v2437 = vsel %vm534, %v2436, 0.0
    %2438 = vadd.xlane.f32.xlu0 %v2437
    %v2439 = vpop.xlane.xlu0 %2438
    %v2440 = vrcp.pop %v2439
    %v2441 = vmul.f32 %v2436, %v2440
    %v2442 = vpack.c.bf16 %v2441, %v2441
    %2443 = vrot.lane.b32.xlu0 %v2334, 96
    %v2444 = vpop.permute.xlu0 %2443
    %v2446 = vsel %vm534, %v2442, 0
    %v2449 = vsel %vm550, %v2444, 0
    %2451 = vmatprep.subr.bf16.mxu0 0
    %2452 = vmatpush1.bf16.msra.mxu0 %v2449
    %2453 = vmatprep.subr.bf16.mxu0 0
    %2454 = vmatpush1.bf16.msra.mxu0 0
    %2455 = vmatprep.subr.bf16.mxu0 0
    %2456 = vmatpush1.bf16.msra.mxu0 0
    %2457 = vmatprep.subr.bf16.mxu0 0
    %2458 = vmatpush1.bf16.msra.mxu0 0
    %2459 = vmatprep.subr.bf16.mxu0 0
    %2460 = vmatpush1.bf16.msra.mxu0 0
    %2461 = vmatprep.subr.bf16.mxu0 0
    %2462 = vmatpush1.bf16.msra.mxu0 0
    %2463 = vmatprep.subr.bf16.mxu0 0
    %2464 = vmatpush1.bf16.msra.mxu0 0
    %2465 = vmatprep.subr.bf16.mxu0 0
    %2466 = vmatpush1.bf16.msra.mxu0 0
    %2467 = vmatprep.subr.bf16.mxu0 0
    %2468 = vmatpush1.bf16.msra.mxu0 0
    %2469 = vmatprep.subr.bf16.mxu0 0
    %2470 = vmatpush1.bf16.msra.mxu0 0
    %2471 = vmatprep.subr.bf16.mxu0 0
    %2472 = vmatpush1.bf16.msra.mxu0 0
    %2473 = vmatprep.subr.bf16.mxu0 0
    %2474 = vmatpush1.bf16.msra.mxu0 0
    %2475 = vmatprep.subr.bf16.mxu0 0
    %2476 = vmatpush1.bf16.msra.mxu0 0
    %2477 = vmatprep.subr.bf16.mxu0 0
    %2478 = vmatpush1.bf16.msra.mxu0 0
    %2479 = vmatprep.subr.bf16.mxu0 0
    %2480 = vmatpush1.bf16.msra.mxu0 0
    %2481 = vmatprep.subr.bf16.mxu0 0
    %2482 = vmatpush1.bf16.msra.mxu0 0
    %2483 = vmatprep.mubr.bf16.mxu0 0
    %2484 = vmatmul.mubr.bf16.gmra.mrb[0].mxu0 %v2446
    %v2485 = vpop.f32.mrb[0].mxu0
    %v2486 = vadd.f32 0.0, %v2485
    %v2487 = vpop.f32.mrb[0].mxu0
    %v2488 = vpop.f32.mrb[0].mxu0
    %v2489 = vpop.f32.mrb[0].mxu0
    %2490 = vdwg.mxu0
    %2491 = vrot.lane.b32.xlu0 %v2274, 64
    %v2492 = vpop.permute.xlu0 %2491
    %2493 = vrot.lane.b32.xlu0 %v2275, 64
    %v2494 = vpop.permute.xlu0 %2493
    %v2496 = vsel %vm487, %v2492, 0
    %v2499 = vsel %vm487, %v2494, 0
    %2501 = vmatprep.subr.bf16.mxu0 0
    %2502 = vmatpush1.bf16.xpose.msra.mxu0 %v2499
    %2503 = vmatprep.subr.bf16.mxu0 0
    %2504 = vmatpush1.bf16.xpose.msra.mxu0 0
    %2505 = vmatprep.subr.bf16.mxu0 0
    %2506 = vmatpush1.bf16.xpose.msra.mxu0 0
    %2507 = vmatprep.subr.bf16.mxu0 0
    %2508 = vmatpush1.bf16.xpose.msra.mxu0 0
    %2509 = vmatprep.subr.bf16.mxu0 0
    %2510 = vmatpush1.bf16.xpose.msra.mxu0 0
    %2511 = vmatprep.subr.bf16.mxu0 0
    %2512 = vmatpush1.bf16.xpose.msra.mxu0 0
    %2513 = vmatprep.subr.bf16.mxu0 0
    %2514 = vmatpush1.bf16.xpose.msra.mxu0 0
    %2515 = vmatprep.subr.bf16.mxu0 0
    %2516 = vmatpush1.bf16.xpose.msra.mxu0 0
    %2517 = vmatprep.subr.bf16.mxu0 0
    %2518 = vmatpush1.bf16.xpose.msra.mxu0 0
    %2519 = vmatprep.subr.bf16.mxu0 0
    %2520 = vmatpush1.bf16.xpose.msra.mxu0 0
    %2521 = vmatprep.subr.bf16.mxu0 0
    %2522 = vmatpush1.bf16.xpose.msra.mxu0 0
    %2523 = vmatprep.subr.bf16.mxu0 0
    %2524 = vmatpush1.bf16.xpose.msra.mxu0 0
    %2525 = vmatprep.subr.bf16.mxu0 0
    %2526 = vmatpush1.bf16.xpose.msra.mxu0 0
    %2527 = vmatprep.subr.bf16.mxu0 0
    %2528 = vmatpush1.bf16.xpose.msra.mxu0 0
    %2529 = vmatprep.subr.bf16.mxu0 0
    %2530 = vmatpush1.bf16.xpose.msra.mxu0 0
    %2531 = vmatprep.subr.bf16.mxu0 0
    %2532 = vmatpush1.bf16.xpose.msra.mxu0 0
    %2533 = vmatprep.mubr.bf16.mxu0 0
    %2534 = vmatmul.mubr.bf16.gmra.mrb[0].mxu0 %v2496
    %v2535 = vpop.f32.mrb[0].mxu0
    %v2536 = vadd.f32 0.0, %v2535
    %v2537 = vpop.f32.mrb[0].mxu0
    %v2538 = vpop.f32.mrb[0].mxu0
    %v2539 = vpop.f32.mrb[0].mxu0
    %2540 = vdwg.mxu0
    %v2541 = vsel %vm534, %v2536, -inf
    %2542 = vmax.xlane.f32.xlu0 %v2541
    %v2543 = vpop.xlane.xlu0 %2542
    %v2544 = vsub.f32 %v2536, %v2543
    %v2545 = vmul.f32 %v2544, 1.442695
    %v2546 = vpow.pop %v2545
    %v2547 = vsel %vm534, %v2546, 0.0
    %2548 = vadd.xlane.f32.xlu0 %v2547
    %v2549 = vpop.xlane.xlu0 %2548
    %v2550 = vrcp.pop %v2549
    %v2551 = vmul.f32 %v2546, %v2550
    %v2552 = vpack.c.bf16 %v2551, %v2551
    %2553 = vrot.lane.b32.xlu0 %v2334, 64
    %v2554 = vpop.permute.xlu0 %2553
    %v2556 = vsel %vm534, %v2552, 0
    %v2559 = vsel %vm550, %v2554, 0
    %2561 = vmatprep.subr.bf16.mxu0 0
    %2562 = vmatpush1.bf16.msra.mxu0 %v2559
    %2563 = vmatprep.subr.bf16.mxu0 0
    %2564 = vmatpush1.bf16.msra.mxu0 0
    %2565 = vmatprep.subr.bf16.mxu0 0
    %2566 = vmatpush1.bf16.msra.mxu0 0
    %2567 = vmatprep.subr.bf16.mxu0 0
    %2568 = vmatpush1.bf16.msra.mxu0 0
    %2569 = vmatprep.subr.bf16.mxu0 0
    %2570 = vmatpush1.bf16.msra.mxu0 0
    %2571 = vmatprep.subr.bf16.mxu0 0
    %2572 = vmatpush1.bf16.msra.mxu0 0
    %2573 = vmatprep.subr.bf16.mxu0 0
    %2574 = vmatpush1.bf16.msra.mxu0 0
    %2575 = vmatprep.subr.bf16.mxu0 0
    %2576 = vmatpush1.bf16.msra.mxu0 0
    %2577 = vmatprep.subr.bf16.mxu0 0
    %2578 = vmatpush1.bf16.msra.mxu0 0
    %2579 = vmatprep.subr.bf16.mxu0 0
    %2580 = vmatpush1.bf16.msra.mxu0 0
    %2581 = vmatprep.subr.bf16.mxu0 0
    %2582 = vmatpush1.bf16.msra.mxu0 0
    %2583 = vmatprep.subr.bf16.mxu0 0
    %2584 = vmatpush1.bf16.msra.mxu0 0
    %2585 = vmatprep.subr.bf16.mxu0 0
    %2586 = vmatpush1.bf16.msra.mxu0 0
    %2587 = vmatprep.subr.bf16.mxu0 0
    %2588 = vmatpush1.bf16.msra.mxu0 0
    %2589 = vmatprep.subr.bf16.mxu0 0
    %2590 = vmatpush1.bf16.msra.mxu0 0
    %2591 = vmatprep.subr.bf16.mxu0 0
    %2592 = vmatpush1.bf16.msra.mxu0 0
    %2593 = vmatprep.mubr.bf16.mxu0 0
    %2594 = vmatmul.mubr.bf16.gmra.mrb[0].mxu0 %v2556
    %v2595 = vpop.f32.mrb[0].mxu0
    %v2596 = vadd.f32 0.0, %v2595
    %v2597 = vpop.f32.mrb[0].mxu0
    %v2598 = vpop.f32.mrb[0].mxu0
    %v2599 = vpop.f32.mrb[0].mxu0
    %2600 = vdwg.mxu0
    %2601 = vrot.lane.b32.xlu0 %v2274, 32
    %v2602 = vpop.permute.xlu0 %2601
    %2603 = vrot.lane.b32.xlu0 %v2275, 32
    %v2604 = vpop.permute.xlu0 %2603
    %v2606 = vsel %vm487, %v2602, 0
    %v2609 = vsel %vm487, %v2604, 0
    %2611 = vmatprep.subr.bf16.mxu0 0
    %2612 = vmatpush1.bf16.xpose.msra.mxu0 %v2609
    %2613 = vmatprep.subr.bf16.mxu0 0
    %2614 = vmatpush1.bf16.xpose.msra.mxu0 0
    %2615 = vmatprep.subr.bf16.mxu0 0
    %2616 = vmatpush1.bf16.xpose.msra.mxu0 0
    %2617 = vmatprep.subr.bf16.mxu0 0
    %2618 = vmatpush1.bf16.xpose.msra.mxu0 0
    %2619 = vmatprep.subr.bf16.mxu0 0
    %2620 = vmatpush1.bf16.xpose.msra.mxu0 0
    %2621 = vmatprep.subr.bf16.mxu0 0
    %2622 = vmatpush1.bf16.xpose.msra.mxu0 0
    %2623 = vmatprep.subr.bf16.mxu0 0
    %2624 = vmatpush1.bf16.xpose.msra.mxu0 0
    %2625 = vmatprep.subr.bf16.mxu0 0
    %2626 = vmatpush1.bf16.xpose.msra.mxu0 0
    %2627 = vmatprep.subr.bf16.mxu0 0
    %2628 = vmatpush1.bf16.xpose.msra.mxu0 0
    %2629 = vmatprep.subr.bf16.mxu0 0
    %2630 = vmatpush1.bf16.xpose.msra.mxu0 0
    %2631 = vmatprep.subr.bf16.mxu0 0
    %2632 = vmatpush1.bf16.xpose.msra.mxu0 0
    %2633 = vmatprep.subr.bf16.mxu0 0
    %2634 = vmatpush1.bf16.xpose.msra.mxu0 0
    %2635 = vmatprep.subr.bf16.mxu0 0
    %2636 = vmatpush1.bf16.xpose.msra.mxu0 0
    %2637 = vmatprep.subr.bf16.mxu0 0
    %2638 = vmatpush1.bf16.xpose.msra.mxu0 0
    %2639 = vmatprep.subr.bf16.mxu0 0
    %2640 = vmatpush1.bf16.xpose.msra.mxu0 0
    %2641 = vmatprep.subr.bf16.mxu0 0
    %2642 = vmatpush1.bf16.xpose.msra.mxu0 0
    %2643 = vmatprep.mubr.bf16.mxu0 0
    %2644 = vmatmul.mubr.bf16.gmra.mrb[0].mxu0 %v2606
    %v2645 = vpop.f32.mrb[0].mxu0
    %v2646 = vadd.f32 0.0, %v2645
    %v2647 = vpop.f32.mrb[0].mxu0
    %v2648 = vpop.f32.mrb[0].mxu0
    %v2649 = vpop.f32.mrb[0].mxu0
    %2650 = vdwg.mxu0
    %v2651 = vsel %vm534, %v2646, -inf
    %2652 = vmax.xlane.f32.xlu0 %v2651
    %v2653 = vpop.xlane.xlu0 %2652
    %v2654 = vsub.f32 %v2646, %v2653
    %v2655 = vmul.f32 %v2654, 1.442695
    %v2656 = vpow.pop %v2655
    %v2657 = vsel %vm534, %v2656, 0.0
    %2658 = vadd.xlane.f32.xlu0 %v2657
    %v2659 = vpop.xlane.xlu0 %2658
    %v2660 = vrcp.pop %v2659
    %v2661 = vmul.f32 %v2656, %v2660
    %v2662 = vpack.c.bf16 %v2661, %v2661
    %2663 = vrot.lane.b32.xlu0 %v2334, 32
    %v2664 = vpop.permute.xlu0 %2663
    %v2666 = vsel %vm534, %v2662, 0
    %v2669 = vsel %vm550, %v2664, 0
    %2671 = vmatprep.subr.bf16.mxu0 0
    %2672 = vmatpush1.bf16.msra.mxu0 %v2669
    %2673 = vmatprep.subr.bf16.mxu0 0
    %2674 = vmatpush1.bf16.msra.mxu0 0
    %2675 = vmatprep.subr.bf16.mxu0 0
    %2676 = vmatpush1.bf16.msra.mxu0 0
    %2677 = vmatprep.subr.bf16.mxu0 0
    %2678 = vmatpush1.bf16.msra.mxu0 0
    %2679 = vmatprep.subr.bf16.mxu0 0
    %2680 = vmatpush1.bf16.msra.mxu0 0
    %2681 = vmatprep.subr.bf16.mxu0 0
    %2682 = vmatpush1.bf16.msra.mxu0 0
    %2683 = vmatprep.subr.bf16.mxu0 0
    %2684 = vmatpush1.bf16.msra.mxu0 0
    %2685 = vmatprep.subr.bf16.mxu0 0
    %2686 = vmatpush1.bf16.msra.mxu0 0
    %2687 = vmatprep.subr.bf16.mxu0 0
    %2688 = vmatpush1.bf16.msra.mxu0 0
    %2689 = vmatprep.subr.bf16.mxu0 0
    %2690 = vmatpush1.bf16.msra.mxu0 0
    %2691 = vmatprep.subr.bf16.mxu0 0
    %2692 = vmatpush1.bf16.msra.mxu0 0
    %2693 = vmatprep.subr.bf16.mxu0 0
    %2694 = vmatpush1.bf16.msra.mxu0 0
    %2695 = vmatprep.subr.bf16.mxu0 0
    %2696 = vmatpush1.bf16.msra.mxu0 0
    %2697 = vmatprep.subr.bf16.mxu0 0
    %2698 = vmatpush1.bf16.msra.mxu0 0
    %2699 = vmatprep.subr.bf16.mxu0 0
    %2700 = vmatpush1.bf16.msra.mxu0 0
    %2701 = vmatprep.subr.bf16.mxu0 0
    %2702 = vmatpush1.bf16.msra.mxu0 0
    %2703 = vmatprep.mubr.bf16.mxu0 0
    %2704 = vmatmul.mubr.bf16.gmra.mrb[0].mxu0 %v2666
    %v2705 = vpop.f32.mrb[0].mxu0
    %v2706 = vadd.f32 0.0, %v2705
    %v2707 = vpop.f32.mrb[0].mxu0
    %v2708 = vpop.f32.mrb[0].mxu0
    %v2709 = vpop.f32.mrb[0].mxu0
    %2710 = vdwg.mxu0
    %2712 = vrot.lane.b32.xlu0 %v2486, 32
    %v2713 = vpop.permute.xlu0 %2712
    %2716 = vrot.lane.b32.xlu0 %v2596, 64
    %v2717 = vpop.permute.xlu0 %2716
    %2720 = vrot.lane.b32.xlu0 %v2706, 96
    %v2721 = vpop.permute.xlu0 %2720
    %v2723 = vsel %vm487, %v2376, %v2713
    %v2724 = vsel %vm940, %v2723, %v2717
    %v2725 = vsel %vm942, %v2724, %v2721
    %v2726 = vpack.c.bf16 %v2725, %v2273
    %2727 = vmatprep.subr.bf16.mxu0 0
    %2728 = vmatpush1.bf16.msra.mxu0 %v1429
    %2729 = vmatprep.subr.bf16.mxu0 0
    %2730 = vmatpush1.bf16.msra.mxu0 %v1430
    %2731 = vmatprep.subr.bf16.mxu0 0
    %2732 = vmatpush1.bf16.msra.mxu0 %v1431
    %2733 = vmatprep.subr.bf16.mxu0 0
    %2734 = vmatpush1.bf16.msra.mxu0 %v1432
    %2735 = vmatprep.subr.bf16.mxu0 0
    %2736 = vmatpush1.bf16.msra.mxu0 %v1433
    %2737 = vmatprep.subr.bf16.mxu0 0
    %2738 = vmatpush1.bf16.msra.mxu0 %v1434
    %2739 = vmatprep.subr.bf16.mxu0 0
    %2740 = vmatpush1.bf16.msra.mxu0 %v1435
    %2741 = vmatprep.subr.bf16.mxu0 0
    %2742 = vmatpush1.bf16.msra.mxu0 %v1436
    %2743 = vmatprep.subr.bf16.mxu0 0
    %2744 = vmatpush1.bf16.msra.mxu0 0
    %2745 = vmatprep.subr.bf16.mxu0 0
    %2746 = vmatpush1.bf16.msra.mxu0 0
    %2747 = vmatprep.subr.bf16.mxu0 0
    %2748 = vmatpush1.bf16.msra.mxu0 0
    %2749 = vmatprep.subr.bf16.mxu0 0
    %2750 = vmatpush1.bf16.msra.mxu0 0
    %2751 = vmatprep.subr.bf16.mxu0 0
    %2752 = vmatpush1.bf16.msra.mxu0 0
    %2753 = vmatprep.subr.bf16.mxu0 0
    %2754 = vmatpush1.bf16.msra.mxu0 0
    %2755 = vmatprep.subr.bf16.mxu0 0
    %2756 = vmatpush1.bf16.msra.mxu0 0
    %2757 = vmatprep.subr.bf16.mxu0 0
    %2758 = vmatpush1.bf16.msra.mxu0 0
    %2759 = vmatprep.mubr.bf16.mxu0 0
    %2760 = vmatmul.mubr.bf16.gmra.mrb[0].mxu0 %v2726
    %v2761 = vpop.f32.mrb[0].mxu0
    %v2762 = vadd.f32 %v224, %v2761
    %v2763 = vpop.f32.mrb[0].mxu0
    %v2764 = vpop.f32.mrb[0].mxu0
    %v2765 = vadd.f32 %v224, %v2764
    %v2766 = vpop.f32.mrb[0].mxu0
    %2767 = vdwg.mxu0
    %v2768 = vadd.f32 %v1704, %v2762
    %v2769 = vadd.f32 %v1705, %v2765
    %2770 = vadd.xlane.f32.xlu0 %v2768
    %v2771 = vpop.xlane.xlu0 %2770
    %2772 = vadd.xlane.f32.xlu0 %v2769
    %v2773 = vpop.xlane.xlu0 %2772
    %v2774 = vmul.f32 %v2771, %v246
    %v2775 = vmul.f32 %v2773, %v246
    %v2776 = vsub.f32 %v2768, %v2774
    %v2777 = vsub.f32 %v2769, %v2775
    %v2778 = vmul.f32 %v2776, %v2776
    %v2779 = vmul.f32 %v2777, %v2777
    %2780 = vadd.xlane.f32.xlu0 %v2778
    %v2781 = vpop.xlane.xlu0 %2780
    %2782 = vadd.xlane.f32.xlu0 %v2779
    %v2783 = vpop.xlane.xlu0 %2782
    %v2784 = vmul.f32 %v2781, %v246
    %v2785 = vmul.f32 %v2783, %v246
    %v2786 = vadd.f32 %v2784, 1e-05
    %v2787 = vadd.f32 %v2785, 1e-05
    %v2788 = vrsqrt.pop %v2786
    %v2789 = vrsqrt.pop %v2787
    %v2790 = vmul.f32 %v2776, %v2788
    %v2791 = vmul.f32 %v2777, %v2789
    %v2792 = vmul.f32 %v2790, %v210
    %v2793 = vmul.f32 %v2791, %v210
    %v2794 = vadd.f32 %v2792, %v217
    %v2795 = vadd.f32 %v2793, %v217
    %v2796 = vpack.c.bf16 %v2795, %v2794
    %2797 = vmatprep.subr.bf16.mxu0 0
    %2798 = vmatpush1.bf16.msra.mxu0 %v1547
    %2799 = vmatprep.subr.bf16.mxu0 0
    %2800 = vmatpush1.bf16.msra.mxu0 %v1548
    %2801 = vmatprep.subr.bf16.mxu0 0
    %2802 = vmatpush1.bf16.msra.mxu0 %v1549
    %2803 = vmatprep.subr.bf16.mxu0 0
    %2804 = vmatpush1.bf16.msra.mxu0 %v1550
    %2805 = vmatprep.subr.bf16.mxu0 0
    %2806 = vmatpush1.bf16.msra.mxu0 %v1551
    %2807 = vmatprep.subr.bf16.mxu0 0
    %2808 = vmatpush1.bf16.msra.mxu0 %v1552
    %2809 = vmatprep.subr.bf16.mxu0 0
    %2810 = vmatpush1.bf16.msra.mxu0 %v1553
    %2811 = vmatprep.subr.bf16.mxu0 0
    %2812 = vmatpush1.bf16.msra.mxu0 %v1554
    %2813 = vmatprep.subr.bf16.mxu0 0
    %2814 = vmatpush1.bf16.msra.mxu0 0
    %2815 = vmatprep.subr.bf16.mxu0 0
    %2816 = vmatpush1.bf16.msra.mxu0 0
    %2817 = vmatprep.subr.bf16.mxu0 0
    %2818 = vmatpush1.bf16.msra.mxu0 0
    %2819 = vmatprep.subr.bf16.mxu0 0
    %2820 = vmatpush1.bf16.msra.mxu0 0
    %2821 = vmatprep.subr.bf16.mxu0 0
    %2822 = vmatpush1.bf16.msra.mxu0 0
    %2823 = vmatprep.subr.bf16.mxu0 0
    %2824 = vmatpush1.bf16.msra.mxu0 0
    %2825 = vmatprep.subr.bf16.mxu0 0
    %2826 = vmatpush1.bf16.msra.mxu0 0
    %2827 = vmatprep.subr.bf16.mxu0 0
    %2828 = vmatpush1.bf16.msra.mxu0 0
    %2829 = vmatprep.mubr.bf16.mxu0 0
    %2830 = vmatmul.mubr.bf16.gmra.mrb[0].mxu0 %v2796
    %v2831 = vpop.f32.mrb[0].mxu0
    %v2832 = vadd.f32 %v231, %v2831
    %v2833 = vpop.f32.mrb[0].mxu0
    %v2834 = vpop.f32.mrb[0].mxu0
    %v2835 = vadd.f32 %v231, %v2834
    %v2836 = vpop.f32.mrb[0].mxu0
    %2837 = vdwg.mxu0
    %v2838 = vmul.f32 %v2832, 0.5
    %v2839 = vmul.f32 %v2835, 0.5
    %v2840 = vmul.f32 %v2832, 0.70710677
    %v2841 = vmul.f32 %v2835, 0.70710677
    %v2842 = verf.f32.pop %v2840
    %v2843 = verf.f32.pop %v2841
    %v2844 = vadd.f32 %v2842, 1.0
    %v2845 = vadd.f32 %v2843, 1.0
    %v2846 = vmul.f32 %v2838, %v2844
    %v2847 = vmul.f32 %v2839, %v2845
    %v2848 = vpack.c.bf16 %v2847, %v2846
    %2849 = vmatprep.subr.bf16.mxu0 0
    %2850 = vmatpush1.bf16.msra.mxu0 %v1647
    %2851 = vmatprep.subr.bf16.mxu0 0
    %2852 = vmatpush1.bf16.msra.mxu0 %v1648
    %2853 = vmatprep.subr.bf16.mxu0 0
    %2854 = vmatpush1.bf16.msra.mxu0 %v1649
    %2855 = vmatprep.subr.bf16.mxu0 0
    %2856 = vmatpush1.bf16.msra.mxu0 %v1650
    %2857 = vmatprep.subr.bf16.mxu0 0
    %2858 = vmatpush1.bf16.msra.mxu0 %v1651
    %2859 = vmatprep.subr.bf16.mxu0 0
    %2860 = vmatpush1.bf16.msra.mxu0 %v1652
    %2861 = vmatprep.subr.bf16.mxu0 0
    %2862 = vmatpush1.bf16.msra.mxu0 %v1653
    %2863 = vmatprep.subr.bf16.mxu0 0
    %2864 = vmatpush1.bf16.msra.mxu0 %v1654
    %2865 = vmatprep.subr.bf16.mxu0 0
    %2866 = vmatpush1.bf16.msra.mxu0 0
    %2867 = vmatprep.subr.bf16.mxu0 0
    %2868 = vmatpush1.bf16.msra.mxu0 0
    %2869 = vmatprep.subr.bf16.mxu0 0
    %2870 = vmatpush1.bf16.msra.mxu0 0
    %2871 = vmatprep.subr.bf16.mxu0 0
    %2872 = vmatpush1.bf16.msra.mxu0 0
    %2873 = vmatprep.subr.bf16.mxu0 0
    %2874 = vmatpush1.bf16.msra.mxu0 0
    %2875 = vmatprep.subr.bf16.mxu0 0
    %2876 = vmatpush1.bf16.msra.mxu0 0
    %2877 = vmatprep.subr.bf16.mxu0 0
    %2878 = vmatpush1.bf16.msra.mxu0 0
    %2879 = vmatprep.subr.bf16.mxu0 0
    %2880 = vmatpush1.bf16.msra.mxu0 0
    %2881 = vmatprep.mubr.bf16.mxu0 0
    %2882 = vmatmul.mubr.bf16.gmra.mrb[0].mxu0 %v2848
    %v2883 = vpop.f32.mrb[0].mxu0
    %v2884 = vadd.f32 %v238, %v2883
    %v2885 = vpop.f32.mrb[0].mxu0
    %v2886 = vpop.f32.mrb[0].mxu0
    %v2887 = vadd.f32 %v238, %v2886
    %v2888 = vpop.f32.mrb[0].mxu0
    %2889 = vdwg.mxu0
    %v2890 = vadd.f32 %v2768, %v2884
    %v2891 = vadd.f32 %v2769, %v2887
    %2892 = vst [vmem:[#allocation11] sm:$0xff] %v2890
    %2893 = vst [vmem:[#allocation11 + $0x8] sm:$0xff] %v2891
    // Predicated region
    $region70: #{tpu_custom_call.1} parent=1 // pred_check
      _
    $region71: #{tpu_custom_call.1} parent=1 // pred_check_branch
      %2895 = sbr.rel (0) target = $region73
    $region72: #{tpu_custom_call.1} parent=1 // pred_region
      %s2897 = ssub.s32 256, 256
      %2898 = vsyncadd [#allocation4], %s2897
      %s2899 = sshll.u32 [#allocation11], 4
      %s2900 = int_to_ptr.vmem [resolvable:$true] %s2899
      %2905 = dma.vmem_to_hbm [thread:$0]  %s2900, 256, %s12, [#allocation4], 128, 128, 8
    $region73: #{tpu_custom_call.1} parent=1 // pred_fallthru
      _
    // Predicated region
    $region74: #{tpu_custom_call.1} parent=1 // pred_check
      _
    $region75: #{tpu_custom_call.1} parent=1 // pred_check_branch
      %2907 = sbr.rel (0) target = $region77
    $region76: #{tpu_custom_call.1} parent=1 // pred_region
      %2908 = dma.done [#allocation4], 256
    $region77: #{tpu_custom_call.1} parent=1 // pred_fallthru
      _
    %2909 = vsyncpa [#allocation3], 1
    %2910 = vsyncpa [#allocation6], 1
    %2911 = vsyncpa [#allocation9], 1
    %2912 = vsyncpa [#allocation4], 1

</llo_original>
